<compile_context>
chip_gen: v7x
topology: tpu7x:2x2x1
jax: 0.10.0
libtpu: 0.0.40
codegen_flags: <defaults>
</compile_context>

<pallas_src>
import functools

import jax
import jax.numpy as jnp
from jax.experimental import pallas as pl
from jax.experimental.pallas import tpu as pltpu


# Classifier sizes from the module: hidden -> 1024 -> 512 -> 256 -> 128 -> 64 -> num_labels
HIDDEN_SIZE = 1024            # hubert-large-ls960-ft config.hidden_size
CLS_DIMS = [1024, 512, 256, 128, 64]
NUM_LABELS = 2

BATCH_TILE = 8                # sublane-aligned batch tile (M >= 8 for the MXU)
TIME_TILE_TARGET = 512        # ~8 MiB bf16 input block at H=1024


def _round_up(x, m):
    return ((x + m - 1) // m) * m


def hubert_classifier_kernel(h_ref,
                             w1, b1, w2, b2, w3, b3, w4, b4, w5, b5, w6, b6,
                             out_ref, acc_ref, *, inv_t):
    t = pl.program_id(1)

    # ---- init pooled-sum accumulator at the start of the T reduction ----
    @pl.when(t == 0)
    def _():
        acc_ref[...] = jnp.zeros_like(acc_ref)

    # ---- accumulate the time-sum of this (Bt, Tt, H) tile in float32 ----
    h = h_ref[...].astype(jnp.float32)              # (Bt, Tt, H)
    acc_ref[...] += jnp.sum(h, axis=1)              # (Bt, H)

    # ---- finalize: mean + classifier MLP, once per batch tile ----
    @pl.when(t == pl.num_programs(1) - 1)
    def _():
        pooled = acc_ref[...] * inv_t               # (Bt, H) mean over time

        def linear(x, w_ref, b_ref):
            return jnp.dot(x, w_ref[...],
                           preferred_element_type=jnp.float32) + b_ref[...]

        x = jnp.maximum(linear(pooled, w1, b1), 0.0)    # (Bt, 1024)
        x = jnp.maximum(linear(x, w2, b2), 0.0)         # (Bt, 512)
        x = jnp.maximum(linear(x, w3, b3), 0.0)         # (Bt, 256)
        x = jnp.maximum(linear(x, w4, b4), 0.0)         # (Bt, 128)
        x = jnp.maximum(linear(x, w5, b5), 0.0)         # (Bt, 64)
        out_ref[...] = linear(x, w6, b6)                # (Bt, num_labels)


def hubert_classifier_forward(hidden_states, params):
    """hidden_states: [B, T, H] (HuBERT last_hidden_state), any float dtype.
    params: list of (W [in, out], b [1, out]) for the 6 classifier Linears."""
    B, T, H = hidden_states.shape
    assert H == HIDDEN_SIZE

    # Pad batch to a sublane group and time to a bf16-friendly tile multiple.
    bt = BATCH_TILE
    b_pad = _round_up(B, bt)
    t_pad = _round_up(T, 16)
    tt = min(TIME_TILE_TARGET, t_pad)
    t_pad = _round_up(t_pad, tt)

    # bf16 input halves the HBM bytes of the dominant [B, T, H] read.
    h = hidden_states.astype(jnp.bfloat16)
    h = jnp.pad(h, ((0, b_pad - B), (0, t_pad - T), (0, 0)))

    flat_params = []
    for w, b in params:
        flat_params.append(w.astype(jnp.float32))
        flat_params.append(b.astype(jnp.float32))

    grid = (b_pad // bt, t_pad // tt)

    h_spec = pl.BlockSpec((bt, tt, H), lambda b_i, t_i: (b_i, t_i, 0))
    # Constant block index across the whole grid -> weights/biases are fetched
    # once and stay VMEM-resident across the T reduction.
    param_specs = [pl.BlockSpec(p.shape, lambda b_i, t_i: (0, 0))
                   for p in flat_params]
    # Output block index is independent of the reduction axis (accumulator
    # pattern); it is written only in the finalize branch.
    out_spec = pl.BlockSpec((bt, NUM_LABELS), lambda b_i, t_i: (b_i, 0))

    out = pl.pallas_call(
        functools.partial(hubert_classifier_kernel, inv_t=1.0 / float(T)),
        out_shape=jax.ShapeDtypeStruct((b_pad, NUM_LABELS), jnp.float32),
        grid=grid,
        in_specs=[h_spec] + param_specs,
        out_specs=out_spec,
        scratch_shapes=[pltpu.VMEM((bt, HIDDEN_SIZE), jnp.float32)],
        compiler_params=pltpu.CompilerParams(
            dimension_semantics=("parallel", "arbitrary"),
            vmem_limit_bytes=48 * 1024 * 1024,
        ),
    )(h, *flat_params)

    return out[:B]


def init_classifier_params(key):
    """Deterministic init matching the nn.Linear shapes in the module.
    Weights are stored as [in, out] (transpose of torch's [out, in])."""
    dims = [HIDDEN_SIZE] + CLS_DIMS + [NUM_LABELS]
    params = []
    for i in range(len(dims) - 1):
        key, wk, bk = jax.random.split(key, 3)
        fan_in, fan_out = dims[i], dims[i + 1]
        scale = 1.0 / jnp.sqrt(jnp.float32(fan_in))
        w = jax.random.uniform(wk, (fan_in, fan_out), jnp.float32, -scale, scale)
        b = jax.random.uniform(bk, (1, fan_out), jnp.float32, -scale, scale)
        params.append((w, b))
    return params


def reference_forward(hidden_states, params):
    # Same bf16 input quantization as the kernel path, math in float32.
    h = hidden_states.astype(jnp.bfloat16).astype(jnp.float32)
    pooled = jnp.mean(h, axis=1)
    x = pooled
    for i, (w, b) in enumerate(params):
        x = x @ w + b
        if i < len(params) - 1:
            x = jnp.maximum(x, 0.0)
    return x


if __name__ == "__main__":
    key = jax.random.PRNGKey(0)
    key, hk = jax.random.split(key)

    B, T = 2, 8                                       # small batch / seq length
    hidden_states = jax.random.normal(hk, (B, T, HIDDEN_SIZE), jnp.float32)

    params = init_classifier_params(key)

    logits = hubert_classifier_forward(hidden_states, params)
    logits = jax.block_until_ready(logits)

    ref = reference_forward(hidden_states, params)
    assert logits.shape == (B, NUM_LABELS)
    assert jnp.allclose(logits, ref, atol=1e-3, rtol=1e-3)

    print("KERNEL_OK")
</pallas_src>

<mosaic_0001>
module attributes {stable_mosaic.version = 11 : i64} {
  func.func @hubert_classifier_kernel(%arg0: i32, %arg1: i32, %arg2: memref<8x16x1024xbf16, #tpu.memory_space<vmem>>, %arg3: memref<1024x1024xf32, #tpu.memory_space<vmem>>, %arg4: memref<1x1024xf32, #tpu.memory_space<vmem>>, %arg5: memref<1024x512xf32, #tpu.memory_space<vmem>>, %arg6: memref<1x512xf32, #tpu.memory_space<vmem>>, %arg7: memref<512x256xf32, #tpu.memory_space<vmem>>, %arg8: memref<1x256xf32, #tpu.memory_space<vmem>>, %arg9: memref<256x128xf32, #tpu.memory_space<vmem>>, %arg10: memref<1x128xf32, #tpu.memory_space<vmem>>, %arg11: memref<128x64xf32, #tpu.memory_space<vmem>>, %arg12: memref<1x64xf32, #tpu.memory_space<vmem>>, %arg13: memref<64x2xf32, #tpu.memory_space<vmem>>, %arg14: memref<1x2xf32, #tpu.memory_space<vmem>>, %arg15: memref<8x2xf32, #tpu.memory_space<vmem>>, %arg16: memref<8x1024xf32, #tpu.memory_space<vmem>>) attributes {dimension_semantics = [#tpu.dimension_semantics<parallel>, #tpu.dimension_semantics<arbitrary>], iteration_bounds = array<i64: 1, 1>, scalar_prefetch = 0 : i64, scratch_operands = 1 : i64, tpu.core_type = #tpu.core_type<tc>, window_params = [{transform_indices = @transform_0, window_bounds = array<i64: 8, 16, 1024>}, {pipeline_mode = #tpu.pipeline_mode<synchronous>, transform_indices = @transform_1, window_bounds = array<i64: 1024, 1024>}, {pipeline_mode = #tpu.pipeline_mode<synchronous>, transform_indices = @transform_2, window_bounds = array<i64: 1, 1024>}, {pipeline_mode = #tpu.pipeline_mode<synchronous>, transform_indices = @transform_3, window_bounds = array<i64: 1024, 512>}, {pipeline_mode = #tpu.pipeline_mode<synchronous>, transform_indices = @transform_4, window_bounds = array<i64: 1, 512>}, {pipeline_mode = #tpu.pipeline_mode<synchronous>, transform_indices = @transform_5, window_bounds = array<i64: 512, 256>}, {pipeline_mode = #tpu.pipeline_mode<synchronous>, transform_indices = @transform_6, window_bounds = array<i64: 1, 256>}, {pipeline_mode = #tpu.pipeline_mode<synchronous>, transform_indices = @transform_7, window_bounds = array<i64: 256, 128>}, {pipeline_mode = #tpu.pipeline_mode<synchronous>, transform_indices = @transform_8, window_bounds = array<i64: 1, 128>}, {pipeline_mode = #tpu.pipeline_mode<synchronous>, transform_indices = @transform_9, window_bounds = array<i64: 128, 64>}, {pipeline_mode = #tpu.pipeline_mode<synchronous>, transform_indices = @transform_10, window_bounds = array<i64: 1, 64>}, {pipeline_mode = #tpu.pipeline_mode<synchronous>, transform_indices = @transform_11, window_bounds = array<i64: 64, 2>}, {pipeline_mode = #tpu.pipeline_mode<synchronous>, transform_indices = @transform_12, window_bounds = array<i64: 1, 2>}, {transform_indices = @transform_13, window_bounds = array<i64: 8, 2>}]} {
    %c0_i32 = arith.constant 0 : i32
    %0 = arith.cmpi eq, %arg1, %c0_i32 : i32
    %1 = arith.extui %0 : i1 to i32
    %c0_i32_0 = arith.constant 0 : i32
    %2 = arith.cmpi ne, %1, %c0_i32_0 : i32
    scf.if %2 {
      %cst_9 = arith.constant 0.000000e+00 : f32
      %12 = vector.broadcast %cst_9 : f32 to vector<8x1024xf32>
      %c0_10 = arith.constant 0 : index
      %c0_11 = arith.constant 0 : index
      %13 = vector.load %arg16[%c0_10, %c0_11] : memref<8x1024xf32, #tpu.memory_space<vmem>>, vector<8x1024xf32>
      tpu.vector_store %arg16[%c0_10, %c0_11], %12 {strides = array<i32>} : memref<8x1024xf32, #tpu.memory_space<vmem>>, vector<8x1024xf32>,
    } else {
    }
    %c0 = arith.constant 0 : index
    %c0_1 = arith.constant 0 : index
    %c0_2 = arith.constant 0 : index
    %3 = vector.load %arg2[%c0, %c0_1, %c0_2] : memref<8x16x1024xbf16, #tpu.memory_space<vmem>>, vector<8x16x1024xbf16>
    %4 = arith.extf %3 : vector<8x16x1024xbf16> to vector<8x16x1024xf32>
    %c0_3 = arith.constant 0 : index
    %c0_4 = arith.constant 0 : index
    %5 = vector.load %arg16[%c0_3, %c0_4] : memref<8x1024xf32, #tpu.memory_space<vmem>>, vector<8x1024xf32>
    %cst = arith.constant dense<0.000000e+00> : vector<8x1024xf32>
    %6 = vector.multi_reduction <add>, %4, %cst [1] : vector<8x16x1024xf32> to vector<8x1024xf32>
    %7 = arith.addf %5, %6 : vector<8x1024xf32>
    %c0_5 = arith.constant 0 : index
    %c0_6 = arith.constant 0 : index
    %8 = vector.load %arg16[%c0_5, %c0_6] : memref<8x1024xf32, #tpu.memory_space<vmem>>, vector<8x1024xf32>
    tpu.vector_store %arg16[%c0_5, %c0_6], %7 {strides = array<i32>} : memref<8x1024xf32, #tpu.memory_space<vmem>>, vector<8x1024xf32>,
    %c0_i32_7 = arith.constant 0 : i32
    %9 = arith.cmpi eq, %arg1, %c0_i32_7 : i32
    %10 = arith.extui %9 : i1 to i32
    %c0_i32_8 = arith.constant 0 : i32
    %11 = arith.cmpi ne, %10, %c0_i32_8 : i32
    scf.if %11 {
      %c0_9 = arith.constant 0 : index
      %c0_10 = arith.constant 0 : index
      %12 = vector.load %arg16[%c0_9, %c0_10] : memref<8x1024xf32, #tpu.memory_space<vmem>>, vector<8x1024xf32>
      %cst_11 = arith.constant 1.250000e-01 : f32
      %13 = vector.broadcast %cst_11 : f32 to vector<8x1024xf32>
      %14 = arith.mulf %12, %13 : vector<8x1024xf32>
      %c0_12 = arith.constant 0 : index
      %c0_13 = arith.constant 0 : index
      %15 = vector.load %arg3[%c0_12, %c0_13] : memref<1024x1024xf32, #tpu.memory_space<vmem>>, vector<1024x1024xf32>
      %cst_14 = arith.constant dense<0.000000e+00> : vector<8x1024xf32>
      %16 = tpu.matmul %14, %15, %cst_14 {dimension_numbers = #tpu.dot_dimension_numbers<[1], [0], [0], [1], [0, 0, 1, 1], [], []>} : vector<8x1024xf32>, vector<1024x1024xf32>, vector<8x1024xf32> -> vector<8x1024xf32>
      %c0_15 = arith.constant 0 : index
      %c0_16 = arith.constant 0 : index
      %17 = vector.load %arg4[%c0_15, %c0_16] : memref<1x1024xf32, #tpu.memory_space<vmem>>, vector<1x1024xf32>
      %18 = vector.broadcast %17 : vector<1x1024xf32> to vector<8x1024xf32>
      %19 = arith.addf %16, %18 : vector<8x1024xf32>
      %cst_17 = arith.constant 0.000000e+00 : f32
      %20 = vector.broadcast %cst_17 : f32 to vector<8x1024xf32>
      %21 = arith.maximumf %19, %20 : vector<8x1024xf32>
      %c0_18 = arith.constant 0 : index
      %c0_19 = arith.constant 0 : index
      %22 = vector.load %arg5[%c0_18, %c0_19] : memref<1024x512xf32, #tpu.memory_space<vmem>>, vector<1024x512xf32>
      %cst_20 = arith.constant dense<0.000000e+00> : vector<8x512xf32>
      %23 = tpu.matmul %21, %22, %cst_20 {dimension_numbers = #tpu.dot_dimension_numbers<[1], [0], [0], [1], [0, 0, 1, 1], [], []>} : vector<8x1024xf32>, vector<1024x512xf32>, vector<8x512xf32> -> vector<8x512xf32>
      %c0_21 = arith.constant 0 : index
      %c0_22 = arith.constant 0 : index
      %24 = vector.load %arg6[%c0_21, %c0_22] : memref<1x512xf32, #tpu.memory_space<vmem>>, vector<1x512xf32>
      %25 = vector.broadcast %24 : vector<1x512xf32> to vector<8x512xf32>
      %26 = arith.addf %23, %25 : vector<8x512xf32>
      %cst_23 = arith.constant 0.000000e+00 : f32
      %27 = vector.broadcast %cst_23 : f32 to vector<8x512xf32>
      %28 = arith.maximumf %26, %27 : vector<8x512xf32>
      %c0_24 = arith.constant 0 : index
      %c0_25 = arith.constant 0 : index
      %29 = vector.load %arg7[%c0_24, %c0_25] : memref<512x256xf32, #tpu.memory_space<vmem>>, vector<512x256xf32>
      %cst_26 = arith.constant dense<0.000000e+00> : vector<8x256xf32>
      %30 = tpu.matmul %28, %29, %cst_26 {dimension_numbers = #tpu.dot_dimension_numbers<[1], [0], [0], [1], [0, 0, 1, 1], [], []>} : vector<8x512xf32>, vector<512x256xf32>, vector<8x256xf32> -> vector<8x256xf32>
      %c0_27 = arith.constant 0 : index
      %c0_28 = arith.constant 0 : index
      %31 = vector.load %arg8[%c0_27, %c0_28] : memref<1x256xf32, #tpu.memory_space<vmem>>, vector<1x256xf32>
      %32 = vector.broadcast %31 : vector<1x256xf32> to vector<8x256xf32>
      %33 = arith.addf %30, %32 : vector<8x256xf32>
      %cst_29 = arith.constant 0.000000e+00 : f32
      %34 = vector.broadcast %cst_29 : f32 to vector<8x256xf32>
      %35 = arith.maximumf %33, %34 : vector<8x256xf32>
      %c0_30 = arith.constant 0 : index
      %c0_31 = arith.constant 0 : index
      %36 = vector.load %arg9[%c0_30, %c0_31] : memref<256x128xf32, #tpu.memory_space<vmem>>, vector<256x128xf32>
      %cst_32 = arith.constant dense<0.000000e+00> : vector<8x128xf32>
      %37 = tpu.matmul %35, %36, %cst_32 {dimension_numbers = #tpu.dot_dimension_numbers<[1], [0], [0], [1], [0, 0, 1, 1], [], []>} : vector<8x256xf32>, vector<256x128xf32>, vector<8x128xf32> -> vector<8x128xf32>
      %c0_33 = arith.constant 0 : index
      %c0_34 = arith.constant 0 : index
      %38 = vector.load %arg10[%c0_33, %c0_34] : memref<1x128xf32, #tpu.memory_space<vmem>>, vector<1x128xf32>
      %39 = vector.broadcast %38 : vector<1x128xf32> to vector<8x128xf32>
      %40 = arith.addf %37, %39 : vector<8x128xf32>
      %cst_35 = arith.constant 0.000000e+00 : f32
      %41 = vector.broadcast %cst_35 : f32 to vector<8x128xf32>
      %42 = arith.maximumf %40, %41 : vector<8x128xf32>
      %c0_36 = arith.constant 0 : index
      %c0_37 = arith.constant 0 : index
      %43 = vector.load %arg11[%c0_36, %c0_37] : memref<128x64xf32, #tpu.memory_space<vmem>>, vector<128x64xf32>
      %cst_38 = arith.constant dense<0.000000e+00> : vector<8x64xf32>
      %44 = tpu.matmul %42, %43, %cst_38 {dimension_numbers = #tpu.dot_dimension_numbers<[1], [0], [0], [1], [0, 0, 1, 1], [], []>} : vector<8x128xf32>, vector<128x64xf32>, vector<8x64xf32> -> vector<8x64xf32>
      %c0_39 = arith.constant 0 : index
      %c0_40 = arith.constant 0 : index
      %45 = vector.load %arg12[%c0_39, %c0_40] : memref<1x64xf32, #tpu.memory_space<vmem>>, vector<1x64xf32>
      %46 = vector.broadcast %45 : vector<1x64xf32> to vector<8x64xf32>
      %47 = arith.addf %44, %46 : vector<8x64xf32>
      %cst_41 = arith.constant 0.000000e+00 : f32
      %48 = vector.broadcast %cst_41 : f32 to vector<8x64xf32>
      %49 = arith.maximumf %47, %48 : vector<8x64xf32>
      %c0_42 = arith.constant 0 : index
      %c0_43 = arith.constant 0 : index
      %50 = vector.load %arg13[%c0_42, %c0_43] : memref<64x2xf32, #tpu.memory_space<vmem>>, vector<64x2xf32>
      %cst_44 = arith.constant dense<0.000000e+00> : vector<8x2xf32>
      %51 = tpu.matmul %49, %50, %cst_44 {dimension_numbers = #tpu.dot_dimension_numbers<[1], [0], [0], [1], [0, 0, 1, 1], [], []>} : vector<8x64xf32>, vector<64x2xf32>, vector<8x2xf32> -> vector<8x2xf32>
      %c0_45 = arith.constant 0 : index
      %c0_46 = arith.constant 0 : index
      %52 = vector.load %arg14[%c0_45, %c0_46] : memref<1x2xf32, #tpu.memory_space<vmem>>, vector<1x2xf32>
      %53 = vector.broadcast %52 : vector<1x2xf32> to vector<8x2xf32>
      %54 = arith.addf %51, %53 : vector<8x2xf32>
      %c0_47 = arith.constant 0 : index
      %c0_48 = arith.constant 0 : index
      %55 = vector.load %arg15[%c0_47, %c0_48] : memref<8x2xf32, #tpu.memory_space<vmem>>, vector<8x2xf32>
      tpu.vector_store %arg15[%c0_47, %c0_48], %54 {strides = array<i32>} : memref<8x2xf32, #tpu.memory_space<vmem>>, vector<8x2xf32>,
    } else {
    }
    return
  }
  func.func @transform_0(%arg0: i32, %arg1: i32) -> (i32, i32, i32) {
    %c0_i32 = arith.constant 0 : i32
    %c0_i32_0 = arith.constant 0 : i32
    return %arg0, %arg1, %c0_i32 : i32, i32, i32
  }
  func.func @transform_1(%arg0: i32, %arg1: i32) -> (i32, i32) {
    %c0_i32 = arith.constant 0 : i32
    %c0_i32_0 = arith.constant 0 : i32
    %c0_i32_1 = arith.constant 0 : i32
    return %c0_i32, %c0_i32_0 : i32, i32
  }
  func.func @transform_2(%arg0: i32, %arg1: i32) -> (i32, i32) {
    %c0_i32 = arith.constant 0 : i32
    %c0_i32_0 = arith.constant 0 : i32
    %c0_i32_1 = arith.constant 0 : i32
    return %c0_i32, %c0_i32_0 : i32, i32
  }
  func.func @transform_3(%arg0: i32, %arg1: i32) -> (i32, i32) {
    %c0_i32 = arith.constant 0 : i32
    %c0_i32_0 = arith.constant 0 : i32
    %c0_i32_1 = arith.constant 0 : i32
    return %c0_i32, %c0_i32_0 : i32, i32
  }
  func.func @transform_4(%arg0: i32, %arg1: i32) -> (i32, i32) {
    %c0_i32 = arith.constant 0 : i32
    %c0_i32_0 = arith.constant 0 : i32
    %c0_i32_1 = arith.constant 0 : i32
    return %c0_i32, %c0_i32_0 : i32, i32
  }
  func.func @transform_5(%arg0: i32, %arg1: i32) -> (i32, i32) {
    %c0_i32 = arith.constant 0 : i32
    %c0_i32_0 = arith.constant 0 : i32
    %c0_i32_1 = arith.constant 0 : i32
    return %c0_i32, %c0_i32_0 : i32, i32
  }
  func.func @transform_6(%arg0: i32, %arg1: i32) -> (i32, i32) {
    %c0_i32 = arith.constant 0 : i32
    %c0_i32_0 = arith.constant 0 : i32
    %c0_i32_1 = arith.constant 0 : i32
    return %c0_i32, %c0_i32_0 : i32, i32
  }
  func.func @transform_7(%arg0: i32, %arg1: i32) -> (i32, i32) {
    %c0_i32 = arith.constant 0 : i32
    %c0_i32_0 = arith.constant 0 : i32
    %c0_i32_1 = arith.constant 0 : i32
    return %c0_i32, %c0_i32_0 : i32, i32
  }
  func.func @transform_8(%arg0: i32, %arg1: i32) -> (i32, i32) {
    %c0_i32 = arith.constant 0 : i32
    %c0_i32_0 = arith.constant 0 : i32
    %c0_i32_1 = arith.constant 0 : i32
    return %c0_i32, %c0_i32_0 : i32, i32
  }
  func.func @transform_9(%arg0: i32, %arg1: i32) -> (i32, i32) {
    %c0_i32 = arith.constant 0 : i32
    %c0_i32_0 = arith.constant 0 : i32
    %c0_i32_1 = arith.constant 0 : i32
    return %c0_i32, %c0_i32_0 : i32, i32
  }
  func.func @transform_10(%arg0: i32, %arg1: i32) -> (i32, i32) {
    %c0_i32 = arith.constant 0 : i32
    %c0_i32_0 = arith.constant 0 : i32
    %c0_i32_1 = arith.constant 0 : i32
    return %c0_i32, %c0_i32_0 : i32, i32
  }
  func.func @transform_11(%arg0: i32, %arg1: i32) -> (i32, i32) {
    %c0_i32 = arith.constant 0 : i32
    %c0_i32_0 = arith.constant 0 : i32
    %c0_i32_1 = arith.constant 0 : i32
    return %c0_i32, %c0_i32_0 : i32, i32
  }
  func.func @transform_12(%arg0: i32, %arg1: i32) -> (i32, i32) {
    %c0_i32 = arith.constant 0 : i32
    %c0_i32_0 = arith.constant 0 : i32
    %c0_i32_1 = arith.constant 0 : i32
    return %c0_i32, %c0_i32_0 : i32, i32
  }
  func.func @transform_13(%arg0: i32, %arg1: i32) -> (i32, i32) {
    %c0_i32 = arith.constant 0 : i32
    %c0_i32_0 = arith.constant 0 : i32
    return %arg0, %c0_i32 : i32, i32
  }
}

</mosaic_0001>

<llo_original>
// kernel: tpu_custom_call.1
$region0: #{tpu_custom_call.1}
  #allocation0 [shape = 'u32[]', space=smem, size = 0x4, offset = 0x4, fixed_abs, tag = 'smem constant byte address 0x4 - core index']
  #allocation1 [shape = 'u32[144,128]{1,0:T(1,128)}', space=vmem, size = 0x12000, scoped, tag = 'internal scratch']
  #allocation2 [shape = 'f32[8,1024]{1,0:T(8,128)}', space=vmem, size = 0x8000, scoped, tag = 'scratch operand']
  %s0 = inlined_call_operand.hbm [shape: bf16[8,16,1024], index: 0, kind: input, shape index: {}]
  %s1 = inlined_call_operand.hbm [shape: f32[1024,1024], index: 1, kind: input, shape index: {}]
  %s2 = inlined_call_operand.hbm [shape: f32[1,1024], index: 2, kind: input, shape index: {}]
  %s3 = inlined_call_operand.hbm [shape: f32[1024,512], index: 3, kind: input, shape index: {}]
  %s4 = inlined_call_operand.hbm [shape: f32[1,512], index: 4, kind: input, shape index: {}]
  %s5 = inlined_call_operand.hbm [shape: f32[512,256], index: 5, kind: input, shape index: {}]
  %s6 = inlined_call_operand.hbm [shape: f32[1,256], index: 6, kind: input, shape index: {}]
  %s7 = inlined_call_operand.hbm [shape: f32[256,128], index: 7, kind: input, shape index: {}]
  %s8 = inlined_call_operand.hbm [shape: f32[1,128], index: 8, kind: input, shape index: {}]
  %s9 = inlined_call_operand.vmem [shape: f32[128,64], index: 9, kind: input, shape index: {}]
  %s10 = inlined_call_operand.hbm [shape: f32[1,64], index: 10, kind: input, shape index: {}]
  %s11 = inlined_call_operand.vmem [shape: f32[64,2], index: 11, kind: input, shape index: {}]
  %s12 = inlined_call_operand.hbm [shape: f32[1,2], index: 12, kind: input, shape index: {}]
  %s13 = inlined_call_operand.vmem [shape: f32[8,2], index: 13, kind: output, shape index: {}]
  %s14 = sld [smem:[#allocation0]]
  $region114: #{tpu_custom_call.1} parent=0
    _
  %s16 = ssub.s32 1, %s14
  %s17 = scalar_select 0, %s16, %s14
  $region1: #{tpu_custom_call.1} parent=0
    #allocation3 [shape = 'u8[262144]{0}', space=vmem, size = 0x40000, scoped, tag = 'input window, operand 0, single buffered']
    #allocation4 [shape = 's32[1]{0}', space=sflag, size = 0x4, scoped, tag = 'scoped memory for tpu_custom_call.1']
    #allocation5 [shape = 'u8[4194304]{0}', space=vmem, size = 0x400000, scoped, tag = 'input window, operand 1, single buffered']
    #allocation6 [shape = 's32[1]{0}', space=sflag, size = 0x4, scoped, tag = 'scoped memory for tpu_custom_call.1']
    #allocation7 [shape = 'u8[4096]{0}', space=vmem, size = 0x1000, scoped, tag = 'input window, operand 2, single buffered']
    #allocation8 [shape = 'u8[2097152]{0}', space=vmem, size = 0x200000, scoped, tag = 'input window, operand 3, single buffered']
    #allocation9 [shape = 's32[1]{0}', space=sflag, size = 0x4, scoped, tag = 'scoped memory for tpu_custom_call.1']
    #allocation10 [shape = 'u8[2048]{0}', space=vmem, size = 0x800, scoped, tag = 'input window, operand 4, single buffered']
    #allocation11 [shape = 'u8[524288]{0}', space=vmem, size = 0x80000, scoped, tag = 'input window, operand 5, single buffered']
    #allocation12 [shape = 's32[1]{0}', space=sflag, size = 0x4, scoped, tag = 'scoped memory for tpu_custom_call.1']
    #allocation13 [shape = 'u8[1024]{0}', space=vmem, size = 0x400, scoped, tag = 'input window, operand 6, single buffered']
    #allocation14 [shape = 'u8[131072]{0}', space=vmem, size = 0x20000, scoped, tag = 'input window, operand 7, single buffered']
    #allocation15 [shape = 's32[1]{0}', space=sflag, size = 0x4, scoped, tag = 'scoped memory for tpu_custom_call.1']
    #allocation16 [shape = 'u8[512]{0}', space=vmem, size = 0x400, scoped, tag = 'input window, operand 8, single buffered']
    #allocation17 [shape = 'u8[512]{0}', space=vmem, size = 0x400, scoped, tag = 'input window, operand 10, single buffered']
    #allocation18 [shape = 's32[1]{0}', space=sflag, size = 0x4, scoped, tag = 'scoped memory for tpu_custom_call.1']
    #allocation19 [shape = 'u8[512]{0}', space=vmem, size = 0x400, scoped, tag = 'input window, operand 12, single buffered']
    %18 = vsyncpa [#allocation4], 0
    %19 = vsyncpa [#allocation6], 0
    %20 = vsyncpa [#allocation9], 0
    %21 = vsyncpa [#allocation12], 0
    %22 = vsyncpa [#allocation15], 0
    %23 = vsyncpa [#allocation18], 0
    // Predicated region
    $region2: #{tpu_custom_call.1} parent=1 // pred_check
      _
    $region3: #{tpu_custom_call.1} parent=1 // pred_check_branch
      %25 = sbr.rel (0) target = $region5
    $region4: #{tpu_custom_call.1} parent=1 // pred_region
      %s27 = ssub.s32 8192, 8192
      %28 = vsyncadd [#allocation4], %s27
      %s29 = sshll.u32 [#allocation3], 4
      %s30 = int_to_ptr.vmem [resolvable:$true] %s29
      %35 = dma.hbm_to_vmem [thread:$0]  %s0, 8192, %s30, [#allocation4], 512, 512, 32
    $region5: #{tpu_custom_call.1} parent=1 // pred_fallthru
      _
    // Predicated region
    $region6: #{tpu_custom_call.1} parent=1 // pred_check
      _
    $region7: #{tpu_custom_call.1} parent=1 // pred_check_branch
      %37 = sbr.rel (0) target = $region9
    $region8: #{tpu_custom_call.1} parent=1 // pred_region
      %s39 = ssub.s32 131072, 131072
      %40 = vsyncadd [#allocation6], %s39
      %s41 = sshll.u32 [#allocation5], 4
      %s42 = int_to_ptr.vmem [resolvable:$true] %s41
      %47 = dma.hbm_to_vmem [thread:$0]  %s1, 131072, %s42, [#allocation6], 1024, 1024, 64
    $region9: #{tpu_custom_call.1} parent=1 // pred_fallthru
      _
    // Predicated region
    $region10: #{tpu_custom_call.1} parent=1 // pred_check
      _
    $region11: #{tpu_custom_call.1} parent=1 // pred_check_branch
      %49 = sbr.rel (0) target = $region13
    $region12: #{tpu_custom_call.1} parent=1 // pred_region
      %s51 = ssub.s32 128, 128
      %52 = vsyncadd [#allocation6], %s51
      %s54 = sshll.u32 [#allocation7], 4
      %s55 = int_to_ptr.vmem [resolvable:$true] %s54
      %57 = dma.hbm_to_vmem [thread:$0]  %s2, 128, %s55, [#allocation6]
    $region13: #{tpu_custom_call.1} parent=1 // pred_fallthru
      _
    // Predicated region
    $region14: #{tpu_custom_call.1} parent=1 // pred_check
      _
    $region15: #{tpu_custom_call.1} parent=1 // pred_check_branch
      %59 = sbr.rel (0) target = $region17
    $region16: #{tpu_custom_call.1} parent=1 // pred_region
      %s61 = ssub.s32 65536, 65536
      %62 = vsyncadd [#allocation9], %s61
      %s63 = sshll.u32 [#allocation8], 4
      %s64 = int_to_ptr.vmem [resolvable:$true] %s63
      %69 = dma.hbm_to_vmem [thread:$0]  %s3, 65536, %s64, [#allocation9], 512, 512, 32
    $region17: #{tpu_custom_call.1} parent=1 // pred_fallthru
      _
    // Predicated region
    $region18: #{tpu_custom_call.1} parent=1 // pred_check
      _
    $region19: #{tpu_custom_call.1} parent=1 // pred_check_branch
      %71 = sbr.rel (0) target = $region21
    $region20: #{tpu_custom_call.1} parent=1 // pred_region
      %s73 = ssub.s32 64, 64
      %74 = vsyncadd [#allocation9], %s73
      %s76 = sshll.u32 [#allocation10], 4
      %s77 = int_to_ptr.vmem [resolvable:$true] %s76
      %79 = dma.hbm_to_vmem [thread:$0]  %s4, 64, %s77, [#allocation9]
    $region21: #{tpu_custom_call.1} parent=1 // pred_fallthru
      _
    // Predicated region
    $region22: #{tpu_custom_call.1} parent=1 // pred_check
      _
    $region23: #{tpu_custom_call.1} parent=1 // pred_check_branch
      %81 = sbr.rel (0) target = $region25
    $region24: #{tpu_custom_call.1} parent=1 // pred_region
      %s83 = ssub.s32 16384, 16384
      %84 = vsyncadd [#allocation12], %s83
      %s85 = sshll.u32 [#allocation11], 4
      %s86 = int_to_ptr.vmem [resolvable:$true] %s85
      %91 = dma.hbm_to_vmem [thread:$0]  %s5, 16384, %s86, [#allocation12], 256, 256, 16
    $region25: #{tpu_custom_call.1} parent=1 // pred_fallthru
      _
    // Predicated region
    $region26: #{tpu_custom_call.1} parent=1 // pred_check
      _
    $region27: #{tpu_custom_call.1} parent=1 // pred_check_branch
      %93 = sbr.rel (0) target = $region29
    $region28: #{tpu_custom_call.1} parent=1 // pred_region
      %s95 = ssub.s32 32, 32
      %96 = vsyncadd [#allocation12], %s95
      %s98 = sshll.u32 [#allocation13], 4
      %s99 = int_to_ptr.vmem [resolvable:$true] %s98
      %101 = dma.hbm_to_vmem [thread:$0]  %s6, 32, %s99, [#allocation12]
    $region29: #{tpu_custom_call.1} parent=1 // pred_fallthru
      _
    // Predicated region
    $region30: #{tpu_custom_call.1} parent=1 // pred_check
      _
    $region31: #{tpu_custom_call.1} parent=1 // pred_check_branch
      %103 = sbr.rel (0) target = $region33
    $region32: #{tpu_custom_call.1} parent=1 // pred_region
      %s105 = ssub.s32 4096, 4096
      %106 = vsyncadd [#allocation15], %s105
      %s107 = sshll.u32 [#allocation14], 4
      %s108 = int_to_ptr.vmem [resolvable:$true] %s107
      %113 = dma.hbm_to_vmem [thread:$0]  %s7, 4096, %s108, [#allocation15], 128, 128, 8
    $region33: #{tpu_custom_call.1} parent=1 // pred_fallthru
      _
    // Predicated region
    $region34: #{tpu_custom_call.1} parent=1 // pred_check
      _
    $region35: #{tpu_custom_call.1} parent=1 // pred_check_branch
      %115 = sbr.rel (0) target = $region37
    $region36: #{tpu_custom_call.1} parent=1 // pred_region
      %s117 = ssub.s32 16, 16
      %118 = vsyncadd [#allocation15], %s117
      %s120 = sshll.u32 [#allocation16], 4
      %s121 = int_to_ptr.vmem [resolvable:$true] %s120
      %123 = dma.hbm_to_vmem [thread:$0]  %s8, 16, %s121, [#allocation15]
    $region37: #{tpu_custom_call.1} parent=1 // pred_fallthru
      _
    // Predicated region
    $region38: #{tpu_custom_call.1} parent=1 // pred_check
      _
    $region39: #{tpu_custom_call.1} parent=1 // pred_check_branch
      %125 = sbr.rel (0) target = $region41
    $region40: #{tpu_custom_call.1} parent=1 // pred_region
      _
    $region41: #{tpu_custom_call.1} parent=1 // pred_fallthru
      _
    // Predicated region
    $region42: #{tpu_custom_call.1} parent=1 // pred_check
      _
    $region43: #{tpu_custom_call.1} parent=1 // pred_check_branch
      %127 = sbr.rel (0) target = $region45
    $region44: #{tpu_custom_call.1} parent=1 // pred_region
      %s129 = ssub.s32 16, 16
      %130 = vsyncadd [#allocation18], %s129
      %s132 = sshll.u32 [#allocation17], 4
      %s133 = int_to_ptr.vmem [resolvable:$true] %s132
      %135 = dma.hbm_to_vmem [thread:$0]  %s10, 16, %s133, [#allocation18]
    $region45: #{tpu_custom_call.1} parent=1 // pred_fallthru
      _
    // Predicated region
    $region46: #{tpu_custom_call.1} parent=1 // pred_check
      _
    $region47: #{tpu_custom_call.1} parent=1 // pred_check_branch
      %137 = sbr.rel (0) target = $region49
    $region48: #{tpu_custom_call.1} parent=1 // pred_region
      _
    $region49: #{tpu_custom_call.1} parent=1 // pred_fallthru
      _
    // Predicated region
    $region50: #{tpu_custom_call.1} parent=1 // pred_check
      _
    $region51: #{tpu_custom_call.1} parent=1 // pred_check_branch
      %139 = sbr.rel (0) target = $region53
    $region52: #{tpu_custom_call.1} parent=1 // pred_region
      %s141 = ssub.s32 16, 16
      %142 = vsyncadd [#allocation18], %s141
      %s144 = sshll.u32 [#allocation19], 4
      %s145 = int_to_ptr.vmem [resolvable:$true] %s144
      %147 = dma.hbm_to_vmem [thread:$0]  %s12, 16, %s145, [#allocation18]
    $region53: #{tpu_custom_call.1} parent=1 // pred_fallthru
      _
    // Predicated region
    $region54: #{tpu_custom_call.1} parent=1 // pred_check
      _
    $region55: #{tpu_custom_call.1} parent=1 // pred_check_branch
      %149 = sbr.rel (0) target = $region57
    $region56: #{tpu_custom_call.1} parent=1 // pred_region
      %150 = dma.done [#allocation4], 8192
    $region57: #{tpu_custom_call.1} parent=1 // pred_fallthru
      _
    // Predicated region
    $region58: #{tpu_custom_call.1} parent=1 // pred_check
      _
    $region59: #{tpu_custom_call.1} parent=1 // pred_check_branch
      %152 = sbr.rel (0) target = $region61
    $region60: #{tpu_custom_call.1} parent=1 // pred_region
      %153 = dma.done [#allocation6], 131072
    $region61: #{tpu_custom_call.1} parent=1 // pred_fallthru
      _
    // Predicated region
    $region62: #{tpu_custom_call.1} parent=1 // pred_check
      _
    $region63: #{tpu_custom_call.1} parent=1 // pred_check_branch
      %155 = sbr.rel (0) target = $region65
    $region64: #{tpu_custom_call.1} parent=1 // pred_region
      %156 = dma.done [#allocation6], 128
    $region65: #{tpu_custom_call.1} parent=1 // pred_fallthru
      _
    // Predicated region
    $region66: #{tpu_custom_call.1} parent=1 // pred_check
      _
    $region67: #{tpu_custom_call.1} parent=1 // pred_check_branch
      %158 = sbr.rel (0) target = $region69
    $region68: #{tpu_custom_call.1} parent=1 // pred_region
      %159 = dma.done [#allocation9], 65536
    $region69: #{tpu_custom_call.1} parent=1 // pred_fallthru
      _
    // Predicated region
    $region70: #{tpu_custom_call.1} parent=1 // pred_check
      _
    $region71: #{tpu_custom_call.1} parent=1 // pred_check_branch
      %161 = sbr.rel (0) target = $region73
    $region72: #{tpu_custom_call.1} parent=1 // pred_region
      %162 = dma.done [#allocation9], 64
    $region73: #{tpu_custom_call.1} parent=1 // pred_fallthru
      _
    // Predicated region
    $region74: #{tpu_custom_call.1} parent=1 // pred_check
      _
    $region75: #{tpu_custom_call.1} parent=1 // pred_check_branch
      %164 = sbr.rel (0) target = $region77
    $region76: #{tpu_custom_call.1} parent=1 // pred_region
      %165 = dma.done [#allocation12], 16384
    $region77: #{tpu_custom_call.1} parent=1 // pred_fallthru
      _
    // Predicated region
    $region78: #{tpu_custom_call.1} parent=1 // pred_check
      _
    $region79: #{tpu_custom_call.1} parent=1 // pred_check_branch
      %167 = sbr.rel (0) target = $region81
    $region80: #{tpu_custom_call.1} parent=1 // pred_region
      %168 = dma.done [#allocation12], 32
    $region81: #{tpu_custom_call.1} parent=1 // pred_fallthru
      _
    // Predicated region
    $region82: #{tpu_custom_call.1} parent=1 // pred_check
      _
    $region83: #{tpu_custom_call.1} parent=1 // pred_check_branch
      %170 = sbr.rel (0) target = $region85
    $region84: #{tpu_custom_call.1} parent=1 // pred_region
      %171 = dma.done [#allocation15], 4096
    $region85: #{tpu_custom_call.1} parent=1 // pred_fallthru
      _
    // Predicated region
    $region86: #{tpu_custom_call.1} parent=1 // pred_check
      _
    $region87: #{tpu_custom_call.1} parent=1 // pred_check_branch
      %173 = sbr.rel (0) target = $region89
    $region88: #{tpu_custom_call.1} parent=1 // pred_region
      %174 = dma.done [#allocation15], 16
    $region89: #{tpu_custom_call.1} parent=1 // pred_fallthru
      _
    // Predicated region
    $region90: #{tpu_custom_call.1} parent=1 // pred_check
      _
    $region91: #{tpu_custom_call.1} parent=1 // pred_check_branch
      %176 = sbr.rel (0) target = $region93
    $region92: #{tpu_custom_call.1} parent=1 // pred_region
      %177 = dma.done [#allocation18], 16
    $region93: #{tpu_custom_call.1} parent=1 // pred_fallthru
      _
    // Predicated region
    $region94: #{tpu_custom_call.1} parent=1 // pred_check
      _
    $region95: #{tpu_custom_call.1} parent=1 // pred_check_branch
      %179 = sbr.rel (0) target = $region97
    $region96: #{tpu_custom_call.1} parent=1 // pred_region
      %180 = dma.done [#allocation18], 16
    $region97: #{tpu_custom_call.1} parent=1 // pred_fallthru
      _
    %p181 = scmp.eq.s32.totalorder 0, 0
    // Predicated region
    $region98: #{tpu_custom_call.1} parent=1 // pred_check
      %p182 = pneg %p181
    $region99: #{tpu_custom_call.1} parent=1 // pred_check_branch
      %184 = sbr.rel (%p182) target = $region101
    $region100: #{tpu_custom_call.1} parent=1 // pred_region
      %185 = vst [vmem:[#allocation2] sm:$0xff] 0.0
      %186 = vst [vmem:[#allocation2 + $0x8] sm:$0xff] 0.0
      %187 = vst [vmem:[#allocation2 + $0x10] sm:$0xff] 0.0
      %188 = vst [vmem:[#allocation2 + $0x18] sm:$0xff] 0.0
      %189 = vst [vmem:[#allocation2 + $0x20] sm:$0xff] 0.0
      %190 = vst [vmem:[#allocation2 + $0x28] sm:$0xff] 0.0
      %191 = vst [vmem:[#allocation2 + $0x30] sm:$0xff] 0.0
      %192 = vst [vmem:[#allocation2 + $0x38] sm:$0xff] 0.0
    $region101: #{tpu_custom_call.1} parent=1 // pred_fallthru
      _
    %v193 = vld [vmem:[#allocation3] sm:$0xff]
    %v194 = vld [vmem:[#allocation3 + $0x8] sm:$0xff]
    %v195 = vld [vmem:[#allocation3 + $0x10] sm:$0xff]
    %v196 = vld [vmem:[#allocation3 + $0x18] sm:$0xff]
    %v197 = vld [vmem:[#allocation3 + $0x20] sm:$0xff]
    %v198 = vld [vmem:[#allocation3 + $0x28] sm:$0xff]
    %v199 = vld [vmem:[#allocation3 + $0x30] sm:$0xff]
    %v200 = vld [vmem:[#allocation3 + $0x38] sm:$0xff]
    %v201 = vld [vmem:[#allocation3 + $0x40] sm:$0xff]
    %v202 = vld [vmem:[#allocation3 + $0x48] sm:$0xff]
    %v203 = vld [vmem:[#allocation3 + $0x50] sm:$0xff]
    %v204 = vld [vmem:[#allocation3 + $0x58] sm:$0xff]
    %v205 = vld [vmem:[#allocation3 + $0x60] sm:$0xff]
    %v206 = vld [vmem:[#allocation3 + $0x68] sm:$0xff]
    %v207 = vld [vmem:[#allocation3 + $0x70] sm:$0xff]
    %v208 = vld [vmem:[#allocation3 + $0x78] sm:$0xff]
    %v209 = vld [vmem:[#allocation3 + $0x80] sm:$0xff]
    %v210 = vld [vmem:[#allocation3 + $0x88] sm:$0xff]
    %v211 = vld [vmem:[#allocation3 + $0x90] sm:$0xff]
    %v212 = vld [vmem:[#allocation3 + $0x98] sm:$0xff]
    %v213 = vld [vmem:[#allocation3 + $0xa0] sm:$0xff]
    %v214 = vld [vmem:[#allocation3 + $0xa8] sm:$0xff]
    %v215 = vld [vmem:[#allocation3 + $0xb0] sm:$0xff]
    %v216 = vld [vmem:[#allocation3 + $0xb8] sm:$0xff]
    %v217 = vld [vmem:[#allocation3 + $0xc0] sm:$0xff]
    %v218 = vld [vmem:[#allocation3 + $0xc8] sm:$0xff]
    %v219 = vld [vmem:[#allocation3 + $0xd0] sm:$0xff]
    %v220 = vld [vmem:[#allocation3 + $0xd8] sm:$0xff]
    %v221 = vld [vmem:[#allocation3 + $0xe0] sm:$0xff]
    %v222 = vld [vmem:[#allocation3 + $0xe8] sm:$0xff]
    %v223 = vld [vmem:[#allocation3 + $0xf0] sm:$0xff]
    %v224 = vld [vmem:[#allocation3 + $0xf8] sm:$0xff]
    %v225 = vld [vmem:[#allocation3 + $0x100] sm:$0xff]
    %v226 = vld [vmem:[#allocation3 + $0x108] sm:$0xff]
    %v227 = vld [vmem:[#allocation3 + $0x110] sm:$0xff]
    %v228 = vld [vmem:[#allocation3 + $0x118] sm:$0xff]
    %v229 = vld [vmem:[#allocation3 + $0x120] sm:$0xff]
    %v230 = vld [vmem:[#allocation3 + $0x128] sm:$0xff]
    %v231 = vld [vmem:[#allocation3 + $0x130] sm:$0xff]
    %v232 = vld [vmem:[#allocation3 + $0x138] sm:$0xff]
    %v233 = vld [vmem:[#allocation3 + $0x140] sm:$0xff]
    %v234 = vld [vmem:[#allocation3 + $0x148] sm:$0xff]
    %v235 = vld [vmem:[#allocation3 + $0x150] sm:$0xff]
    %v236 = vld [vmem:[#allocation3 + $0x158] sm:$0xff]
    %v237 = vld [vmem:[#allocation3 + $0x160] sm:$0xff]
    %v238 = vld [vmem:[#allocation3 + $0x168] sm:$0xff]
    %v239 = vld [vmem:[#allocation3 + $0x170] sm:$0xff]
    %v240 = vld [vmem:[#allocation3 + $0x178] sm:$0xff]
    %v241 = vld [vmem:[#allocation3 + $0x180] sm:$0xff]
    %v242 = vld [vmem:[#allocation3 + $0x188] sm:$0xff]
    %v243 = vld [vmem:[#allocation3 + $0x190] sm:$0xff]
    %v244 = vld [vmem:[#allocation3 + $0x198] sm:$0xff]
    %v245 = vld [vmem:[#allocation3 + $0x1a0] sm:$0xff]
    %v246 = vld [vmem:[#allocation3 + $0x1a8] sm:$0xff]
    %v247 = vld [vmem:[#allocation3 + $0x1b0] sm:$0xff]
    %v248 = vld [vmem:[#allocation3 + $0x1b8] sm:$0xff]
    %v249 = vld [vmem:[#allocation3 + $0x1c0] sm:$0xff]
    %v250 = vld [vmem:[#allocation3 + $0x1c8] sm:$0xff]
    %v251 = vld [vmem:[#allocation3 + $0x1d0] sm:$0xff]
    %v252 = vld [vmem:[#allocation3 + $0x1d8] sm:$0xff]
    %v253 = vld [vmem:[#allocation3 + $0x1e0] sm:$0xff]
    %v254 = vld [vmem:[#allocation3 + $0x1e8] sm:$0xff]
    %v255 = vld [vmem:[#allocation3 + $0x1f0] sm:$0xff]
    %v256 = vld [vmem:[#allocation3 + $0x1f8] sm:$0xff]
    %v257 = vunpack.c.l.bf16 %v193
    %v258 = vunpack.c.h.bf16 %v193
    %v259 = vunpack.c.l.bf16 %v194
    %v260 = vunpack.c.h.bf16 %v194
    %v261 = vunpack.c.l.bf16 %v195
    %v262 = vunpack.c.h.bf16 %v195
    %v263 = vunpack.c.l.bf16 %v196
    %v264 = vunpack.c.h.bf16 %v196
    %v265 = vunpack.c.l.bf16 %v197
    %v266 = vunpack.c.h.bf16 %v197
    %v267 = vunpack.c.l.bf16 %v198
    %v268 = vunpack.c.h.bf16 %v198
    %v269 = vunpack.c.l.bf16 %v199
    %v270 = vunpack.c.h.bf16 %v199
    %v271 = vunpack.c.l.bf16 %v200
    %v272 = vunpack.c.h.bf16 %v200
    %v273 = vunpack.c.l.bf16 %v201
    %v274 = vunpack.c.h.bf16 %v201
    %v275 = vunpack.c.l.bf16 %v202
    %v276 = vunpack.c.h.bf16 %v202
    %v277 = vunpack.c.l.bf16 %v203
    %v278 = vunpack.c.h.bf16 %v203
    %v279 = vunpack.c.l.bf16 %v204
    %v280 = vunpack.c.h.bf16 %v204
    %v281 = vunpack.c.l.bf16 %v205
    %v282 = vunpack.c.h.bf16 %v205
    %v283 = vunpack.c.l.bf16 %v206
    %v284 = vunpack.c.h.bf16 %v206
    %v285 = vunpack.c.l.bf16 %v207
    %v286 = vunpack.c.h.bf16 %v207
    %v287 = vunpack.c.l.bf16 %v208
    %v288 = vunpack.c.h.bf16 %v208
    %v289 = vunpack.c.l.bf16 %v209
    %v290 = vunpack.c.h.bf16 %v209
    %v291 = vunpack.c.l.bf16 %v210
    %v292 = vunpack.c.h.bf16 %v210
    %v293 = vunpack.c.l.bf16 %v211
    %v294 = vunpack.c.h.bf16 %v211
    %v295 = vunpack.c.l.bf16 %v212
    %v296 = vunpack.c.h.bf16 %v212
    %v297 = vunpack.c.l.bf16 %v213
    %v298 = vunpack.c.h.bf16 %v213
    %v299 = vunpack.c.l.bf16 %v214
    %v300 = vunpack.c.h.bf16 %v214
    %v301 = vunpack.c.l.bf16 %v215
    %v302 = vunpack.c.h.bf16 %v215
    %v303 = vunpack.c.l.bf16 %v216
    %v304 = vunpack.c.h.bf16 %v216
    %v305 = vunpack.c.l.bf16 %v217
    %v306 = vunpack.c.h.bf16 %v217
    %v307 = vunpack.c.l.bf16 %v218
    %v308 = vunpack.c.h.bf16 %v218
    %v309 = vunpack.c.l.bf16 %v219
    %v310 = vunpack.c.h.bf16 %v219
    %v311 = vunpack.c.l.bf16 %v220
    %v312 = vunpack.c.h.bf16 %v220
    %v313 = vunpack.c.l.bf16 %v221
    %v314 = vunpack.c.h.bf16 %v221
    %v315 = vunpack.c.l.bf16 %v222
    %v316 = vunpack.c.h.bf16 %v222
    %v317 = vunpack.c.l.bf16 %v223
    %v318 = vunpack.c.h.bf16 %v223
    %v319 = vunpack.c.l.bf16 %v224
    %v320 = vunpack.c.h.bf16 %v224
    %v321 = vunpack.c.l.bf16 %v225
    %v322 = vunpack.c.h.bf16 %v225
    %v323 = vunpack.c.l.bf16 %v226
    %v324 = vunpack.c.h.bf16 %v226
    %v325 = vunpack.c.l.bf16 %v227
    %v326 = vunpack.c.h.bf16 %v227
    %v327 = vunpack.c.l.bf16 %v228
    %v328 = vunpack.c.h.bf16 %v228
    %v329 = vunpack.c.l.bf16 %v229
    %v330 = vunpack.c.h.bf16 %v229
    %v331 = vunpack.c.l.bf16 %v230
    %v332 = vunpack.c.h.bf16 %v230
    %v333 = vunpack.c.l.bf16 %v231
    %v334 = vunpack.c.h.bf16 %v231
    %v335 = vunpack.c.l.bf16 %v232
    %v336 = vunpack.c.h.bf16 %v232
    %v337 = vunpack.c.l.bf16 %v233
    %v338 = vunpack.c.h.bf16 %v233
    %v339 = vunpack.c.l.bf16 %v234
    %v340 = vunpack.c.h.bf16 %v234
    %v341 = vunpack.c.l.bf16 %v235
    %v342 = vunpack.c.h.bf16 %v235
    %v343 = vunpack.c.l.bf16 %v236
    %v344 = vunpack.c.h.bf16 %v236
    %v345 = vunpack.c.l.bf16 %v237
    %v346 = vunpack.c.h.bf16 %v237
    %v347 = vunpack.c.l.bf16 %v238
    %v348 = vunpack.c.h.bf16 %v238
    %v349 = vunpack.c.l.bf16 %v239
    %v350 = vunpack.c.h.bf16 %v239
    %v351 = vunpack.c.l.bf16 %v240
    %v352 = vunpack.c.h.bf16 %v240
    %v353 = vunpack.c.l.bf16 %v241
    %v354 = vunpack.c.h.bf16 %v241
    %v355 = vunpack.c.l.bf16 %v242
    %v356 = vunpack.c.h.bf16 %v242
    %v357 = vunpack.c.l.bf16 %v243
    %v358 = vunpack.c.h.bf16 %v243
    %v359 = vunpack.c.l.bf16 %v244
    %v360 = vunpack.c.h.bf16 %v244
    %v361 = vunpack.c.l.bf16 %v245
    %v362 = vunpack.c.h.bf16 %v245
    %v363 = vunpack.c.l.bf16 %v246
    %v364 = vunpack.c.h.bf16 %v246
    %v365 = vunpack.c.l.bf16 %v247
    %v366 = vunpack.c.h.bf16 %v247
    %v367 = vunpack.c.l.bf16 %v248
    %v368 = vunpack.c.h.bf16 %v248
    %v369 = vunpack.c.l.bf16 %v249
    %v370 = vunpack.c.h.bf16 %v249
    %v371 = vunpack.c.l.bf16 %v250
    %v372 = vunpack.c.h.bf16 %v250
    %v373 = vunpack.c.l.bf16 %v251
    %v374 = vunpack.c.h.bf16 %v251
    %v375 = vunpack.c.l.bf16 %v252
    %v376 = vunpack.c.h.bf16 %v252
    %v377 = vunpack.c.l.bf16 %v253
    %v378 = vunpack.c.h.bf16 %v253
    %v379 = vunpack.c.l.bf16 %v254
    %v380 = vunpack.c.h.bf16 %v254
    %v381 = vunpack.c.l.bf16 %v255
    %v382 = vunpack.c.h.bf16 %v255
    %v383 = vunpack.c.l.bf16 %v256
    %v384 = vunpack.c.h.bf16 %v256
    %v385 = vld [vmem:[#allocation2] sm:$0xff]
    %v386 = vld [vmem:[#allocation2 + $0x8] sm:$0xff]
    %v387 = vld [vmem:[#allocation2 + $0x10] sm:$0xff]
    %v388 = vld [vmem:[#allocation2 + $0x18] sm:$0xff]
    %v389 = vld [vmem:[#allocation2 + $0x20] sm:$0xff]
    %v390 = vld [vmem:[#allocation2 + $0x28] sm:$0xff]
    %v391 = vld [vmem:[#allocation2 + $0x30] sm:$0xff]
    %v392 = vld [vmem:[#allocation2 + $0x38] sm:$0xff]
    %v393 = vadd.f32 %v257, %v265
    %v394 = vrot.slane %v393, 4
    %v395 = vadd.f32 %v393, %v394
    %v396 = vrot.slane %v395, 2
    %v397 = vadd.f32 %v395, %v396
    %v398 = vrot.slane %v397, 1
    %v399 = vadd.f32 %v397, %v398
    %v400 = vadd.f32 %v258, %v266
    %v401 = vrot.slane %v400, 4
    %v402 = vadd.f32 %v400, %v401
    %v403 = vrot.slane %v402, 2
    %v404 = vadd.f32 %v402, %v403
    %v405 = vrot.slane %v404, 1
    %v406 = vadd.f32 %v404, %v405
    %v407 = vadd.f32 %v259, %v267
    %v408 = vrot.slane %v407, 4
    %v409 = vadd.f32 %v407, %v408
    %v410 = vrot.slane %v409, 2
    %v411 = vadd.f32 %v409, %v410
    %v412 = vrot.slane %v411, 1
    %v413 = vadd.f32 %v411, %v412
    %v414 = vadd.f32 %v260, %v268
    %v415 = vrot.slane %v414, 4
    %v416 = vadd.f32 %v414, %v415
    %v417 = vrot.slane %v416, 2
    %v418 = vadd.f32 %v416, %v417
    %v419 = vrot.slane %v418, 1
    %v420 = vadd.f32 %v418, %v419
    %v421 = vadd.f32 %v261, %v269
    %v422 = vrot.slane %v421, 4
    %v423 = vadd.f32 %v421, %v422
    %v424 = vrot.slane %v423, 2
    %v425 = vadd.f32 %v423, %v424
    %v426 = vrot.slane %v425, 1
    %v427 = vadd.f32 %v425, %v426
    %v428 = vadd.f32 %v262, %v270
    %v429 = vrot.slane %v428, 4
    %v430 = vadd.f32 %v428, %v429
    %v431 = vrot.slane %v430, 2
    %v432 = vadd.f32 %v430, %v431
    %v433 = vrot.slane %v432, 1
    %v434 = vadd.f32 %v432, %v433
    %v435 = vadd.f32 %v263, %v271
    %v436 = vrot.slane %v435, 4
    %v437 = vadd.f32 %v435, %v436
    %v438 = vrot.slane %v437, 2
    %v439 = vadd.f32 %v437, %v438
    %v440 = vrot.slane %v439, 1
    %v441 = vadd.f32 %v439, %v440
    %v442 = vadd.f32 %v264, %v272
    %v443 = vrot.slane %v442, 4
    %v444 = vadd.f32 %v442, %v443
    %v445 = vrot.slane %v444, 2
    %v446 = vadd.f32 %v444, %v445
    %v447 = vrot.slane %v446, 1
    %v448 = vadd.f32 %v446, %v447
    %v449 = vadd.f32 %v273, %v281
    %v450 = vrot.slane %v449, 4
    %v451 = vadd.f32 %v449, %v450
    %v452 = vrot.slane %v451, 2
    %v453 = vadd.f32 %v451, %v452
    %v454 = vrot.slane %v453, 1
    %v455 = vadd.f32 %v453, %v454
    %v456 = vadd.f32 %v274, %v282
    %v457 = vrot.slane %v456, 4
    %v458 = vadd.f32 %v456, %v457
    %v459 = vrot.slane %v458, 2
    %v460 = vadd.f32 %v458, %v459
    %v461 = vrot.slane %v460, 1
    %v462 = vadd.f32 %v460, %v461
    %v463 = vadd.f32 %v275, %v283
    %v464 = vrot.slane %v463, 4
    %v465 = vadd.f32 %v463, %v464
    %v466 = vrot.slane %v465, 2
    %v467 = vadd.f32 %v465, %v466
    %v468 = vrot.slane %v467, 1
    %v469 = vadd.f32 %v467, %v468
    %v470 = vadd.f32 %v276, %v284
    %v471 = vrot.slane %v470, 4
    %v472 = vadd.f32 %v470, %v471
    %v473 = vrot.slane %v472, 2
    %v474 = vadd.f32 %v472, %v473
    %v475 = vrot.slane %v474, 1
    %v476 = vadd.f32 %v474, %v475
    %v477 = vadd.f32 %v277, %v285
    %v478 = vrot.slane %v477, 4
    %v479 = vadd.f32 %v477, %v478
    %v480 = vrot.slane %v479, 2
    %v481 = vadd.f32 %v479, %v480
    %v482 = vrot.slane %v481, 1
    %v483 = vadd.f32 %v481, %v482
    %v484 = vadd.f32 %v278, %v286
    %v485 = vrot.slane %v484, 4
    %v486 = vadd.f32 %v484, %v485
    %v487 = vrot.slane %v486, 2
    %v488 = vadd.f32 %v486, %v487
    %v489 = vrot.slane %v488, 1
    %v490 = vadd.f32 %v488, %v489
    %v491 = vadd.f32 %v279, %v287
    %v492 = vrot.slane %v491, 4
    %v493 = vadd.f32 %v491, %v492
    %v494 = vrot.slane %v493, 2
    %v495 = vadd.f32 %v493, %v494
    %v496 = vrot.slane %v495, 1
    %v497 = vadd.f32 %v495, %v496
    %v498 = vadd.f32 %v280, %v288
    %v499 = vrot.slane %v498, 4
    %v500 = vadd.f32 %v498, %v499
    %v501 = vrot.slane %v500, 2
    %v502 = vadd.f32 %v500, %v501
    %v503 = vrot.slane %v502, 1
    %v504 = vadd.f32 %v502, %v503
    %v505 = vadd.f32 %v289, %v297
    %v506 = vrot.slane %v505, 4
    %v507 = vadd.f32 %v505, %v506
    %v508 = vrot.slane %v507, 2
    %v509 = vadd.f32 %v507, %v508
    %v510 = vrot.slane %v509, 1
    %v511 = vadd.f32 %v509, %v510
    %v512 = vadd.f32 %v290, %v298
    %v513 = vrot.slane %v512, 4
    %v514 = vadd.f32 %v512, %v513
    %v515 = vrot.slane %v514, 2
    %v516 = vadd.f32 %v514, %v515
    %v517 = vrot.slane %v516, 1
    %v518 = vadd.f32 %v516, %v517
    %v519 = vadd.f32 %v291, %v299
    %v520 = vrot.slane %v519, 4
    %v521 = vadd.f32 %v519, %v520
    %v522 = vrot.slane %v521, 2
    %v523 = vadd.f32 %v521, %v522
    %v524 = vrot.slane %v523, 1
    %v525 = vadd.f32 %v523, %v524
    %v526 = vadd.f32 %v292, %v300
    %v527 = vrot.slane %v526, 4
    %v528 = vadd.f32 %v526, %v527
    %v529 = vrot.slane %v528, 2
    %v530 = vadd.f32 %v528, %v529
    %v531 = vrot.slane %v530, 1
    %v532 = vadd.f32 %v530, %v531
    %v533 = vadd.f32 %v293, %v301
    %v534 = vrot.slane %v533, 4
    %v535 = vadd.f32 %v533, %v534
    %v536 = vrot.slane %v535, 2
    %v537 = vadd.f32 %v535, %v536
    %v538 = vrot.slane %v537, 1
    %v539 = vadd.f32 %v537, %v538
    %v540 = vadd.f32 %v294, %v302
    %v541 = vrot.slane %v540, 4
    %v542 = vadd.f32 %v540, %v541
    %v543 = vrot.slane %v542, 2
    %v544 = vadd.f32 %v542, %v543
    %v545 = vrot.slane %v544, 1
    %v546 = vadd.f32 %v544, %v545
    %v547 = vadd.f32 %v295, %v303
    %v548 = vrot.slane %v547, 4
    %v549 = vadd.f32 %v547, %v548
    %v550 = vrot.slane %v549, 2
    %v551 = vadd.f32 %v549, %v550
    %v552 = vrot.slane %v551, 1
    %v553 = vadd.f32 %v551, %v552
    %v554 = vadd.f32 %v296, %v304
    %v555 = vrot.slane %v554, 4
    %v556 = vadd.f32 %v554, %v555
    %v557 = vrot.slane %v556, 2
    %v558 = vadd.f32 %v556, %v557
    %v559 = vrot.slane %v558, 1
    %v560 = vadd.f32 %v558, %v559
    %v561 = vadd.f32 %v305, %v313
    %v562 = vrot.slane %v561, 4
    %v563 = vadd.f32 %v561, %v562
    %v564 = vrot.slane %v563, 2
    %v565 = vadd.f32 %v563, %v564
    %v566 = vrot.slane %v565, 1
    %v567 = vadd.f32 %v565, %v566
    %v568 = vadd.f32 %v306, %v314
    %v569 = vrot.slane %v568, 4
    %v570 = vadd.f32 %v568, %v569
    %v571 = vrot.slane %v570, 2
    %v572 = vadd.f32 %v570, %v571
    %v573 = vrot.slane %v572, 1
    %v574 = vadd.f32 %v572, %v573
    %v575 = vadd.f32 %v307, %v315
    %v576 = vrot.slane %v575, 4
    %v577 = vadd.f32 %v575, %v576
    %v578 = vrot.slane %v577, 2
    %v579 = vadd.f32 %v577, %v578
    %v580 = vrot.slane %v579, 1
    %v581 = vadd.f32 %v579, %v580
    %v582 = vadd.f32 %v308, %v316
    %v583 = vrot.slane %v582, 4
    %v584 = vadd.f32 %v582, %v583
    %v585 = vrot.slane %v584, 2
    %v586 = vadd.f32 %v584, %v585
    %v587 = vrot.slane %v586, 1
    %v588 = vadd.f32 %v586, %v587
    %v589 = vadd.f32 %v309, %v317
    %v590 = vrot.slane %v589, 4
    %v591 = vadd.f32 %v589, %v590
    %v592 = vrot.slane %v591, 2
    %v593 = vadd.f32 %v591, %v592
    %v594 = vrot.slane %v593, 1
    %v595 = vadd.f32 %v593, %v594
    %v596 = vadd.f32 %v310, %v318
    %v597 = vrot.slane %v596, 4
    %v598 = vadd.f32 %v596, %v597
    %v599 = vrot.slane %v598, 2
    %v600 = vadd.f32 %v598, %v599
    %v601 = vrot.slane %v600, 1
    %v602 = vadd.f32 %v600, %v601
    %v603 = vadd.f32 %v311, %v319
    %v604 = vrot.slane %v603, 4
    %v605 = vadd.f32 %v603, %v604
    %v606 = vrot.slane %v605, 2
    %v607 = vadd.f32 %v605, %v606
    %v608 = vrot.slane %v607, 1
    %v609 = vadd.f32 %v607, %v608
    %v610 = vadd.f32 %v312, %v320
    %v611 = vrot.slane %v610, 4
    %v612 = vadd.f32 %v610, %v611
    %v613 = vrot.slane %v612, 2
    %v614 = vadd.f32 %v612, %v613
    %v615 = vrot.slane %v614, 1
    %v616 = vadd.f32 %v614, %v615
    %v617 = vadd.f32 %v321, %v329
    %v618 = vrot.slane %v617, 4
    %v619 = vadd.f32 %v617, %v618
    %v620 = vrot.slane %v619, 2
    %v621 = vadd.f32 %v619, %v620
    %v622 = vrot.slane %v621, 1
    %v623 = vadd.f32 %v621, %v622
    %v624 = vadd.f32 %v322, %v330
    %v625 = vrot.slane %v624, 4
    %v626 = vadd.f32 %v624, %v625
    %v627 = vrot.slane %v626, 2
    %v628 = vadd.f32 %v626, %v627
    %v629 = vrot.slane %v628, 1
    %v630 = vadd.f32 %v628, %v629
    %v631 = vadd.f32 %v323, %v331
    %v632 = vrot.slane %v631, 4
    %v633 = vadd.f32 %v631, %v632
    %v634 = vrot.slane %v633, 2
    %v635 = vadd.f32 %v633, %v634
    %v636 = vrot.slane %v635, 1
    %v637 = vadd.f32 %v635, %v636
    %v638 = vadd.f32 %v324, %v332
    %v639 = vrot.slane %v638, 4
    %v640 = vadd.f32 %v638, %v639
    %v641 = vrot.slane %v640, 2
    %v642 = vadd.f32 %v640, %v641
    %v643 = vrot.slane %v642, 1
    %v644 = vadd.f32 %v642, %v643
    %v645 = vadd.f32 %v325, %v333
    %v646 = vrot.slane %v645, 4
    %v647 = vadd.f32 %v645, %v646
    %v648 = vrot.slane %v647, 2
    %v649 = vadd.f32 %v647, %v648
    %v650 = vrot.slane %v649, 1
    %v651 = vadd.f32 %v649, %v650
    %v652 = vadd.f32 %v326, %v334
    %v653 = vrot.slane %v652, 4
    %v654 = vadd.f32 %v652, %v653
    %v655 = vrot.slane %v654, 2
    %v656 = vadd.f32 %v654, %v655
    %v657 = vrot.slane %v656, 1
    %v658 = vadd.f32 %v656, %v657
    %v659 = vadd.f32 %v327, %v335
    %v660 = vrot.slane %v659, 4
    %v661 = vadd.f32 %v659, %v660
    %v662 = vrot.slane %v661, 2
    %v663 = vadd.f32 %v661, %v662
    %v664 = vrot.slane %v663, 1
    %v665 = vadd.f32 %v663, %v664
    %v666 = vadd.f32 %v328, %v336
    %v667 = vrot.slane %v666, 4
    %v668 = vadd.f32 %v666, %v667
    %v669 = vrot.slane %v668, 2
    %v670 = vadd.f32 %v668, %v669
    %v671 = vrot.slane %v670, 1
    %v672 = vadd.f32 %v670, %v671
    %v673 = vadd.f32 %v337, %v345
    %v674 = vrot.slane %v673, 4
    %v675 = vadd.f32 %v673, %v674
    %v676 = vrot.slane %v675, 2
    %v677 = vadd.f32 %v675, %v676
    %v678 = vrot.slane %v677, 1
    %v679 = vadd.f32 %v677, %v678
    %v680 = vadd.f32 %v338, %v346
    %v681 = vrot.slane %v680, 4
    %v682 = vadd.f32 %v680, %v681
    %v683 = vrot.slane %v682, 2
    %v684 = vadd.f32 %v682, %v683
    %v685 = vrot.slane %v684, 1
    %v686 = vadd.f32 %v684, %v685
    %v687 = vadd.f32 %v339, %v347
    %v688 = vrot.slane %v687, 4
    %v689 = vadd.f32 %v687, %v688
    %v690 = vrot.slane %v689, 2
    %v691 = vadd.f32 %v689, %v690
    %v692 = vrot.slane %v691, 1
    %v693 = vadd.f32 %v691, %v692
    %v694 = vadd.f32 %v340, %v348
    %v695 = vrot.slane %v694, 4
    %v696 = vadd.f32 %v694, %v695
    %v697 = vrot.slane %v696, 2
    %v698 = vadd.f32 %v696, %v697
    %v699 = vrot.slane %v698, 1
    %v700 = vadd.f32 %v698, %v699
    %v701 = vadd.f32 %v341, %v349
    %v702 = vrot.slane %v701, 4
    %v703 = vadd.f32 %v701, %v702
    %v704 = vrot.slane %v703, 2
    %v705 = vadd.f32 %v703, %v704
    %v706 = vrot.slane %v705, 1
    %v707 = vadd.f32 %v705, %v706
    %v708 = vadd.f32 %v342, %v350
    %v709 = vrot.slane %v708, 4
    %v710 = vadd.f32 %v708, %v709
    %v711 = vrot.slane %v710, 2
    %v712 = vadd.f32 %v710, %v711
    %v713 = vrot.slane %v712, 1
    %v714 = vadd.f32 %v712, %v713
    %v715 = vadd.f32 %v343, %v351
    %v716 = vrot.slane %v715, 4
    %v717 = vadd.f32 %v715, %v716
    %v718 = vrot.slane %v717, 2
    %v719 = vadd.f32 %v717, %v718
    %v720 = vrot.slane %v719, 1
    %v721 = vadd.f32 %v719, %v720
    %v722 = vadd.f32 %v344, %v352
    %v723 = vrot.slane %v722, 4
    %v724 = vadd.f32 %v722, %v723
    %v725 = vrot.slane %v724, 2
    %v726 = vadd.f32 %v724, %v725
    %v727 = vrot.slane %v726, 1
    %v728 = vadd.f32 %v726, %v727
    %v729 = vadd.f32 %v353, %v361
    %v730 = vrot.slane %v729, 4
    %v731 = vadd.f32 %v729, %v730
    %v732 = vrot.slane %v731, 2
    %v733 = vadd.f32 %v731, %v732
    %v734 = vrot.slane %v733, 1
    %v735 = vadd.f32 %v733, %v734
    %v736 = vadd.f32 %v354, %v362
    %v737 = vrot.slane %v736, 4
    %v738 = vadd.f32 %v736, %v737
    %v739 = vrot.slane %v738, 2
    %v740 = vadd.f32 %v738, %v739
    %v741 = vrot.slane %v740, 1
    %v742 = vadd.f32 %v740, %v741
    %v743 = vadd.f32 %v355, %v363
    %v744 = vrot.slane %v743, 4
    %v745 = vadd.f32 %v743, %v744
    %v746 = vrot.slane %v745, 2
    %v747 = vadd.f32 %v745, %v746
    %v748 = vrot.slane %v747, 1
    %v749 = vadd.f32 %v747, %v748
    %v750 = vadd.f32 %v356, %v364
    %v751 = vrot.slane %v750, 4
    %v752 = vadd.f32 %v750, %v751
    %v753 = vrot.slane %v752, 2
    %v754 = vadd.f32 %v752, %v753
    %v755 = vrot.slane %v754, 1
    %v756 = vadd.f32 %v754, %v755
    %v757 = vadd.f32 %v357, %v365
    %v758 = vrot.slane %v757, 4
    %v759 = vadd.f32 %v757, %v758
    %v760 = vrot.slane %v759, 2
    %v761 = vadd.f32 %v759, %v760
    %v762 = vrot.slane %v761, 1
    %v763 = vadd.f32 %v761, %v762
    %v764 = vadd.f32 %v358, %v366
    %v765 = vrot.slane %v764, 4
    %v766 = vadd.f32 %v764, %v765
    %v767 = vrot.slane %v766, 2
    %v768 = vadd.f32 %v766, %v767
    %v769 = vrot.slane %v768, 1
    %v770 = vadd.f32 %v768, %v769
    %v771 = vadd.f32 %v359, %v367
    %v772 = vrot.slane %v771, 4
    %v773 = vadd.f32 %v771, %v772
    %v774 = vrot.slane %v773, 2
    %v775 = vadd.f32 %v773, %v774
    %v776 = vrot.slane %v775, 1
    %v777 = vadd.f32 %v775, %v776
    %v778 = vadd.f32 %v360, %v368
    %v779 = vrot.slane %v778, 4
    %v780 = vadd.f32 %v778, %v779
    %v781 = vrot.slane %v780, 2
    %v782 = vadd.f32 %v780, %v781
    %v783 = vrot.slane %v782, 1
    %v784 = vadd.f32 %v782, %v783
    %v785 = vadd.f32 %v369, %v377
    %v786 = vrot.slane %v785, 4
    %v787 = vadd.f32 %v785, %v786
    %v788 = vrot.slane %v787, 2
    %v789 = vadd.f32 %v787, %v788
    %v790 = vrot.slane %v789, 1
    %v791 = vadd.f32 %v789, %v790
    %v792 = vadd.f32 %v370, %v378
    %v793 = vrot.slane %v792, 4
    %v794 = vadd.f32 %v792, %v793
    %v795 = vrot.slane %v794, 2
    %v796 = vadd.f32 %v794, %v795
    %v797 = vrot.slane %v796, 1
    %v798 = vadd.f32 %v796, %v797
    %v799 = vadd.f32 %v371, %v379
    %v800 = vrot.slane %v799, 4
    %v801 = vadd.f32 %v799, %v800
    %v802 = vrot.slane %v801, 2
    %v803 = vadd.f32 %v801, %v802
    %v804 = vrot.slane %v803, 1
    %v805 = vadd.f32 %v803, %v804
    %v806 = vadd.f32 %v372, %v380
    %v807 = vrot.slane %v806, 4
    %v808 = vadd.f32 %v806, %v807
    %v809 = vrot.slane %v808, 2
    %v810 = vadd.f32 %v808, %v809
    %v811 = vrot.slane %v810, 1
    %v812 = vadd.f32 %v810, %v811
    %v813 = vadd.f32 %v373, %v381
    %v814 = vrot.slane %v813, 4
    %v815 = vadd.f32 %v813, %v814
    %v816 = vrot.slane %v815, 2
    %v817 = vadd.f32 %v815, %v816
    %v818 = vrot.slane %v817, 1
    %v819 = vadd.f32 %v817, %v818
    %v820 = vadd.f32 %v374, %v382
    %v821 = vrot.slane %v820, 4
    %v822 = vadd.f32 %v820, %v821
    %v823 = vrot.slane %v822, 2
    %v824 = vadd.f32 %v822, %v823
    %v825 = vrot.slane %v824, 1
    %v826 = vadd.f32 %v824, %v825
    %v827 = vadd.f32 %v375, %v383
    %v828 = vrot.slane %v827, 4
    %v829 = vadd.f32 %v827, %v828
    %v830 = vrot.slane %v829, 2
    %v831 = vadd.f32 %v829, %v830
    %v832 = vrot.slane %v831, 1
    %v833 = vadd.f32 %v831, %v832
    %v834 = vadd.f32 %v376, %v384
    %v835 = vrot.slane %v834, 4
    %v836 = vadd.f32 %v834, %v835
    %v837 = vrot.slane %v836, 2
    %v838 = vadd.f32 %v836, %v837
    %v839 = vrot.slane %v838, 1
    %v840 = vadd.f32 %v838, %v839
    %vm905 = vcmask 1041409
    %v906 = vsel %vm905, %v455, %v399
    %vm907 = vcmask 1042434
    %v908 = vsel %vm907, %v511, %v906
    %vm909 = vcmask 1043459
    %v910 = vsel %vm909, %v567, %v908
    %vm911 = vcmask 1044484
    %v912 = vsel %vm911, %v623, %v910
    %vm913 = vcmask 1045509
    %v914 = vsel %vm913, %v679, %v912
    %vm915 = vcmask 1046534
    %v916 = vsel %vm915, %v735, %v914
    %vm917 = vcmask 1047559
    %v918 = vsel %vm917, %v791, %v916
    %v919 = vsel %vm905, %v462, %v406
    %v920 = vsel %vm907, %v518, %v919
    %v921 = vsel %vm909, %v574, %v920
    %v922 = vsel %vm911, %v630, %v921
    %v923 = vsel %vm913, %v686, %v922
    %v924 = vsel %vm915, %v742, %v923
    %v925 = vsel %vm917, %v798, %v924
    %v926 = vsel %vm905, %v469, %v413
    %v927 = vsel %vm907, %v525, %v926
    %v928 = vsel %vm909, %v581, %v927
    %v929 = vsel %vm911, %v637, %v928
    %v930 = vsel %vm913, %v693, %v929
    %v931 = vsel %vm915, %v749, %v930
    %v932 = vsel %vm917, %v805, %v931
    %v933 = vsel %vm905, %v476, %v420
    %v934 = vsel %vm907, %v532, %v933
    %v935 = vsel %vm909, %v588, %v934
    %v936 = vsel %vm911, %v644, %v935
    %v937 = vsel %vm913, %v700, %v936
    %v938 = vsel %vm915, %v756, %v937
    %v939 = vsel %vm917, %v812, %v938
    %v940 = vsel %vm905, %v483, %v427
    %v941 = vsel %vm907, %v539, %v940
    %v942 = vsel %vm909, %v595, %v941
    %v943 = vsel %vm911, %v651, %v942
    %v944 = vsel %vm913, %v707, %v943
    %v945 = vsel %vm915, %v763, %v944
    %v946 = vsel %vm917, %v819, %v945
    %v947 = vsel %vm905, %v490, %v434
    %v948 = vsel %vm907, %v546, %v947
    %v949 = vsel %vm909, %v602, %v948
    %v950 = vsel %vm911, %v658, %v949
    %v951 = vsel %vm913, %v714, %v950
    %v952 = vsel %vm915, %v770, %v951
    %v953 = vsel %vm917, %v826, %v952
    %v954 = vsel %vm905, %v497, %v441
    %v955 = vsel %vm907, %v553, %v954
    %v956 = vsel %vm909, %v609, %v955
    %v957 = vsel %vm911, %v665, %v956
    %v958 = vsel %vm913, %v721, %v957
    %v959 = vsel %vm915, %v777, %v958
    %v960 = vsel %vm917, %v833, %v959
    %v961 = vsel %vm905, %v504, %v448
    %v962 = vsel %vm907, %v560, %v961
    %v963 = vsel %vm909, %v616, %v962
    %v964 = vsel %vm911, %v672, %v963
    %v965 = vsel %vm913, %v728, %v964
    %v966 = vsel %vm915, %v784, %v965
    %v967 = vsel %vm917, %v840, %v966
    %v976 = vadd.f32 %v385, %v918
    %v977 = vadd.f32 %v386, %v925
    %v978 = vadd.f32 %v387, %v932
    %v979 = vadd.f32 %v388, %v939
    %v980 = vadd.f32 %v389, %v946
    %v981 = vadd.f32 %v390, %v953
    %v982 = vadd.f32 %v391, %v960
    %v983 = vadd.f32 %v392, %v967
    %984 = vst [vmem:[#allocation2] sm:$0xff] %v976
    %985 = vst [vmem:[#allocation2 + $0x8] sm:$0xff] %v977
    %986 = vst [vmem:[#allocation2 + $0x10] sm:$0xff] %v978
    %987 = vst [vmem:[#allocation2 + $0x18] sm:$0xff] %v979
    %988 = vst [vmem:[#allocation2 + $0x20] sm:$0xff] %v980
    %989 = vst [vmem:[#allocation2 + $0x28] sm:$0xff] %v981
    %990 = vst [vmem:[#allocation2 + $0x30] sm:$0xff] %v982
    %991 = vst [vmem:[#allocation2 + $0x38] sm:$0xff] %v983
    // Predicated region
    $region102: #{tpu_custom_call.1} parent=1 // pred_check
      %p992 = pneg %p181
    $region103: #{tpu_custom_call.1} parent=1 // pred_check_branch
      %994 = sbr.rel (%p992) target = $region105
    $region104: #{tpu_custom_call.1} parent=1 // pred_region
      %v995 = vld [vmem:[#allocation2] sm:$0xff]
      %v996 = vld [vmem:[#allocation2 + $0x8] sm:$0xff]
      %v997 = vld [vmem:[#allocation2 + $0x10] sm:$0xff]
      %v998 = vld [vmem:[#allocation2 + $0x18] sm:$0xff]
      %v999 = vld [vmem:[#allocation2 + $0x20] sm:$0xff]
      %v1000 = vld [vmem:[#allocation2 + $0x28] sm:$0xff]
      %v1001 = vld [vmem:[#allocation2 + $0x30] sm:$0xff]
      %v1002 = vld [vmem:[#allocation2 + $0x38] sm:$0xff]
      %v1003 = vmul.f32 %v995, 0.125
      %v1004 = vmul.f32 %v996, 0.125
      %v1005 = vmul.f32 %v997, 0.125
      %v1006 = vmul.f32 %v998, 0.125
      %v1007 = vmul.f32 %v999, 0.125
      %v1008 = vmul.f32 %v1000, 0.125
      %v1009 = vmul.f32 %v1001, 0.125
      %v1010 = vmul.f32 %v1002, 0.125
      %v1011 = vld [vmem:[#allocation5] sm:$0xff]
      %v1012 = vld [vmem:[#allocation5 + $0x8] sm:$0xff]
      %v1013 = vld [vmem:[#allocation5 + $0x10] sm:$0xff]
      %v1014 = vld [vmem:[#allocation5 + $0x18] sm:$0xff]
      %v1015 = vld [vmem:[#allocation5 + $0x20] sm:$0xff]
      %v1016 = vld [vmem:[#allocation5 + $0x28] sm:$0xff]
      %v1017 = vld [vmem:[#allocation5 + $0x30] sm:$0xff]
      %v1018 = vld [vmem:[#allocation5 + $0x38] sm:$0xff]
      %v1019 = vld [vmem:[#allocation5 + $0x40] sm:$0xff]
      %v1020 = vld [vmem:[#allocation5 + $0x48] sm:$0xff]
      %v1021 = vld [vmem:[#allocation5 + $0x50] sm:$0xff]
      %v1022 = vld [vmem:[#allocation5 + $0x58] sm:$0xff]
      %v1023 = vld [vmem:[#allocation5 + $0x60] sm:$0xff]
      %v1024 = vld [vmem:[#allocation5 + $0x68] sm:$0xff]
      %v1025 = vld [vmem:[#allocation5 + $0x70] sm:$0xff]
      %v1026 = vld [vmem:[#allocation5 + $0x78] sm:$0xff]
      %v1027 = vld [vmem:[#allocation5 + $0x80] sm:$0xff]
      %v1028 = vld [vmem:[#allocation5 + $0x88] sm:$0xff]
      %v1029 = vld [vmem:[#allocation5 + $0x90] sm:$0xff]
      %v1030 = vld [vmem:[#allocation5 + $0x98] sm:$0xff]
      %v1031 = vld [vmem:[#allocation5 + $0xa0] sm:$0xff]
      %v1032 = vld [vmem:[#allocation5 + $0xa8] sm:$0xff]
      %v1033 = vld [vmem:[#allocation5 + $0xb0] sm:$0xff]
      %v1034 = vld [vmem:[#allocation5 + $0xb8] sm:$0xff]
      %v1035 = vld [vmem:[#allocation5 + $0xc0] sm:$0xff]
      %v1036 = vld [vmem:[#allocation5 + $0xc8] sm:$0xff]
      %v1037 = vld [vmem:[#allocation5 + $0xd0] sm:$0xff]
      %v1038 = vld [vmem:[#allocation5 + $0xd8] sm:$0xff]
      %v1039 = vld [vmem:[#allocation5 + $0xe0] sm:$0xff]
      %v1040 = vld [vmem:[#allocation5 + $0xe8] sm:$0xff]
      %v1041 = vld [vmem:[#allocation5 + $0xf0] sm:$0xff]
      %v1042 = vld [vmem:[#allocation5 + $0xf8] sm:$0xff]
      %v1043 = vld [vmem:[#allocation5 + $0x100] sm:$0xff]
      %v1044 = vld [vmem:[#allocation5 + $0x108] sm:$0xff]
      %v1045 = vld [vmem:[#allocation5 + $0x110] sm:$0xff]
      %v1046 = vld [vmem:[#allocation5 + $0x118] sm:$0xff]
      %v1047 = vld [vmem:[#allocation5 + $0x120] sm:$0xff]
      %v1048 = vld [vmem:[#allocation5 + $0x128] sm:$0xff]
      %v1049 = vld [vmem:[#allocation5 + $0x130] sm:$0xff]
      %v1050 = vld [vmem:[#allocation5 + $0x138] sm:$0xff]
      %v1051 = vld [vmem:[#allocation5 + $0x140] sm:$0xff]
      %v1052 = vld [vmem:[#allocation5 + $0x148] sm:$0xff]
      %v1053 = vld [vmem:[#allocation5 + $0x150] sm:$0xff]
      %v1054 = vld [vmem:[#allocation5 + $0x158] sm:$0xff]
      %v1055 = vld [vmem:[#allocation5 + $0x160] sm:$0xff]
      %v1056 = vld [vmem:[#allocation5 + $0x168] sm:$0xff]
      %v1057 = vld [vmem:[#allocation5 + $0x170] sm:$0xff]
      %v1058 = vld [vmem:[#allocation5 + $0x178] sm:$0xff]
      %v1059 = vld [vmem:[#allocation5 + $0x180] sm:$0xff]
      %v1060 = vld [vmem:[#allocation5 + $0x188] sm:$0xff]
      %v1061 = vld [vmem:[#allocation5 + $0x190] sm:$0xff]
      %v1062 = vld [vmem:[#allocation5 + $0x198] sm:$0xff]
      %v1063 = vld [vmem:[#allocation5 + $0x1a0] sm:$0xff]
      %v1064 = vld [vmem:[#allocation5 + $0x1a8] sm:$0xff]
      %v1065 = vld [vmem:[#allocation5 + $0x1b0] sm:$0xff]
      %v1066 = vld [vmem:[#allocation5 + $0x1b8] sm:$0xff]
      %v1067 = vld [vmem:[#allocation5 + $0x1c0] sm:$0xff]
      %v1068 = vld [vmem:[#allocation5 + $0x1c8] sm:$0xff]
      %v1069 = vld [vmem:[#allocation5 + $0x1d0] sm:$0xff]
      %v1070 = vld [vmem:[#allocation5 + $0x1d8] sm:$0xff]
      %v1071 = vld [vmem:[#allocation5 + $0x1e0] sm:$0xff]
      %v1072 = vld [vmem:[#allocation5 + $0x1e8] sm:$0xff]
      %v1073 = vld [vmem:[#allocation5 + $0x1f0] sm:$0xff]
      %v1074 = vld [vmem:[#allocation5 + $0x1f8] sm:$0xff]
      %v1075 = vld [vmem:[#allocation5 + $0x200] sm:$0xff]
      %v1076 = vld [vmem:[#allocation5 + $0x208] sm:$0xff]
      %v1077 = vld [vmem:[#allocation5 + $0x210] sm:$0xff]
      %v1078 = vld [vmem:[#allocation5 + $0x218] sm:$0xff]
      %v1079 = vld [vmem:[#allocation5 + $0x220] sm:$0xff]
      %v1080 = vld [vmem:[#allocation5 + $0x228] sm:$0xff]
      %v1081 = vld [vmem:[#allocation5 + $0x230] sm:$0xff]
      %v1082 = vld [vmem:[#allocation5 + $0x238] sm:$0xff]
      %v1083 = vld [vmem:[#allocation5 + $0x240] sm:$0xff]
      %v1084 = vld [vmem:[#allocation5 + $0x248] sm:$0xff]
      %v1085 = vld [vmem:[#allocation5 + $0x250] sm:$0xff]
      %v1086 = vld [vmem:[#allocation5 + $0x258] sm:$0xff]
      %v1087 = vld [vmem:[#allocation5 + $0x260] sm:$0xff]
      %v1088 = vld [vmem:[#allocation5 + $0x268] sm:$0xff]
      %v1089 = vld [vmem:[#allocation5 + $0x270] sm:$0xff]
      %v1090 = vld [vmem:[#allocation5 + $0x278] sm:$0xff]
      %v1091 = vld [vmem:[#allocation5 + $0x280] sm:$0xff]
      %v1092 = vld [vmem:[#allocation5 + $0x288] sm:$0xff]
      %v1093 = vld [vmem:[#allocation5 + $0x290] sm:$0xff]
      %v1094 = vld [vmem:[#allocation5 + $0x298] sm:$0xff]
      %v1095 = vld [vmem:[#allocation5 + $0x2a0] sm:$0xff]
      %v1096 = vld [vmem:[#allocation5 + $0x2a8] sm:$0xff]
      %v1097 = vld [vmem:[#allocation5 + $0x2b0] sm:$0xff]
      %v1098 = vld [vmem:[#allocation5 + $0x2b8] sm:$0xff]
      %v1099 = vld [vmem:[#allocation5 + $0x2c0] sm:$0xff]
      %v1100 = vld [vmem:[#allocation5 + $0x2c8] sm:$0xff]
      %v1101 = vld [vmem:[#allocation5 + $0x2d0] sm:$0xff]
      %v1102 = vld [vmem:[#allocation5 + $0x2d8] sm:$0xff]
      %v1103 = vld [vmem:[#allocation5 + $0x2e0] sm:$0xff]
      %v1104 = vld [vmem:[#allocation5 + $0x2e8] sm:$0xff]
      %v1105 = vld [vmem:[#allocation5 + $0x2f0] sm:$0xff]
      %v1106 = vld [vmem:[#allocation5 + $0x2f8] sm:$0xff]
      %v1107 = vld [vmem:[#allocation5 + $0x300] sm:$0xff]
      %v1108 = vld [vmem:[#allocation5 + $0x308] sm:$0xff]
      %v1109 = vld [vmem:[#allocation5 + $0x310] sm:$0xff]
      %v1110 = vld [vmem:[#allocation5 + $0x318] sm:$0xff]
      %v1111 = vld [vmem:[#allocation5 + $0x320] sm:$0xff]
      %v1112 = vld [vmem:[#allocation5 + $0x328] sm:$0xff]
      %v1113 = vld [vmem:[#allocation5 + $0x330] sm:$0xff]
      %v1114 = vld [vmem:[#allocation5 + $0x338] sm:$0xff]
      %v1115 = vld [vmem:[#allocation5 + $0x340] sm:$0xff]
      %v1116 = vld [vmem:[#allocation5 + $0x348] sm:$0xff]
      %v1117 = vld [vmem:[#allocation5 + $0x350] sm:$0xff]
      %v1118 = vld [vmem:[#allocation5 + $0x358] sm:$0xff]
      %v1119 = vld [vmem:[#allocation5 + $0x360] sm:$0xff]
      %v1120 = vld [vmem:[#allocation5 + $0x368] sm:$0xff]
      %v1121 = vld [vmem:[#allocation5 + $0x370] sm:$0xff]
      %v1122 = vld [vmem:[#allocation5 + $0x378] sm:$0xff]
      %v1123 = vld [vmem:[#allocation5 + $0x380] sm:$0xff]
      %v1124 = vld [vmem:[#allocation5 + $0x388] sm:$0xff]
      %v1125 = vld [vmem:[#allocation5 + $0x390] sm:$0xff]
      %v1126 = vld [vmem:[#allocation5 + $0x398] sm:$0xff]
      %v1127 = vld [vmem:[#allocation5 + $0x3a0] sm:$0xff]
      %v1128 = vld [vmem:[#allocation5 + $0x3a8] sm:$0xff]
      %v1129 = vld [vmem:[#allocation5 + $0x3b0] sm:$0xff]
      %v1130 = vld [vmem:[#allocation5 + $0x3b8] sm:$0xff]
      %v1131 = vld [vmem:[#allocation5 + $0x3c0] sm:$0xff]
      %v1132 = vld [vmem:[#allocation5 + $0x3c8] sm:$0xff]
      %v1133 = vld [vmem:[#allocation5 + $0x3d0] sm:$0xff]
      %v1134 = vld [vmem:[#allocation5 + $0x3d8] sm:$0xff]
      %v1135 = vld [vmem:[#allocation5 + $0x3e0] sm:$0xff]
      %v1136 = vld [vmem:[#allocation5 + $0x3e8] sm:$0xff]
      %v1137 = vld [vmem:[#allocation5 + $0x3f0] sm:$0xff]
      %v1138 = vld [vmem:[#allocation5 + $0x3f8] sm:$0xff]
      %v1139 = vld [vmem:[#allocation5 + $0x400] sm:$0xff]
      %v1140 = vld [vmem:[#allocation5 + $0x408] sm:$0xff]
      %v1141 = vld [vmem:[#allocation5 + $0x410] sm:$0xff]
      %v1142 = vld [vmem:[#allocation5 + $0x418] sm:$0xff]
      %v1143 = vld [vmem:[#allocation5 + $0x420] sm:$0xff]
      %v1144 = vld [vmem:[#allocation5 + $0x428] sm:$0xff]
      %v1145 = vld [vmem:[#allocation5 + $0x430] sm:$0xff]
      %v1146 = vld [vmem:[#allocation5 + $0x438] sm:$0xff]
      %v1147 = vld [vmem:[#allocation5 + $0x440] sm:$0xff]
      %v1148 = vld [vmem:[#allocation5 + $0x448] sm:$0xff]
      %v1149 = vld [vmem:[#allocation5 + $0x450] sm:$0xff]
      %v1150 = vld [vmem:[#allocation5 + $0x458] sm:$0xff]
      %v1151 = vld [vmem:[#allocation5 + $0x460] sm:$0xff]
      %v1152 = vld [vmem:[#allocation5 + $0x468] sm:$0xff]
      %v1153 = vld [vmem:[#allocation5 + $0x470] sm:$0xff]
      %v1154 = vld [vmem:[#allocation5 + $0x478] sm:$0xff]
      %v1155 = vld [vmem:[#allocation5 + $0x480] sm:$0xff]
      %v1156 = vld [vmem:[#allocation5 + $0x488] sm:$0xff]
      %v1157 = vld [vmem:[#allocation5 + $0x490] sm:$0xff]
      %v1158 = vld [vmem:[#allocation5 + $0x498] sm:$0xff]
      %v1159 = vld [vmem:[#allocation5 + $0x4a0] sm:$0xff]
      %v1160 = vld [vmem:[#allocation5 + $0x4a8] sm:$0xff]
      %v1161 = vld [vmem:[#allocation5 + $0x4b0] sm:$0xff]
      %v1162 = vld [vmem:[#allocation5 + $0x4b8] sm:$0xff]
      %v1163 = vld [vmem:[#allocation5 + $0x4c0] sm:$0xff]
      %v1164 = vld [vmem:[#allocation5 + $0x4c8] sm:$0xff]
      %v1165 = vld [vmem:[#allocation5 + $0x4d0] sm:$0xff]
      %v1166 = vld [vmem:[#allocation5 + $0x4d8] sm:$0xff]
      %v1167 = vld [vmem:[#allocation5 + $0x4e0] sm:$0xff]
      %v1168 = vld [vmem:[#allocation5 + $0x4e8] sm:$0xff]
      %v1169 = vld [vmem:[#allocation5 + $0x4f0] sm:$0xff]
      %v1170 = vld [vmem:[#allocation5 + $0x4f8] sm:$0xff]
      %v1171 = vld [vmem:[#allocation5 + $0x500] sm:$0xff]
      %v1172 = vld [vmem:[#allocation5 + $0x508] sm:$0xff]
      %v1173 = vld [vmem:[#allocation5 + $0x510] sm:$0xff]
      %v1174 = vld [vmem:[#allocation5 + $0x518] sm:$0xff]
      %v1175 = vld [vmem:[#allocation5 + $0x520] sm:$0xff]
      %v1176 = vld [vmem:[#allocation5 + $0x528] sm:$0xff]
      %v1177 = vld [vmem:[#allocation5 + $0x530] sm:$0xff]
      %v1178 = vld [vmem:[#allocation5 + $0x538] sm:$0xff]
      %v1179 = vld [vmem:[#allocation5 + $0x540] sm:$0xff]
      %v1180 = vld [vmem:[#allocation5 + $0x548] sm:$0xff]
      %v1181 = vld [vmem:[#allocation5 + $0x550] sm:$0xff]
      %v1182 = vld [vmem:[#allocation5 + $0x558] sm:$0xff]
      %v1183 = vld [vmem:[#allocation5 + $0x560] sm:$0xff]
      %v1184 = vld [vmem:[#allocation5 + $0x568] sm:$0xff]
      %v1185 = vld [vmem:[#allocation5 + $0x570] sm:$0xff]
      %v1186 = vld [vmem:[#allocation5 + $0x578] sm:$0xff]
      %v1187 = vld [vmem:[#allocation5 + $0x580] sm:$0xff]
      %v1188 = vld [vmem:[#allocation5 + $0x588] sm:$0xff]
      %v1189 = vld [vmem:[#allocation5 + $0x590] sm:$0xff]
      %v1190 = vld [vmem:[#allocation5 + $0x598] sm:$0xff]
      %v1191 = vld [vmem:[#allocation5 + $0x5a0] sm:$0xff]
      %v1192 = vld [vmem:[#allocation5 + $0x5a8] sm:$0xff]
      %v1193 = vld [vmem:[#allocation5 + $0x5b0] sm:$0xff]
      %v1194 = vld [vmem:[#allocation5 + $0x5b8] sm:$0xff]
      %v1195 = vld [vmem:[#allocation5 + $0x5c0] sm:$0xff]
      %v1196 = vld [vmem:[#allocation5 + $0x5c8] sm:$0xff]
      %v1197 = vld [vmem:[#allocation5 + $0x5d0] sm:$0xff]
      %v1198 = vld [vmem:[#allocation5 + $0x5d8] sm:$0xff]
      %v1199 = vld [vmem:[#allocation5 + $0x5e0] sm:$0xff]
      %v1200 = vld [vmem:[#allocation5 + $0x5e8] sm:$0xff]
      %v1201 = vld [vmem:[#allocation5 + $0x5f0] sm:$0xff]
      %v1202 = vld [vmem:[#allocation5 + $0x5f8] sm:$0xff]
      %v1203 = vld [vmem:[#allocation5 + $0x600] sm:$0xff]
      %v1204 = vld [vmem:[#allocation5 + $0x608] sm:$0xff]
      %v1205 = vld [vmem:[#allocation5 + $0x610] sm:$0xff]
      %v1206 = vld [vmem:[#allocation5 + $0x618] sm:$0xff]
      %v1207 = vld [vmem:[#allocation5 + $0x620] sm:$0xff]
      %v1208 = vld [vmem:[#allocation5 + $0x628] sm:$0xff]
      %v1209 = vld [vmem:[#allocation5 + $0x630] sm:$0xff]
      %v1210 = vld [vmem:[#allocation5 + $0x638] sm:$0xff]
      %v1211 = vld [vmem:[#allocation5 + $0x640] sm:$0xff]
      %v1212 = vld [vmem:[#allocation5 + $0x648] sm:$0xff]
      %v1213 = vld [vmem:[#allocation5 + $0x650] sm:$0xff]
      %v1214 = vld [vmem:[#allocation5 + $0x658] sm:$0xff]
      %v1215 = vld [vmem:[#allocation5 + $0x660] sm:$0xff]
      %v1216 = vld [vmem:[#allocation5 + $0x668] sm:$0xff]
      %v1217 = vld [vmem:[#allocation5 + $0x670] sm:$0xff]
      %v1218 = vld [vmem:[#allocation5 + $0x678] sm:$0xff]
      %v1219 = vld [vmem:[#allocation5 + $0x680] sm:$0xff]
      %v1220 = vld [vmem:[#allocation5 + $0x688] sm:$0xff]
      %v1221 = vld [vmem:[#allocation5 + $0x690] sm:$0xff]
      %v1222 = vld [vmem:[#allocation5 + $0x698] sm:$0xff]
      %v1223 = vld [vmem:[#allocation5 + $0x6a0] sm:$0xff]
      %v1224 = vld [vmem:[#allocation5 + $0x6a8] sm:$0xff]
      %v1225 = vld [vmem:[#allocation5 + $0x6b0] sm:$0xff]
      %v1226 = vld [vmem:[#allocation5 + $0x6b8] sm:$0xff]
      %v1227 = vld [vmem:[#allocation5 + $0x6c0] sm:$0xff]
      %v1228 = vld [vmem:[#allocation5 + $0x6c8] sm:$0xff]
      %v1229 = vld [vmem:[#allocation5 + $0x6d0] sm:$0xff]
      %v1230 = vld [vmem:[#allocation5 + $0x6d8] sm:$0xff]
      %v1231 = vld [vmem:[#allocation5 + $0x6e0] sm:$0xff]
      %v1232 = vld [vmem:[#allocation5 + $0x6e8] sm:$0xff]
      %v1233 = vld [vmem:[#allocation5 + $0x6f0] sm:$0xff]
      %v1234 = vld [vmem:[#allocation5 + $0x6f8] sm:$0xff]
      %v1235 = vld [vmem:[#allocation5 + $0x700] sm:$0xff]
      %v1236 = vld [vmem:[#allocation5 + $0x708] sm:$0xff]
      %v1237 = vld [vmem:[#allocation5 + $0x710] sm:$0xff]
      %v1238 = vld [vmem:[#allocation5 + $0x718] sm:$0xff]
      %v1239 = vld [vmem:[#allocation5 + $0x720] sm:$0xff]
      %v1240 = vld [vmem:[#allocation5 + $0x728] sm:$0xff]
      %v1241 = vld [vmem:[#allocation5 + $0x730] sm:$0xff]
      %v1242 = vld [vmem:[#allocation5 + $0x738] sm:$0xff]
      %v1243 = vld [vmem:[#allocation5 + $0x740] sm:$0xff]
      %v1244 = vld [vmem:[#allocation5 + $0x748] sm:$0xff]
      %v1245 = vld [vmem:[#allocation5 + $0x750] sm:$0xff]
      %v1246 = vld [vmem:[#allocation5 + $0x758] sm:$0xff]
      %v1247 = vld [vmem:[#allocation5 + $0x760] sm:$0xff]
      %v1248 = vld [vmem:[#allocation5 + $0x768] sm:$0xff]
      %v1249 = vld [vmem:[#allocation5 + $0x770] sm:$0xff]
      %v1250 = vld [vmem:[#allocation5 + $0x778] sm:$0xff]
      %v1251 = vld [vmem:[#allocation5 + $0x780] sm:$0xff]
      %v1252 = vld [vmem:[#allocation5 + $0x788] sm:$0xff]
      %v1253 = vld [vmem:[#allocation5 + $0x790] sm:$0xff]
      %v1254 = vld [vmem:[#allocation5 + $0x798] sm:$0xff]
      %v1255 = vld [vmem:[#allocation5 + $0x7a0] sm:$0xff]
      %v1256 = vld [vmem:[#allocation5 + $0x7a8] sm:$0xff]
      %v1257 = vld [vmem:[#allocation5 + $0x7b0] sm:$0xff]
      %v1258 = vld [vmem:[#allocation5 + $0x7b8] sm:$0xff]
      %v1259 = vld [vmem:[#allocation5 + $0x7c0] sm:$0xff]
      %v1260 = vld [vmem:[#allocation5 + $0x7c8] sm:$0xff]
      %v1261 = vld [vmem:[#allocation5 + $0x7d0] sm:$0xff]
      %v1262 = vld [vmem:[#allocation5 + $0x7d8] sm:$0xff]
      %v1263 = vld [vmem:[#allocation5 + $0x7e0] sm:$0xff]
      %v1264 = vld [vmem:[#allocation5 + $0x7e8] sm:$0xff]
      %v1265 = vld [vmem:[#allocation5 + $0x7f0] sm:$0xff]
      %v1266 = vld [vmem:[#allocation5 + $0x7f8] sm:$0xff]
      %v1267 = vld [vmem:[#allocation5 + $0x800] sm:$0xff]
      %v1268 = vld [vmem:[#allocation5 + $0x808] sm:$0xff]
      %v1269 = vld [vmem:[#allocation5 + $0x810] sm:$0xff]
      %v1270 = vld [vmem:[#allocation5 + $0x818] sm:$0xff]
      %v1271 = vld [vmem:[#allocation5 + $0x820] sm:$0xff]
      %v1272 = vld [vmem:[#allocation5 + $0x828] sm:$0xff]
      %v1273 = vld [vmem:[#allocation5 + $0x830] sm:$0xff]
      %v1274 = vld [vmem:[#allocation5 + $0x838] sm:$0xff]
      %v1275 = vld [vmem:[#allocation5 + $0x840] sm:$0xff]
      %v1276 = vld [vmem:[#allocation5 + $0x848] sm:$0xff]
      %v1277 = vld [vmem:[#allocation5 + $0x850] sm:$0xff]
      %v1278 = vld [vmem:[#allocation5 + $0x858] sm:$0xff]
      %v1279 = vld [vmem:[#allocation5 + $0x860] sm:$0xff]
      %v1280 = vld [vmem:[#allocation5 + $0x868] sm:$0xff]
      %v1281 = vld [vmem:[#allocation5 + $0x870] sm:$0xff]
      %v1282 = vld [vmem:[#allocation5 + $0x878] sm:$0xff]
      %v1283 = vld [vmem:[#allocation5 + $0x880] sm:$0xff]
      %v1284 = vld [vmem:[#allocation5 + $0x888] sm:$0xff]
      %v1285 = vld [vmem:[#allocation5 + $0x890] sm:$0xff]
      %v1286 = vld [vmem:[#allocation5 + $0x898] sm:$0xff]
      %v1287 = vld [vmem:[#allocation5 + $0x8a0] sm:$0xff]
      %v1288 = vld [vmem:[#allocation5 + $0x8a8] sm:$0xff]
      %v1289 = vld [vmem:[#allocation5 + $0x8b0] sm:$0xff]
      %v1290 = vld [vmem:[#allocation5 + $0x8b8] sm:$0xff]
      %v1291 = vld [vmem:[#allocation5 + $0x8c0] sm:$0xff]
      %v1292 = vld [vmem:[#allocation5 + $0x8c8] sm:$0xff]
      %v1293 = vld [vmem:[#allocation5 + $0x8d0] sm:$0xff]
      %v1294 = vld [vmem:[#allocation5 + $0x8d8] sm:$0xff]
      %v1295 = vld [vmem:[#allocation5 + $0x8e0] sm:$0xff]
      %v1296 = vld [vmem:[#allocation5 + $0x8e8] sm:$0xff]
      %v1297 = vld [vmem:[#allocation5 + $0x8f0] sm:$0xff]
      %v1298 = vld [vmem:[#allocation5 + $0x8f8] sm:$0xff]
      %v1299 = vld [vmem:[#allocation5 + $0x900] sm:$0xff]
      %v1300 = vld [vmem:[#allocation5 + $0x908] sm:$0xff]
      %v1301 = vld [vmem:[#allocation5 + $0x910] sm:$0xff]
      %v1302 = vld [vmem:[#allocation5 + $0x918] sm:$0xff]
      %v1303 = vld [vmem:[#allocation5 + $0x920] sm:$0xff]
      %v1304 = vld [vmem:[#allocation5 + $0x928] sm:$0xff]
      %v1305 = vld [vmem:[#allocation5 + $0x930] sm:$0xff]
      %v1306 = vld [vmem:[#allocation5 + $0x938] sm:$0xff]
      %v1307 = vld [vmem:[#allocation5 + $0x940] sm:$0xff]
      %v1308 = vld [vmem:[#allocation5 + $0x948] sm:$0xff]
      %v1309 = vld [vmem:[#allocation5 + $0x950] sm:$0xff]
      %v1310 = vld [vmem:[#allocation5 + $0x958] sm:$0xff]
      %v1311 = vld [vmem:[#allocation5 + $0x960] sm:$0xff]
      %v1312 = vld [vmem:[#allocation5 + $0x968] sm:$0xff]
      %v1313 = vld [vmem:[#allocation5 + $0x970] sm:$0xff]
      %v1314 = vld [vmem:[#allocation5 + $0x978] sm:$0xff]
      %v1315 = vld [vmem:[#allocation5 + $0x980] sm:$0xff]
      %v1316 = vld [vmem:[#allocation5 + $0x988] sm:$0xff]
      %v1317 = vld [vmem:[#allocation5 + $0x990] sm:$0xff]
      %v1318 = vld [vmem:[#allocation5 + $0x998] sm:$0xff]
      %v1319 = vld [vmem:[#allocation5 + $0x9a0] sm:$0xff]
      %v1320 = vld [vmem:[#allocation5 + $0x9a8] sm:$0xff]
      %v1321 = vld [vmem:[#allocation5 + $0x9b0] sm:$0xff]
      %v1322 = vld [vmem:[#allocation5 + $0x9b8] sm:$0xff]
      %v1323 = vld [vmem:[#allocation5 + $0x9c0] sm:$0xff]
      %v1324 = vld [vmem:[#allocation5 + $0x9c8] sm:$0xff]
      %v1325 = vld [vmem:[#allocation5 + $0x9d0] sm:$0xff]
      %v1326 = vld [vmem:[#allocation5 + $0x9d8] sm:$0xff]
      %v1327 = vld [vmem:[#allocation5 + $0x9e0] sm:$0xff]
      %v1328 = vld [vmem:[#allocation5 + $0x9e8] sm:$0xff]
      %v1329 = vld [vmem:[#allocation5 + $0x9f0] sm:$0xff]
      %v1330 = vld [vmem:[#allocation5 + $0x9f8] sm:$0xff]
      %v1331 = vld [vmem:[#allocation5 + $0xa00] sm:$0xff]
      %v1332 = vld [vmem:[#allocation5 + $0xa08] sm:$0xff]
      %v1333 = vld [vmem:[#allocation5 + $0xa10] sm:$0xff]
      %v1334 = vld [vmem:[#allocation5 + $0xa18] sm:$0xff]
      %v1335 = vld [vmem:[#allocation5 + $0xa20] sm:$0xff]
      %v1336 = vld [vmem:[#allocation5 + $0xa28] sm:$0xff]
      %v1337 = vld [vmem:[#allocation5 + $0xa30] sm:$0xff]
      %v1338 = vld [vmem:[#allocation5 + $0xa38] sm:$0xff]
      %v1339 = vld [vmem:[#allocation5 + $0xa40] sm:$0xff]
      %v1340 = vld [vmem:[#allocation5 + $0xa48] sm:$0xff]
      %v1341 = vld [vmem:[#allocation5 + $0xa50] sm:$0xff]
      %v1342 = vld [vmem:[#allocation5 + $0xa58] sm:$0xff]
      %v1343 = vld [vmem:[#allocation5 + $0xa60] sm:$0xff]
      %v1344 = vld [vmem:[#allocation5 + $0xa68] sm:$0xff]
      %v1345 = vld [vmem:[#allocation5 + $0xa70] sm:$0xff]
      %v1346 = vld [vmem:[#allocation5 + $0xa78] sm:$0xff]
      %v1347 = vld [vmem:[#allocation5 + $0xa80] sm:$0xff]
      %v1348 = vld [vmem:[#allocation5 + $0xa88] sm:$0xff]
      %v1349 = vld [vmem:[#allocation5 + $0xa90] sm:$0xff]
      %v1350 = vld [vmem:[#allocation5 + $0xa98] sm:$0xff]
      %v1351 = vld [vmem:[#allocation5 + $0xaa0] sm:$0xff]
      %v1352 = vld [vmem:[#allocation5 + $0xaa8] sm:$0xff]
      %v1353 = vld [vmem:[#allocation5 + $0xab0] sm:$0xff]
      %v1354 = vld [vmem:[#allocation5 + $0xab8] sm:$0xff]
      %v1355 = vld [vmem:[#allocation5 + $0xac0] sm:$0xff]
      %v1356 = vld [vmem:[#allocation5 + $0xac8] sm:$0xff]
      %v1357 = vld [vmem:[#allocation5 + $0xad0] sm:$0xff]
      %v1358 = vld [vmem:[#allocation5 + $0xad8] sm:$0xff]
      %v1359 = vld [vmem:[#allocation5 + $0xae0] sm:$0xff]
      %v1360 = vld [vmem:[#allocation5 + $0xae8] sm:$0xff]
      %v1361 = vld [vmem:[#allocation5 + $0xaf0] sm:$0xff]
      %v1362 = vld [vmem:[#allocation5 + $0xaf8] sm:$0xff]
      %v1363 = vld [vmem:[#allocation5 + $0xb00] sm:$0xff]
      %v1364 = vld [vmem:[#allocation5 + $0xb08] sm:$0xff]
      %v1365 = vld [vmem:[#allocation5 + $0xb10] sm:$0xff]
      %v1366 = vld [vmem:[#allocation5 + $0xb18] sm:$0xff]
      %v1367 = vld [vmem:[#allocation5 + $0xb20] sm:$0xff]
      %v1368 = vld [vmem:[#allocation5 + $0xb28] sm:$0xff]
      %v1369 = vld [vmem:[#allocation5 + $0xb30] sm:$0xff]
      %v1370 = vld [vmem:[#allocation5 + $0xb38] sm:$0xff]
      %v1371 = vld [vmem:[#allocation5 + $0xb40] sm:$0xff]
      %v1372 = vld [vmem:[#allocation5 + $0xb48] sm:$0xff]
      %v1373 = vld [vmem:[#allocation5 + $0xb50] sm:$0xff]
      %v1374 = vld [vmem:[#allocation5 + $0xb58] sm:$0xff]
      %v1375 = vld [vmem:[#allocation5 + $0xb60] sm:$0xff]
      %v1376 = vld [vmem:[#allocation5 + $0xb68] sm:$0xff]
      %v1377 = vld [vmem:[#allocation5 + $0xb70] sm:$0xff]
      %v1378 = vld [vmem:[#allocation5 + $0xb78] sm:$0xff]
      %v1379 = vld [vmem:[#allocation5 + $0xb80] sm:$0xff]
      %v1380 = vld [vmem:[#allocation5 + $0xb88] sm:$0xff]
      %v1381 = vld [vmem:[#allocation5 + $0xb90] sm:$0xff]
      %v1382 = vld [vmem:[#allocation5 + $0xb98] sm:$0xff]
      %v1383 = vld [vmem:[#allocation5 + $0xba0] sm:$0xff]
      %v1384 = vld [vmem:[#allocation5 + $0xba8] sm:$0xff]
      %v1385 = vld [vmem:[#allocation5 + $0xbb0] sm:$0xff]
      %v1386 = vld [vmem:[#allocation5 + $0xbb8] sm:$0xff]
      %v1387 = vld [vmem:[#allocation5 + $0xbc0] sm:$0xff]
      %v1388 = vld [vmem:[#allocation5 + $0xbc8] sm:$0xff]
      %v1389 = vld [vmem:[#allocation5 + $0xbd0] sm:$0xff]
      %v1390 = vld [vmem:[#allocation5 + $0xbd8] sm:$0xff]
      %v1391 = vld [vmem:[#allocation5 + $0xbe0] sm:$0xff]
      %v1392 = vld [vmem:[#allocation5 + $0xbe8] sm:$0xff]
      %v1393 = vld [vmem:[#allocation5 + $0xbf0] sm:$0xff]
      %v1394 = vld [vmem:[#allocation5 + $0xbf8] sm:$0xff]
      %v1395 = vld [vmem:[#allocation5 + $0xc00] sm:$0xff]
      %v1396 = vld [vmem:[#allocation5 + $0xc08] sm:$0xff]
      %v1397 = vld [vmem:[#allocation5 + $0xc10] sm:$0xff]
      %v1398 = vld [vmem:[#allocation5 + $0xc18] sm:$0xff]
      %v1399 = vld [vmem:[#allocation5 + $0xc20] sm:$0xff]
      %v1400 = vld [vmem:[#allocation5 + $0xc28] sm:$0xff]
      %v1401 = vld [vmem:[#allocation5 + $0xc30] sm:$0xff]
      %v1402 = vld [vmem:[#allocation5 + $0xc38] sm:$0xff]
      %v1403 = vld [vmem:[#allocation5 + $0xc40] sm:$0xff]
      %v1404 = vld [vmem:[#allocation5 + $0xc48] sm:$0xff]
      %v1405 = vld [vmem:[#allocation5 + $0xc50] sm:$0xff]
      %v1406 = vld [vmem:[#allocation5 + $0xc58] sm:$0xff]
      %v1407 = vld [vmem:[#allocation5 + $0xc60] sm:$0xff]
      %v1408 = vld [vmem:[#allocation5 + $0xc68] sm:$0xff]
      %v1409 = vld [vmem:[#allocation5 + $0xc70] sm:$0xff]
      %v1410 = vld [vmem:[#allocation5 + $0xc78] sm:$0xff]
      %v1411 = vld [vmem:[#allocation5 + $0xc80] sm:$0xff]
      %v1412 = vld [vmem:[#allocation5 + $0xc88] sm:$0xff]
      %v1413 = vld [vmem:[#allocation5 + $0xc90] sm:$0xff]
      %v1414 = vld [vmem:[#allocation5 + $0xc98] sm:$0xff]
      %v1415 = vld [vmem:[#allocation5 + $0xca0] sm:$0xff]
      %v1416 = vld [vmem:[#allocation5 + $0xca8] sm:$0xff]
      %v1417 = vld [vmem:[#allocation5 + $0xcb0] sm:$0xff]
      %v1418 = vld [vmem:[#allocation5 + $0xcb8] sm:$0xff]
      %v1419 = vld [vmem:[#allocation5 + $0xcc0] sm:$0xff]
      %v1420 = vld [vmem:[#allocation5 + $0xcc8] sm:$0xff]
      %v1421 = vld [vmem:[#allocation5 + $0xcd0] sm:$0xff]
      %v1422 = vld [vmem:[#allocation5 + $0xcd8] sm:$0xff]
      %v1423 = vld [vmem:[#allocation5 + $0xce0] sm:$0xff]
      %v1424 = vld [vmem:[#allocation5 + $0xce8] sm:$0xff]
      %v1425 = vld [vmem:[#allocation5 + $0xcf0] sm:$0xff]
      %v1426 = vld [vmem:[#allocation5 + $0xcf8] sm:$0xff]
      %v1427 = vld [vmem:[#allocation5 + $0xd00] sm:$0xff]
      %v1428 = vld [vmem:[#allocation5 + $0xd08] sm:$0xff]
      %v1429 = vld [vmem:[#allocation5 + $0xd10] sm:$0xff]
      %v1430 = vld [vmem:[#allocation5 + $0xd18] sm:$0xff]
      %v1431 = vld [vmem:[#allocation5 + $0xd20] sm:$0xff]
      %v1432 = vld [vmem:[#allocation5 + $0xd28] sm:$0xff]
      %v1433 = vld [vmem:[#allocation5 + $0xd30] sm:$0xff]
      %v1434 = vld [vmem:[#allocation5 + $0xd38] sm:$0xff]
      %v1435 = vld [vmem:[#allocation5 + $0xd40] sm:$0xff]
      %v1436 = vld [vmem:[#allocation5 + $0xd48] sm:$0xff]
      %v1437 = vld [vmem:[#allocation5 + $0xd50] sm:$0xff]
      %v1438 = vld [vmem:[#allocation5 + $0xd58] sm:$0xff]
      %v1439 = vld [vmem:[#allocation5 + $0xd60] sm:$0xff]
      %v1440 = vld [vmem:[#allocation5 + $0xd68] sm:$0xff]
      %v1441 = vld [vmem:[#allocation5 + $0xd70] sm:$0xff]
      %v1442 = vld [vmem:[#allocation5 + $0xd78] sm:$0xff]
      %v1443 = vld [vmem:[#allocation5 + $0xd80] sm:$0xff]
      %v1444 = vld [vmem:[#allocation5 + $0xd88] sm:$0xff]
      %v1445 = vld [vmem:[#allocation5 + $0xd90] sm:$0xff]
      %v1446 = vld [vmem:[#allocation5 + $0xd98] sm:$0xff]
      %v1447 = vld [vmem:[#allocation5 + $0xda0] sm:$0xff]
      %v1448 = vld [vmem:[#allocation5 + $0xda8] sm:$0xff]
      %v1449 = vld [vmem:[#allocation5 + $0xdb0] sm:$0xff]
      %v1450 = vld [vmem:[#allocation5 + $0xdb8] sm:$0xff]
      %v1451 = vld [vmem:[#allocation5 + $0xdc0] sm:$0xff]
      %v1452 = vld [vmem:[#allocation5 + $0xdc8] sm:$0xff]
      %v1453 = vld [vmem:[#allocation5 + $0xdd0] sm:$0xff]
      %v1454 = vld [vmem:[#allocation5 + $0xdd8] sm:$0xff]
      %v1455 = vld [vmem:[#allocation5 + $0xde0] sm:$0xff]
      %v1456 = vld [vmem:[#allocation5 + $0xde8] sm:$0xff]
      %v1457 = vld [vmem:[#allocation5 + $0xdf0] sm:$0xff]
      %v1458 = vld [vmem:[#allocation5 + $0xdf8] sm:$0xff]
      %v1459 = vld [vmem:[#allocation5 + $0xe00] sm:$0xff]
      %v1460 = vld [vmem:[#allocation5 + $0xe08] sm:$0xff]
      %v1461 = vld [vmem:[#allocation5 + $0xe10] sm:$0xff]
      %v1462 = vld [vmem:[#allocation5 + $0xe18] sm:$0xff]
      %v1463 = vld [vmem:[#allocation5 + $0xe20] sm:$0xff]
      %v1464 = vld [vmem:[#allocation5 + $0xe28] sm:$0xff]
      %v1465 = vld [vmem:[#allocation5 + $0xe30] sm:$0xff]
      %v1466 = vld [vmem:[#allocation5 + $0xe38] sm:$0xff]
      %v1467 = vld [vmem:[#allocation5 + $0xe40] sm:$0xff]
      %v1468 = vld [vmem:[#allocation5 + $0xe48] sm:$0xff]
      %v1469 = vld [vmem:[#allocation5 + $0xe50] sm:$0xff]
      %v1470 = vld [vmem:[#allocation5 + $0xe58] sm:$0xff]
      %v1471 = vld [vmem:[#allocation5 + $0xe60] sm:$0xff]
      %v1472 = vld [vmem:[#allocation5 + $0xe68] sm:$0xff]
      %v1473 = vld [vmem:[#allocation5 + $0xe70] sm:$0xff]
      %v1474 = vld [vmem:[#allocation5 + $0xe78] sm:$0xff]
      %v1475 = vld [vmem:[#allocation5 + $0xe80] sm:$0xff]
      %v1476 = vld [vmem:[#allocation5 + $0xe88] sm:$0xff]
      %v1477 = vld [vmem:[#allocation5 + $0xe90] sm:$0xff]
      %v1478 = vld [vmem:[#allocation5 + $0xe98] sm:$0xff]
      %v1479 = vld [vmem:[#allocation5 + $0xea0] sm:$0xff]
      %v1480 = vld [vmem:[#allocation5 + $0xea8] sm:$0xff]
      %v1481 = vld [vmem:[#allocation5 + $0xeb0] sm:$0xff]
      %v1482 = vld [vmem:[#allocation5 + $0xeb8] sm:$0xff]
      %v1483 = vld [vmem:[#allocation5 + $0xec0] sm:$0xff]
      %v1484 = vld [vmem:[#allocation5 + $0xec8] sm:$0xff]
      %v1485 = vld [vmem:[#allocation5 + $0xed0] sm:$0xff]
      %v1486 = vld [vmem:[#allocation5 + $0xed8] sm:$0xff]
      %v1487 = vld [vmem:[#allocation5 + $0xee0] sm:$0xff]
      %v1488 = vld [vmem:[#allocation5 + $0xee8] sm:$0xff]
      %v1489 = vld [vmem:[#allocation5 + $0xef0] sm:$0xff]
      %v1490 = vld [vmem:[#allocation5 + $0xef8] sm:$0xff]
      %v1491 = vld [vmem:[#allocation5 + $0xf00] sm:$0xff]
      %v1492 = vld [vmem:[#allocation5 + $0xf08] sm:$0xff]
      %v1493 = vld [vmem:[#allocation5 + $0xf10] sm:$0xff]
      %v1494 = vld [vmem:[#allocation5 + $0xf18] sm:$0xff]
      %v1495 = vld [vmem:[#allocation5 + $0xf20] sm:$0xff]
      %v1496 = vld [vmem:[#allocation5 + $0xf28] sm:$0xff]
      %v1497 = vld [vmem:[#allocation5 + $0xf30] sm:$0xff]
      %v1498 = vld [vmem:[#allocation5 + $0xf38] sm:$0xff]
      %v1499 = vld [vmem:[#allocation5 + $0xf40] sm:$0xff]
      %v1500 = vld [vmem:[#allocation5 + $0xf48] sm:$0xff]
      %v1501 = vld [vmem:[#allocation5 + $0xf50] sm:$0xff]
      %v1502 = vld [vmem:[#allocation5 + $0xf58] sm:$0xff]
      %v1503 = vld [vmem:[#allocation5 + $0xf60] sm:$0xff]
      %v1504 = vld [vmem:[#allocation5 + $0xf68] sm:$0xff]
      %v1505 = vld [vmem:[#allocation5 + $0xf70] sm:$0xff]
      %v1506 = vld [vmem:[#allocation5 + $0xf78] sm:$0xff]
      %v1507 = vld [vmem:[#allocation5 + $0xf80] sm:$0xff]
      %v1508 = vld [vmem:[#allocation5 + $0xf88] sm:$0xff]
      %v1509 = vld [vmem:[#allocation5 + $0xf90] sm:$0xff]
      %v1510 = vld [vmem:[#allocation5 + $0xf98] sm:$0xff]
      %v1511 = vld [vmem:[#allocation5 + $0xfa0] sm:$0xff]
      %v1512 = vld [vmem:[#allocation5 + $0xfa8] sm:$0xff]
      %v1513 = vld [vmem:[#allocation5 + $0xfb0] sm:$0xff]
      %v1514 = vld [vmem:[#allocation5 + $0xfb8] sm:$0xff]
      %v1515 = vld [vmem:[#allocation5 + $0xfc0] sm:$0xff]
      %v1516 = vld [vmem:[#allocation5 + $0xfc8] sm:$0xff]
      %v1517 = vld [vmem:[#allocation5 + $0xfd0] sm:$0xff]
      %v1518 = vld [vmem:[#allocation5 + $0xfd8] sm:$0xff]
      %v1519 = vld [vmem:[#allocation5 + $0xfe0] sm:$0xff]
      %v1520 = vld [vmem:[#allocation5 + $0xfe8] sm:$0xff]
      %v1521 = vld [vmem:[#allocation5 + $0xff0] sm:$0xff]
      %v1522 = vld [vmem:[#allocation5 + $0xff8] sm:$0xff]
      %v1523 = vld [vmem:[#allocation5 + $0x1000] sm:$0xff]
      %v1524 = vld [vmem:[#allocation5 + $0x1008] sm:$0xff]
      %v1525 = vld [vmem:[#allocation5 + $0x1010] sm:$0xff]
      %v1526 = vld [vmem:[#allocation5 + $0x1018] sm:$0xff]
      %v1527 = vld [vmem:[#allocation5 + $0x1020] sm:$0xff]
      %v1528 = vld [vmem:[#allocation5 + $0x1028] sm:$0xff]
      %v1529 = vld [vmem:[#allocation5 + $0x1030] sm:$0xff]
      %v1530 = vld [vmem:[#allocation5 + $0x1038] sm:$0xff]
      %v1531 = vld [vmem:[#allocation5 + $0x1040] sm:$0xff]
      %v1532 = vld [vmem:[#allocation5 + $0x1048] sm:$0xff]
      %v1533 = vld [vmem:[#allocation5 + $0x1050] sm:$0xff]
      %v1534 = vld [vmem:[#allocation5 + $0x1058] sm:$0xff]
      %v1535 = vld [vmem:[#allocation5 + $0x1060] sm:$0xff]
      %v1536 = vld [vmem:[#allocation5 + $0x1068] sm:$0xff]
      %v1537 = vld [vmem:[#allocation5 + $0x1070] sm:$0xff]
      %v1538 = vld [vmem:[#allocation5 + $0x1078] sm:$0xff]
      %v1539 = vld [vmem:[#allocation5 + $0x1080] sm:$0xff]
      %v1540 = vld [vmem:[#allocation5 + $0x1088] sm:$0xff]
      %v1541 = vld [vmem:[#allocation5 + $0x1090] sm:$0xff]
      %v1542 = vld [vmem:[#allocation5 + $0x1098] sm:$0xff]
      %v1543 = vld [vmem:[#allocation5 + $0x10a0] sm:$0xff]
      %v1544 = vld [vmem:[#allocation5 + $0x10a8] sm:$0xff]
      %v1545 = vld [vmem:[#allocation5 + $0x10b0] sm:$0xff]
      %v1546 = vld [vmem:[#allocation5 + $0x10b8] sm:$0xff]
      %v1547 = vld [vmem:[#allocation5 + $0x10c0] sm:$0xff]
      %v1548 = vld [vmem:[#allocation5 + $0x10c8] sm:$0xff]
      %v1549 = vld [vmem:[#allocation5 + $0x10d0] sm:$0xff]
      %v1550 = vld [vmem:[#allocation5 + $0x10d8] sm:$0xff]
      %v1551 = vld [vmem:[#allocation5 + $0x10e0] sm:$0xff]
      %v1552 = vld [vmem:[#allocation5 + $0x10e8] sm:$0xff]
      %v1553 = vld [vmem:[#allocation5 + $0x10f0] sm:$0xff]
      %v1554 = vld [vmem:[#allocation5 + $0x10f8] sm:$0xff]
      %v1555 = vld [vmem:[#allocation5 + $0x1100] sm:$0xff]
      %v1556 = vld [vmem:[#allocation5 + $0x1108] sm:$0xff]
      %v1557 = vld [vmem:[#allocation5 + $0x1110] sm:$0xff]
      %v1558 = vld [vmem:[#allocation5 + $0x1118] sm:$0xff]
      %v1559 = vld [vmem:[#allocation5 + $0x1120] sm:$0xff]
      %v1560 = vld [vmem:[#allocation5 + $0x1128] sm:$0xff]
      %v1561 = vld [vmem:[#allocation5 + $0x1130] sm:$0xff]
      %v1562 = vld [vmem:[#allocation5 + $0x1138] sm:$0xff]
      %v1563 = vld [vmem:[#allocation5 + $0x1140] sm:$0xff]
      %v1564 = vld [vmem:[#allocation5 + $0x1148] sm:$0xff]
      %v1565 = vld [vmem:[#allocation5 + $0x1150] sm:$0xff]
      %v1566 = vld [vmem:[#allocation5 + $0x1158] sm:$0xff]
      %v1567 = vld [vmem:[#allocation5 + $0x1160] sm:$0xff]
      %v1568 = vld [vmem:[#allocation5 + $0x1168] sm:$0xff]
      %v1569 = vld [vmem:[#allocation5 + $0x1170] sm:$0xff]
      %v1570 = vld [vmem:[#allocation5 + $0x1178] sm:$0xff]
      %v1571 = vld [vmem:[#allocation5 + $0x1180] sm:$0xff]
      %v1572 = vld [vmem:[#allocation5 + $0x1188] sm:$0xff]
      %v1573 = vld [vmem:[#allocation5 + $0x1190] sm:$0xff]
      %v1574 = vld [vmem:[#allocation5 + $0x1198] sm:$0xff]
      %v1575 = vld [vmem:[#allocation5 + $0x11a0] sm:$0xff]
      %v1576 = vld [vmem:[#allocation5 + $0x11a8] sm:$0xff]
      %v1577 = vld [vmem:[#allocation5 + $0x11b0] sm:$0xff]
      %v1578 = vld [vmem:[#allocation5 + $0x11b8] sm:$0xff]
      %v1579 = vld [vmem:[#allocation5 + $0x11c0] sm:$0xff]
      %v1580 = vld [vmem:[#allocation5 + $0x11c8] sm:$0xff]
      %v1581 = vld [vmem:[#allocation5 + $0x11d0] sm:$0xff]
      %v1582 = vld [vmem:[#allocation5 + $0x11d8] sm:$0xff]
      %v1583 = vld [vmem:[#allocation5 + $0x11e0] sm:$0xff]
      %v1584 = vld [vmem:[#allocation5 + $0x11e8] sm:$0xff]
      %v1585 = vld [vmem:[#allocation5 + $0x11f0] sm:$0xff]
      %v1586 = vld [vmem:[#allocation5 + $0x11f8] sm:$0xff]
      %v1587 = vld [vmem:[#allocation5 + $0x1200] sm:$0xff]
      %v1588 = vld [vmem:[#allocation5 + $0x1208] sm:$0xff]
      %v1589 = vld [vmem:[#allocation5 + $0x1210] sm:$0xff]
      %v1590 = vld [vmem:[#allocation5 + $0x1218] sm:$0xff]
      %v1591 = vld [vmem:[#allocation5 + $0x1220] sm:$0xff]
      %v1592 = vld [vmem:[#allocation5 + $0x1228] sm:$0xff]
      %v1593 = vld [vmem:[#allocation5 + $0x1230] sm:$0xff]
      %v1594 = vld [vmem:[#allocation5 + $0x1238] sm:$0xff]
      %v1595 = vld [vmem:[#allocation5 + $0x1240] sm:$0xff]
      %v1596 = vld [vmem:[#allocation5 + $0x1248] sm:$0xff]
      %v1597 = vld [vmem:[#allocation5 + $0x1250] sm:$0xff]
      %v1598 = vld [vmem:[#allocation5 + $0x1258] sm:$0xff]
      %v1599 = vld [vmem:[#allocation5 + $0x1260] sm:$0xff]
      %v1600 = vld [vmem:[#allocation5 + $0x1268] sm:$0xff]
      %v1601 = vld [vmem:[#allocation5 + $0x1270] sm:$0xff]
      %v1602 = vld [vmem:[#allocation5 + $0x1278] sm:$0xff]
      %v1603 = vld [vmem:[#allocation5 + $0x1280] sm:$0xff]
      %v1604 = vld [vmem:[#allocation5 + $0x1288] sm:$0xff]
      %v1605 = vld [vmem:[#allocation5 + $0x1290] sm:$0xff]
      %v1606 = vld [vmem:[#allocation5 + $0x1298] sm:$0xff]
      %v1607 = vld [vmem:[#allocation5 + $0x12a0] sm:$0xff]
      %v1608 = vld [vmem:[#allocation5 + $0x12a8] sm:$0xff]
      %v1609 = vld [vmem:[#allocation5 + $0x12b0] sm:$0xff]
      %v1610 = vld [vmem:[#allocation5 + $0x12b8] sm:$0xff]
      %v1611 = vld [vmem:[#allocation5 + $0x12c0] sm:$0xff]
      %v1612 = vld [vmem:[#allocation5 + $0x12c8] sm:$0xff]
      %v1613 = vld [vmem:[#allocation5 + $0x12d0] sm:$0xff]
      %v1614 = vld [vmem:[#allocation5 + $0x12d8] sm:$0xff]
      %v1615 = vld [vmem:[#allocation5 + $0x12e0] sm:$0xff]
      %v1616 = vld [vmem:[#allocation5 + $0x12e8] sm:$0xff]
      %v1617 = vld [vmem:[#allocation5 + $0x12f0] sm:$0xff]
      %v1618 = vld [vmem:[#allocation5 + $0x12f8] sm:$0xff]
      %v1619 = vld [vmem:[#allocation5 + $0x1300] sm:$0xff]
      %v1620 = vld [vmem:[#allocation5 + $0x1308] sm:$0xff]
      %v1621 = vld [vmem:[#allocation5 + $0x1310] sm:$0xff]
      %v1622 = vld [vmem:[#allocation5 + $0x1318] sm:$0xff]
      %v1623 = vld [vmem:[#allocation5 + $0x1320] sm:$0xff]
      %v1624 = vld [vmem:[#allocation5 + $0x1328] sm:$0xff]
      %v1625 = vld [vmem:[#allocation5 + $0x1330] sm:$0xff]
      %v1626 = vld [vmem:[#allocation5 + $0x1338] sm:$0xff]
      %v1627 = vld [vmem:[#allocation5 + $0x1340] sm:$0xff]
      %v1628 = vld [vmem:[#allocation5 + $0x1348] sm:$0xff]
      %v1629 = vld [vmem:[#allocation5 + $0x1350] sm:$0xff]
      %v1630 = vld [vmem:[#allocation5 + $0x1358] sm:$0xff]
      %v1631 = vld [vmem:[#allocation5 + $0x1360] sm:$0xff]
      %v1632 = vld [vmem:[#allocation5 + $0x1368] sm:$0xff]
      %v1633 = vld [vmem:[#allocation5 + $0x1370] sm:$0xff]
      %v1634 = vld [vmem:[#allocation5 + $0x1378] sm:$0xff]
      %v1635 = vld [vmem:[#allocation5 + $0x1380] sm:$0xff]
      %v1636 = vld [vmem:[#allocation5 + $0x1388] sm:$0xff]
      %v1637 = vld [vmem:[#allocation5 + $0x1390] sm:$0xff]
      %v1638 = vld [vmem:[#allocation5 + $0x1398] sm:$0xff]
      %v1639 = vld [vmem:[#allocation5 + $0x13a0] sm:$0xff]
      %v1640 = vld [vmem:[#allocation5 + $0x13a8] sm:$0xff]
      %v1641 = vld [vmem:[#allocation5 + $0x13b0] sm:$0xff]
      %v1642 = vld [vmem:[#allocation5 + $0x13b8] sm:$0xff]
      %v1643 = vld [vmem:[#allocation5 + $0x13c0] sm:$0xff]
      %v1644 = vld [vmem:[#allocation5 + $0x13c8] sm:$0xff]
      %v1645 = vld [vmem:[#allocation5 + $0x13d0] sm:$0xff]
      %v1646 = vld [vmem:[#allocation5 + $0x13d8] sm:$0xff]
      %v1647 = vld [vmem:[#allocation5 + $0x13e0] sm:$0xff]
      %v1648 = vld [vmem:[#allocation5 + $0x13e8] sm:$0xff]
      %v1649 = vld [vmem:[#allocation5 + $0x13f0] sm:$0xff]
      %v1650 = vld [vmem:[#allocation5 + $0x13f8] sm:$0xff]
      %v1651 = vld [vmem:[#allocation5 + $0x1400] sm:$0xff]
      %v1652 = vld [vmem:[#allocation5 + $0x1408] sm:$0xff]
      %v1653 = vld [vmem:[#allocation5 + $0x1410] sm:$0xff]
      %v1654 = vld [vmem:[#allocation5 + $0x1418] sm:$0xff]
      %v1655 = vld [vmem:[#allocation5 + $0x1420] sm:$0xff]
      %v1656 = vld [vmem:[#allocation5 + $0x1428] sm:$0xff]
      %v1657 = vld [vmem:[#allocation5 + $0x1430] sm:$0xff]
      %v1658 = vld [vmem:[#allocation5 + $0x1438] sm:$0xff]
      %v1659 = vld [vmem:[#allocation5 + $0x1440] sm:$0xff]
      %v1660 = vld [vmem:[#allocation5 + $0x1448] sm:$0xff]
      %v1661 = vld [vmem:[#allocation5 + $0x1450] sm:$0xff]
      %v1662 = vld [vmem:[#allocation5 + $0x1458] sm:$0xff]
      %v1663 = vld [vmem:[#allocation5 + $0x1460] sm:$0xff]
      %v1664 = vld [vmem:[#allocation5 + $0x1468] sm:$0xff]
      %v1665 = vld [vmem:[#allocation5 + $0x1470] sm:$0xff]
      %v1666 = vld [vmem:[#allocation5 + $0x1478] sm:$0xff]
      %v1667 = vld [vmem:[#allocation5 + $0x1480] sm:$0xff]
      %v1668 = vld [vmem:[#allocation5 + $0x1488] sm:$0xff]
      %v1669 = vld [vmem:[#allocation5 + $0x1490] sm:$0xff]
      %v1670 = vld [vmem:[#allocation5 + $0x1498] sm:$0xff]
      %v1671 = vld [vmem:[#allocation5 + $0x14a0] sm:$0xff]
      %v1672 = vld [vmem:[#allocation5 + $0x14a8] sm:$0xff]
      %v1673 = vld [vmem:[#allocation5 + $0x14b0] sm:$0xff]
      %v1674 = vld [vmem:[#allocation5 + $0x14b8] sm:$0xff]
      %v1675 = vld [vmem:[#allocation5 + $0x14c0] sm:$0xff]
      %v1676 = vld [vmem:[#allocation5 + $0x14c8] sm:$0xff]
      %v1677 = vld [vmem:[#allocation5 + $0x14d0] sm:$0xff]
      %v1678 = vld [vmem:[#allocation5 + $0x14d8] sm:$0xff]
      %v1679 = vld [vmem:[#allocation5 + $0x14e0] sm:$0xff]
      %v1680 = vld [vmem:[#allocation5 + $0x14e8] sm:$0xff]
      %v1681 = vld [vmem:[#allocation5 + $0x14f0] sm:$0xff]
      %v1682 = vld [vmem:[#allocation5 + $0x14f8] sm:$0xff]
      %v1683 = vld [vmem:[#allocation5 + $0x1500] sm:$0xff]
      %v1684 = vld [vmem:[#allocation5 + $0x1508] sm:$0xff]
      %v1685 = vld [vmem:[#allocation5 + $0x1510] sm:$0xff]
      %v1686 = vld [vmem:[#allocation5 + $0x1518] sm:$0xff]
      %v1687 = vld [vmem:[#allocation5 + $0x1520] sm:$0xff]
      %v1688 = vld [vmem:[#allocation5 + $0x1528] sm:$0xff]
      %v1689 = vld [vmem:[#allocation5 + $0x1530] sm:$0xff]
      %v1690 = vld [vmem:[#allocation5 + $0x1538] sm:$0xff]
      %v1691 = vld [vmem:[#allocation5 + $0x1540] sm:$0xff]
      %v1692 = vld [vmem:[#allocation5 + $0x1548] sm:$0xff]
      %v1693 = vld [vmem:[#allocation5 + $0x1550] sm:$0xff]
      %v1694 = vld [vmem:[#allocation5 + $0x1558] sm:$0xff]
      %v1695 = vld [vmem:[#allocation5 + $0x1560] sm:$0xff]
      %v1696 = vld [vmem:[#allocation5 + $0x1568] sm:$0xff]
      %v1697 = vld [vmem:[#allocation5 + $0x1570] sm:$0xff]
      %v1698 = vld [vmem:[#allocation5 + $0x1578] sm:$0xff]
      %v1699 = vld [vmem:[#allocation5 + $0x1580] sm:$0xff]
      %v1700 = vld [vmem:[#allocation5 + $0x1588] sm:$0xff]
      %v1701 = vld [vmem:[#allocation5 + $0x1590] sm:$0xff]
      %v1702 = vld [vmem:[#allocation5 + $0x1598] sm:$0xff]
      %v1703 = vld [vmem:[#allocation5 + $0x15a0] sm:$0xff]
      %v1704 = vld [vmem:[#allocation5 + $0x15a8] sm:$0xff]
      %v1705 = vld [vmem:[#allocation5 + $0x15b0] sm:$0xff]
      %v1706 = vld [vmem:[#allocation5 + $0x15b8] sm:$0xff]
      %v1707 = vld [vmem:[#allocation5 + $0x15c0] sm:$0xff]
      %v1708 = vld [vmem:[#allocation5 + $0x15c8] sm:$0xff]
      %v1709 = vld [vmem:[#allocation5 + $0x15d0] sm:$0xff]
      %v1710 = vld [vmem:[#allocation5 + $0x15d8] sm:$0xff]
      %v1711 = vld [vmem:[#allocation5 + $0x15e0] sm:$0xff]
      %v1712 = vld [vmem:[#allocation5 + $0x15e8] sm:$0xff]
      %v1713 = vld [vmem:[#allocation5 + $0x15f0] sm:$0xff]
      %v1714 = vld [vmem:[#allocation5 + $0x15f8] sm:$0xff]
      %v1715 = vld [vmem:[#allocation5 + $0x1600] sm:$0xff]
      %v1716 = vld [vmem:[#allocation5 + $0x1608] sm:$0xff]
      %v1717 = vld [vmem:[#allocation5 + $0x1610] sm:$0xff]
      %v1718 = vld [vmem:[#allocation5 + $0x1618] sm:$0xff]
      %v1719 = vld [vmem:[#allocation5 + $0x1620] sm:$0xff]
      %v1720 = vld [vmem:[#allocation5 + $0x1628] sm:$0xff]
      %v1721 = vld [vmem:[#allocation5 + $0x1630] sm:$0xff]
      %v1722 = vld [vmem:[#allocation5 + $0x1638] sm:$0xff]
      %v1723 = vld [vmem:[#allocation5 + $0x1640] sm:$0xff]
      %v1724 = vld [vmem:[#allocation5 + $0x1648] sm:$0xff]
      %v1725 = vld [vmem:[#allocation5 + $0x1650] sm:$0xff]
      %v1726 = vld [vmem:[#allocation5 + $0x1658] sm:$0xff]
      %v1727 = vld [vmem:[#allocation5 + $0x1660] sm:$0xff]
      %v1728 = vld [vmem:[#allocation5 + $0x1668] sm:$0xff]
      %v1729 = vld [vmem:[#allocation5 + $0x1670] sm:$0xff]
      %v1730 = vld [vmem:[#allocation5 + $0x1678] sm:$0xff]
      %v1731 = vld [vmem:[#allocation5 + $0x1680] sm:$0xff]
      %v1732 = vld [vmem:[#allocation5 + $0x1688] sm:$0xff]
      %v1733 = vld [vmem:[#allocation5 + $0x1690] sm:$0xff]
      %v1734 = vld [vmem:[#allocation5 + $0x1698] sm:$0xff]
      %v1735 = vld [vmem:[#allocation5 + $0x16a0] sm:$0xff]
      %v1736 = vld [vmem:[#allocation5 + $0x16a8] sm:$0xff]
      %v1737 = vld [vmem:[#allocation5 + $0x16b0] sm:$0xff]
      %v1738 = vld [vmem:[#allocation5 + $0x16b8] sm:$0xff]
      %v1739 = vld [vmem:[#allocation5 + $0x16c0] sm:$0xff]
      %v1740 = vld [vmem:[#allocation5 + $0x16c8] sm:$0xff]
      %v1741 = vld [vmem:[#allocation5 + $0x16d0] sm:$0xff]
      %v1742 = vld [vmem:[#allocation5 + $0x16d8] sm:$0xff]
      %v1743 = vld [vmem:[#allocation5 + $0x16e0] sm:$0xff]
      %v1744 = vld [vmem:[#allocation5 + $0x16e8] sm:$0xff]
      %v1745 = vld [vmem:[#allocation5 + $0x16f0] sm:$0xff]
      %v1746 = vld [vmem:[#allocation5 + $0x16f8] sm:$0xff]
      %v1747 = vld [vmem:[#allocation5 + $0x1700] sm:$0xff]
      %v1748 = vld [vmem:[#allocation5 + $0x1708] sm:$0xff]
      %v1749 = vld [vmem:[#allocation5 + $0x1710] sm:$0xff]
      %v1750 = vld [vmem:[#allocation5 + $0x1718] sm:$0xff]
      %v1751 = vld [vmem:[#allocation5 + $0x1720] sm:$0xff]
      %v1752 = vld [vmem:[#allocation5 + $0x1728] sm:$0xff]
      %v1753 = vld [vmem:[#allocation5 + $0x1730] sm:$0xff]
      %v1754 = vld [vmem:[#allocation5 + $0x1738] sm:$0xff]
      %v1755 = vld [vmem:[#allocation5 + $0x1740] sm:$0xff]
      %v1756 = vld [vmem:[#allocation5 + $0x1748] sm:$0xff]
      %v1757 = vld [vmem:[#allocation5 + $0x1750] sm:$0xff]
      %v1758 = vld [vmem:[#allocation5 + $0x1758] sm:$0xff]
      %v1759 = vld [vmem:[#allocation5 + $0x1760] sm:$0xff]
      %v1760 = vld [vmem:[#allocation5 + $0x1768] sm:$0xff]
      %v1761 = vld [vmem:[#allocation5 + $0x1770] sm:$0xff]
      %v1762 = vld [vmem:[#allocation5 + $0x1778] sm:$0xff]
      %v1763 = vld [vmem:[#allocation5 + $0x1780] sm:$0xff]
      %v1764 = vld [vmem:[#allocation5 + $0x1788] sm:$0xff]
      %v1765 = vld [vmem:[#allocation5 + $0x1790] sm:$0xff]
      %v1766 = vld [vmem:[#allocation5 + $0x1798] sm:$0xff]
      %v1767 = vld [vmem:[#allocation5 + $0x17a0] sm:$0xff]
      %v1768 = vld [vmem:[#allocation5 + $0x17a8] sm:$0xff]
      %v1769 = vld [vmem:[#allocation5 + $0x17b0] sm:$0xff]
      %v1770 = vld [vmem:[#allocation5 + $0x17b8] sm:$0xff]
      %v1771 = vld [vmem:[#allocation5 + $0x17c0] sm:$0xff]
      %v1772 = vld [vmem:[#allocation5 + $0x17c8] sm:$0xff]
      %v1773 = vld [vmem:[#allocation5 + $0x17d0] sm:$0xff]
      %v1774 = vld [vmem:[#allocation5 + $0x17d8] sm:$0xff]
      %v1775 = vld [vmem:[#allocation5 + $0x17e0] sm:$0xff]
      %v1776 = vld [vmem:[#allocation5 + $0x17e8] sm:$0xff]
      %v1777 = vld [vmem:[#allocation5 + $0x17f0] sm:$0xff]
      %v1778 = vld [vmem:[#allocation5 + $0x17f8] sm:$0xff]
      %v1779 = vld [vmem:[#allocation5 + $0x1800] sm:$0xff]
      %v1780 = vld [vmem:[#allocation5 + $0x1808] sm:$0xff]
      %v1781 = vld [vmem:[#allocation5 + $0x1810] sm:$0xff]
      %v1782 = vld [vmem:[#allocation5 + $0x1818] sm:$0xff]
      %v1783 = vld [vmem:[#allocation5 + $0x1820] sm:$0xff]
      %v1784 = vld [vmem:[#allocation5 + $0x1828] sm:$0xff]
      %v1785 = vld [vmem:[#allocation5 + $0x1830] sm:$0xff]
      %v1786 = vld [vmem:[#allocation5 + $0x1838] sm:$0xff]
      %v1787 = vld [vmem:[#allocation5 + $0x1840] sm:$0xff]
      %v1788 = vld [vmem:[#allocation5 + $0x1848] sm:$0xff]
      %v1789 = vld [vmem:[#allocation5 + $0x1850] sm:$0xff]
      %v1790 = vld [vmem:[#allocation5 + $0x1858] sm:$0xff]
      %v1791 = vld [vmem:[#allocation5 + $0x1860] sm:$0xff]
      %v1792 = vld [vmem:[#allocation5 + $0x1868] sm:$0xff]
      %v1793 = vld [vmem:[#allocation5 + $0x1870] sm:$0xff]
      %v1794 = vld [vmem:[#allocation5 + $0x1878] sm:$0xff]
      %v1795 = vld [vmem:[#allocation5 + $0x1880] sm:$0xff]
      %v1796 = vld [vmem:[#allocation5 + $0x1888] sm:$0xff]
      %v1797 = vld [vmem:[#allocation5 + $0x1890] sm:$0xff]
      %v1798 = vld [vmem:[#allocation5 + $0x1898] sm:$0xff]
      %v1799 = vld [vmem:[#allocation5 + $0x18a0] sm:$0xff]
      %v1800 = vld [vmem:[#allocation5 + $0x18a8] sm:$0xff]
      %v1801 = vld [vmem:[#allocation5 + $0x18b0] sm:$0xff]
      %v1802 = vld [vmem:[#allocation5 + $0x18b8] sm:$0xff]
      %v1803 = vld [vmem:[#allocation5 + $0x18c0] sm:$0xff]
      %v1804 = vld [vmem:[#allocation5 + $0x18c8] sm:$0xff]
      %v1805 = vld [vmem:[#allocation5 + $0x18d0] sm:$0xff]
      %v1806 = vld [vmem:[#allocation5 + $0x18d8] sm:$0xff]
      %v1807 = vld [vmem:[#allocation5 + $0x18e0] sm:$0xff]
      %v1808 = vld [vmem:[#allocation5 + $0x18e8] sm:$0xff]
      %v1809 = vld [vmem:[#allocation5 + $0x18f0] sm:$0xff]
      %v1810 = vld [vmem:[#allocation5 + $0x18f8] sm:$0xff]
      %v1811 = vld [vmem:[#allocation5 + $0x1900] sm:$0xff]
      %v1812 = vld [vmem:[#allocation5 + $0x1908] sm:$0xff]
      %v1813 = vld [vmem:[#allocation5 + $0x1910] sm:$0xff]
      %v1814 = vld [vmem:[#allocation5 + $0x1918] sm:$0xff]
      %v1815 = vld [vmem:[#allocation5 + $0x1920] sm:$0xff]
      %v1816 = vld [vmem:[#allocation5 + $0x1928] sm:$0xff]
      %v1817 = vld [vmem:[#allocation5 + $0x1930] sm:$0xff]
      %v1818 = vld [vmem:[#allocation5 + $0x1938] sm:$0xff]
      %v1819 = vld [vmem:[#allocation5 + $0x1940] sm:$0xff]
      %v1820 = vld [vmem:[#allocation5 + $0x1948] sm:$0xff]
      %v1821 = vld [vmem:[#allocation5 + $0x1950] sm:$0xff]
      %v1822 = vld [vmem:[#allocation5 + $0x1958] sm:$0xff]
      %v1823 = vld [vmem:[#allocation5 + $0x1960] sm:$0xff]
      %v1824 = vld [vmem:[#allocation5 + $0x1968] sm:$0xff]
      %v1825 = vld [vmem:[#allocation5 + $0x1970] sm:$0xff]
      %v1826 = vld [vmem:[#allocation5 + $0x1978] sm:$0xff]
      %v1827 = vld [vmem:[#allocation5 + $0x1980] sm:$0xff]
      %v1828 = vld [vmem:[#allocation5 + $0x1988] sm:$0xff]
      %v1829 = vld [vmem:[#allocation5 + $0x1990] sm:$0xff]
      %v1830 = vld [vmem:[#allocation5 + $0x1998] sm:$0xff]
      %v1831 = vld [vmem:[#allocation5 + $0x19a0] sm:$0xff]
      %v1832 = vld [vmem:[#allocation5 + $0x19a8] sm:$0xff]
      %v1833 = vld [vmem:[#allocation5 + $0x19b0] sm:$0xff]
      %v1834 = vld [vmem:[#allocation5 + $0x19b8] sm:$0xff]
      %v1835 = vld [vmem:[#allocation5 + $0x19c0] sm:$0xff]
      %v1836 = vld [vmem:[#allocation5 + $0x19c8] sm:$0xff]
      %v1837 = vld [vmem:[#allocation5 + $0x19d0] sm:$0xff]
      %v1838 = vld [vmem:[#allocation5 + $0x19d8] sm:$0xff]
      %v1839 = vld [vmem:[#allocation5 + $0x19e0] sm:$0xff]
      %v1840 = vld [vmem:[#allocation5 + $0x19e8] sm:$0xff]
      %v1841 = vld [vmem:[#allocation5 + $0x19f0] sm:$0xff]
      %v1842 = vld [vmem:[#allocation5 + $0x19f8] sm:$0xff]
      %v1843 = vld [vmem:[#allocation5 + $0x1a00] sm:$0xff]
      %v1844 = vld [vmem:[#allocation5 + $0x1a08] sm:$0xff]
      %v1845 = vld [vmem:[#allocation5 + $0x1a10] sm:$0xff]
      %v1846 = vld [vmem:[#allocation5 + $0x1a18] sm:$0xff]
      %v1847 = vld [vmem:[#allocation5 + $0x1a20] sm:$0xff]
      %v1848 = vld [vmem:[#allocation5 + $0x1a28] sm:$0xff]
      %v1849 = vld [vmem:[#allocation5 + $0x1a30] sm:$0xff]
      %v1850 = vld [vmem:[#allocation5 + $0x1a38] sm:$0xff]
      %v1851 = vld [vmem:[#allocation5 + $0x1a40] sm:$0xff]
      %v1852 = vld [vmem:[#allocation5 + $0x1a48] sm:$0xff]
      %v1853 = vld [vmem:[#allocation5 + $0x1a50] sm:$0xff]
      %v1854 = vld [vmem:[#allocation5 + $0x1a58] sm:$0xff]
      %v1855 = vld [vmem:[#allocation5 + $0x1a60] sm:$0xff]
      %v1856 = vld [vmem:[#allocation5 + $0x1a68] sm:$0xff]
      %v1857 = vld [vmem:[#allocation5 + $0x1a70] sm:$0xff]
      %v1858 = vld [vmem:[#allocation5 + $0x1a78] sm:$0xff]
      %v1859 = vld [vmem:[#allocation5 + $0x1a80] sm:$0xff]
      %v1860 = vld [vmem:[#allocation5 + $0x1a88] sm:$0xff]
      %v1861 = vld [vmem:[#allocation5 + $0x1a90] sm:$0xff]
      %v1862 = vld [vmem:[#allocation5 + $0x1a98] sm:$0xff]
      %v1863 = vld [vmem:[#allocation5 + $0x1aa0] sm:$0xff]
      %v1864 = vld [vmem:[#allocation5 + $0x1aa8] sm:$0xff]
      %v1865 = vld [vmem:[#allocation5 + $0x1ab0] sm:$0xff]
      %v1866 = vld [vmem:[#allocation5 + $0x1ab8] sm:$0xff]
      %v1867 = vld [vmem:[#allocation5 + $0x1ac0] sm:$0xff]
      %v1868 = vld [vmem:[#allocation5 + $0x1ac8] sm:$0xff]
      %v1869 = vld [vmem:[#allocation5 + $0x1ad0] sm:$0xff]
      %v1870 = vld [vmem:[#allocation5 + $0x1ad8] sm:$0xff]
      %v1871 = vld [vmem:[#allocation5 + $0x1ae0] sm:$0xff]
      %v1872 = vld [vmem:[#allocation5 + $0x1ae8] sm:$0xff]
      %v1873 = vld [vmem:[#allocation5 + $0x1af0] sm:$0xff]
      %v1874 = vld [vmem:[#allocation5 + $0x1af8] sm:$0xff]
      %v1875 = vld [vmem:[#allocation5 + $0x1b00] sm:$0xff]
      %v1876 = vld [vmem:[#allocation5 + $0x1b08] sm:$0xff]
      %v1877 = vld [vmem:[#allocation5 + $0x1b10] sm:$0xff]
      %v1878 = vld [vmem:[#allocation5 + $0x1b18] sm:$0xff]
      %v1879 = vld [vmem:[#allocation5 + $0x1b20] sm:$0xff]
      %v1880 = vld [vmem:[#allocation5 + $0x1b28] sm:$0xff]
      %v1881 = vld [vmem:[#allocation5 + $0x1b30] sm:$0xff]
      %v1882 = vld [vmem:[#allocation5 + $0x1b38] sm:$0xff]
      %v1883 = vld [vmem:[#allocation5 + $0x1b40] sm:$0xff]
      %v1884 = vld [vmem:[#allocation5 + $0x1b48] sm:$0xff]
      %v1885 = vld [vmem:[#allocation5 + $0x1b50] sm:$0xff]
      %v1886 = vld [vmem:[#allocation5 + $0x1b58] sm:$0xff]
      %v1887 = vld [vmem:[#allocation5 + $0x1b60] sm:$0xff]
      %v1888 = vld [vmem:[#allocation5 + $0x1b68] sm:$0xff]
      %v1889 = vld [vmem:[#allocation5 + $0x1b70] sm:$0xff]
      %v1890 = vld [vmem:[#allocation5 + $0x1b78] sm:$0xff]
      %v1891 = vld [vmem:[#allocation5 + $0x1b80] sm:$0xff]
      %v1892 = vld [vmem:[#allocation5 + $0x1b88] sm:$0xff]
      %v1893 = vld [vmem:[#allocation5 + $0x1b90] sm:$0xff]
      %v1894 = vld [vmem:[#allocation5 + $0x1b98] sm:$0xff]
      %v1895 = vld [vmem:[#allocation5 + $0x1ba0] sm:$0xff]
      %v1896 = vld [vmem:[#allocation5 + $0x1ba8] sm:$0xff]
      %v1897 = vld [vmem:[#allocation5 + $0x1bb0] sm:$0xff]
      %v1898 = vld [vmem:[#allocation5 + $0x1bb8] sm:$0xff]
      %v1899 = vld [vmem:[#allocation5 + $0x1bc0] sm:$0xff]
      %v1900 = vld [vmem:[#allocation5 + $0x1bc8] sm:$0xff]
      %v1901 = vld [vmem:[#allocation5 + $0x1bd0] sm:$0xff]
      %v1902 = vld [vmem:[#allocation5 + $0x1bd8] sm:$0xff]
      %v1903 = vld [vmem:[#allocation5 + $0x1be0] sm:$0xff]
      %v1904 = vld [vmem:[#allocation5 + $0x1be8] sm:$0xff]
      %v1905 = vld [vmem:[#allocation5 + $0x1bf0] sm:$0xff]
      %v1906 = vld [vmem:[#allocation5 + $0x1bf8] sm:$0xff]
      %v1907 = vld [vmem:[#allocation5 + $0x1c00] sm:$0xff]
      %v1908 = vld [vmem:[#allocation5 + $0x1c08] sm:$0xff]
      %v1909 = vld [vmem:[#allocation5 + $0x1c10] sm:$0xff]
      %v1910 = vld [vmem:[#allocation5 + $0x1c18] sm:$0xff]
      %v1911 = vld [vmem:[#allocation5 + $0x1c20] sm:$0xff]
      %v1912 = vld [vmem:[#allocation5 + $0x1c28] sm:$0xff]
      %v1913 = vld [vmem:[#allocation5 + $0x1c30] sm:$0xff]
      %v1914 = vld [vmem:[#allocation5 + $0x1c38] sm:$0xff]
      %v1915 = vld [vmem:[#allocation5 + $0x1c40] sm:$0xff]
      %v1916 = vld [vmem:[#allocation5 + $0x1c48] sm:$0xff]
      %v1917 = vld [vmem:[#allocation5 + $0x1c50] sm:$0xff]
      %v1918 = vld [vmem:[#allocation5 + $0x1c58] sm:$0xff]
      %v1919 = vld [vmem:[#allocation5 + $0x1c60] sm:$0xff]
      %v1920 = vld [vmem:[#allocation5 + $0x1c68] sm:$0xff]
      %v1921 = vld [vmem:[#allocation5 + $0x1c70] sm:$0xff]
      %v1922 = vld [vmem:[#allocation5 + $0x1c78] sm:$0xff]
      %v1923 = vld [vmem:[#allocation5 + $0x1c80] sm:$0xff]
      %v1924 = vld [vmem:[#allocation5 + $0x1c88] sm:$0xff]
      %v1925 = vld [vmem:[#allocation5 + $0x1c90] sm:$0xff]
      %v1926 = vld [vmem:[#allocation5 + $0x1c98] sm:$0xff]
      %v1927 = vld [vmem:[#allocation5 + $0x1ca0] sm:$0xff]
      %v1928 = vld [vmem:[#allocation5 + $0x1ca8] sm:$0xff]
      %v1929 = vld [vmem:[#allocation5 + $0x1cb0] sm:$0xff]
      %v1930 = vld [vmem:[#allocation5 + $0x1cb8] sm:$0xff]
      %v1931 = vld [vmem:[#allocation5 + $0x1cc0] sm:$0xff]
      %v1932 = vld [vmem:[#allocation5 + $0x1cc8] sm:$0xff]
      %v1933 = vld [vmem:[#allocation5 + $0x1cd0] sm:$0xff]
      %v1934 = vld [vmem:[#allocation5 + $0x1cd8] sm:$0xff]
      %v1935 = vld [vmem:[#allocation5 + $0x1ce0] sm:$0xff]
      %v1936 = vld [vmem:[#allocation5 + $0x1ce8] sm:$0xff]
      %v1937 = vld [vmem:[#allocation5 + $0x1cf0] sm:$0xff]
      %v1938 = vld [vmem:[#allocation5 + $0x1cf8] sm:$0xff]
      %v1939 = vld [vmem:[#allocation5 + $0x1d00] sm:$0xff]
      %v1940 = vld [vmem:[#allocation5 + $0x1d08] sm:$0xff]
      %v1941 = vld [vmem:[#allocation5 + $0x1d10] sm:$0xff]
      %v1942 = vld [vmem:[#allocation5 + $0x1d18] sm:$0xff]
      %v1943 = vld [vmem:[#allocation5 + $0x1d20] sm:$0xff]
      %v1944 = vld [vmem:[#allocation5 + $0x1d28] sm:$0xff]
      %v1945 = vld [vmem:[#allocation5 + $0x1d30] sm:$0xff]
      %v1946 = vld [vmem:[#allocation5 + $0x1d38] sm:$0xff]
      %v1947 = vld [vmem:[#allocation5 + $0x1d40] sm:$0xff]
      %v1948 = vld [vmem:[#allocation5 + $0x1d48] sm:$0xff]
      %v1949 = vld [vmem:[#allocation5 + $0x1d50] sm:$0xff]
      %v1950 = vld [vmem:[#allocation5 + $0x1d58] sm:$0xff]
      %v1951 = vld [vmem:[#allocation5 + $0x1d60] sm:$0xff]
      %v1952 = vld [vmem:[#allocation5 + $0x1d68] sm:$0xff]
      %v1953 = vld [vmem:[#allocation5 + $0x1d70] sm:$0xff]
      %v1954 = vld [vmem:[#allocation5 + $0x1d78] sm:$0xff]
      %v1955 = vld [vmem:[#allocation5 + $0x1d80] sm:$0xff]
      %v1956 = vld [vmem:[#allocation5 + $0x1d88] sm:$0xff]
      %v1957 = vld [vmem:[#allocation5 + $0x1d90] sm:$0xff]
      %v1958 = vld [vmem:[#allocation5 + $0x1d98] sm:$0xff]
      %v1959 = vld [vmem:[#allocation5 + $0x1da0] sm:$0xff]
      %v1960 = vld [vmem:[#allocation5 + $0x1da8] sm:$0xff]
      %v1961 = vld [vmem:[#allocation5 + $0x1db0] sm:$0xff]
      %v1962 = vld [vmem:[#allocation5 + $0x1db8] sm:$0xff]
      %v1963 = vld [vmem:[#allocation5 + $0x1dc0] sm:$0xff]
      %v1964 = vld [vmem:[#allocation5 + $0x1dc8] sm:$0xff]
      %v1965 = vld [vmem:[#allocation5 + $0x1dd0] sm:$0xff]
      %v1966 = vld [vmem:[#allocation5 + $0x1dd8] sm:$0xff]
      %v1967 = vld [vmem:[#allocation5 + $0x1de0] sm:$0xff]
      %v1968 = vld [vmem:[#allocation5 + $0x1de8] sm:$0xff]
      %v1969 = vld [vmem:[#allocation5 + $0x1df0] sm:$0xff]
      %v1970 = vld [vmem:[#allocation5 + $0x1df8] sm:$0xff]
      %v1971 = vld [vmem:[#allocation5 + $0x1e00] sm:$0xff]
      %v1972 = vld [vmem:[#allocation5 + $0x1e08] sm:$0xff]
      %v1973 = vld [vmem:[#allocation5 + $0x1e10] sm:$0xff]
      %v1974 = vld [vmem:[#allocation5 + $0x1e18] sm:$0xff]
      %v1975 = vld [vmem:[#allocation5 + $0x1e20] sm:$0xff]
      %v1976 = vld [vmem:[#allocation5 + $0x1e28] sm:$0xff]
      %v1977 = vld [vmem:[#allocation5 + $0x1e30] sm:$0xff]
      %v1978 = vld [vmem:[#allocation5 + $0x1e38] sm:$0xff]
      %v1979 = vld [vmem:[#allocation5 + $0x1e40] sm:$0xff]
      %v1980 = vld [vmem:[#allocation5 + $0x1e48] sm:$0xff]
      %v1981 = vld [vmem:[#allocation5 + $0x1e50] sm:$0xff]
      %v1982 = vld [vmem:[#allocation5 + $0x1e58] sm:$0xff]
      %v1983 = vld [vmem:[#allocation5 + $0x1e60] sm:$0xff]
      %v1984 = vld [vmem:[#allocation5 + $0x1e68] sm:$0xff]
      %v1985 = vld [vmem:[#allocation5 + $0x1e70] sm:$0xff]
      %v1986 = vld [vmem:[#allocation5 + $0x1e78] sm:$0xff]
      %v1987 = vld [vmem:[#allocation5 + $0x1e80] sm:$0xff]
      %v1988 = vld [vmem:[#allocation5 + $0x1e88] sm:$0xff]
      %v1989 = vld [vmem:[#allocation5 + $0x1e90] sm:$0xff]
      %v1990 = vld [vmem:[#allocation5 + $0x1e98] sm:$0xff]
      %v1991 = vld [vmem:[#allocation5 + $0x1ea0] sm:$0xff]
      %v1992 = vld [vmem:[#allocation5 + $0x1ea8] sm:$0xff]
      %v1993 = vld [vmem:[#allocation5 + $0x1eb0] sm:$0xff]
      %v1994 = vld [vmem:[#allocation5 + $0x1eb8] sm:$0xff]
      %v1995 = vld [vmem:[#allocation5 + $0x1ec0] sm:$0xff]
      %v1996 = vld [vmem:[#allocation5 + $0x1ec8] sm:$0xff]
      %v1997 = vld [vmem:[#allocation5 + $0x1ed0] sm:$0xff]
      %v1998 = vld [vmem:[#allocation5 + $0x1ed8] sm:$0xff]
      %v1999 = vld [vmem:[#allocation5 + $0x1ee0] sm:$0xff]
      %v2000 = vld [vmem:[#allocation5 + $0x1ee8] sm:$0xff]
      %v2001 = vld [vmem:[#allocation5 + $0x1ef0] sm:$0xff]
      %v2002 = vld [vmem:[#allocation5 + $0x1ef8] sm:$0xff]
      %v2003 = vld [vmem:[#allocation5 + $0x1f00] sm:$0xff]
      %v2004 = vld [vmem:[#allocation5 + $0x1f08] sm:$0xff]
      %v2005 = vld [vmem:[#allocation5 + $0x1f10] sm:$0xff]
      %v2006 = vld [vmem:[#allocation5 + $0x1f18] sm:$0xff]
      %v2007 = vld [vmem:[#allocation5 + $0x1f20] sm:$0xff]
      %v2008 = vld [vmem:[#allocation5 + $0x1f28] sm:$0xff]
      %v2009 = vld [vmem:[#allocation5 + $0x1f30] sm:$0xff]
      %v2010 = vld [vmem:[#allocation5 + $0x1f38] sm:$0xff]
      %v2011 = vld [vmem:[#allocation5 + $0x1f40] sm:$0xff]
      %v2012 = vld [vmem:[#allocation5 + $0x1f48] sm:$0xff]
      %v2013 = vld [vmem:[#allocation5 + $0x1f50] sm:$0xff]
      %v2014 = vld [vmem:[#allocation5 + $0x1f58] sm:$0xff]
      %v2015 = vld [vmem:[#allocation5 + $0x1f60] sm:$0xff]
      %v2016 = vld [vmem:[#allocation5 + $0x1f68] sm:$0xff]
      %v2017 = vld [vmem:[#allocation5 + $0x1f70] sm:$0xff]
      %v2018 = vld [vmem:[#allocation5 + $0x1f78] sm:$0xff]
      %v2019 = vld [vmem:[#allocation5 + $0x1f80] sm:$0xff]
      %v2020 = vld [vmem:[#allocation5 + $0x1f88] sm:$0xff]
      %v2021 = vld [vmem:[#allocation5 + $0x1f90] sm:$0xff]
      %v2022 = vld [vmem:[#allocation5 + $0x1f98] sm:$0xff]
      %v2023 = vld [vmem:[#allocation5 + $0x1fa0] sm:$0xff]
      %v2024 = vld [vmem:[#allocation5 + $0x1fa8] sm:$0xff]
      %v2025 = vld [vmem:[#allocation5 + $0x1fb0] sm:$0xff]
      %v2026 = vld [vmem:[#allocation5 + $0x1fb8] sm:$0xff]
      %v2027 = vld [vmem:[#allocation5 + $0x1fc0] sm:$0xff]
      %v2028 = vld [vmem:[#allocation5 + $0x1fc8] sm:$0xff]
      %v2029 = vld [vmem:[#allocation5 + $0x1fd0] sm:$0xff]
      %v2030 = vld [vmem:[#allocation5 + $0x1fd8] sm:$0xff]
      %v2031 = vld [vmem:[#allocation5 + $0x1fe0] sm:$0xff]
      %v2032 = vld [vmem:[#allocation5 + $0x1fe8] sm:$0xff]
      %v2033 = vld [vmem:[#allocation5 + $0x1ff0] sm:$0xff]
      %v2034 = vld [vmem:[#allocation5 + $0x1ff8] sm:$0xff]
      %v2035 = vld [vmem:[#allocation7] sm:$0xff]
      %v2037 = vlaneseq
      %v2038 = vshrl.u32 %v2037, 7
      %v2039 = vsub.s32 0, %v2038
      %v2040 = vrot.slane %v2035, %v2039
      %v2041 = vlaneseq
      %v2042 = vshrl.u32 %v2041, 7
      %v2043 = vsub.s32 1, %v2042
      %v2044 = vrot.slane %v2035, %v2043
      %v2045 = vlaneseq
      %v2046 = vshrl.u32 %v2045, 7
      %v2047 = vsub.s32 2, %v2046
      %v2048 = vrot.slane %v2035, %v2047
      %v2049 = vlaneseq
      %v2050 = vshrl.u32 %v2049, 7
      %v2051 = vsub.s32 3, %v2050
      %v2052 = vrot.slane %v2035, %v2051
      %v2053 = vlaneseq
      %v2054 = vshrl.u32 %v2053, 7
      %v2055 = vsub.s32 4, %v2054
      %v2056 = vrot.slane %v2035, %v2055
      %v2057 = vlaneseq
      %v2058 = vshrl.u32 %v2057, 7
      %v2059 = vsub.s32 5, %v2058
      %v2060 = vrot.slane %v2035, %v2059
      %v2061 = vlaneseq
      %v2062 = vshrl.u32 %v2061, 7
      %v2063 = vsub.s32 6, %v2062
      %v2064 = vrot.slane %v2035, %v2063
      %v2065 = vlaneseq
      %v2066 = vshrl.u32 %v2065, 7
      %v2067 = vsub.s32 7, %v2066
      %v2068 = vrot.slane %v2035, %v2067
      %2077 = vmatprep.subr.mxu0 %v1012
      %2078 = vmatpush1.msra.mxu0 %v1011
      %2079 = vmatprep.subr.mxu0 %v1020
      %2080 = vmatpush1.msra.mxu0 %v1019
      %2081 = vmatprep.subr.mxu0 %v1028
      %2082 = vmatpush1.msra.mxu0 %v1027
      %2083 = vmatprep.subr.mxu0 %v1036
      %2084 = vmatpush1.msra.mxu0 %v1035
      %2085 = vmatprep.subr.mxu0 %v1044
      %2086 = vmatpush1.msra.mxu0 %v1043
      %2087 = vmatprep.subr.mxu0 %v1052
      %2088 = vmatpush1.msra.mxu0 %v1051
      %2089 = vmatprep.subr.mxu0 %v1060
      %2090 = vmatpush1.msra.mxu0 %v1059
      %2091 = vmatprep.subr.mxu0 %v1068
      %2092 = vmatpush1.msra.mxu0 %v1067
      %2093 = vmatprep.subr.mxu0 %v1076
      %2094 = vmatpush1.msra.mxu0 %v1075
      %2095 = vmatprep.subr.mxu0 %v1084
      %2096 = vmatpush1.msra.mxu0 %v1083
      %2097 = vmatprep.subr.mxu0 %v1092
      %2098 = vmatpush1.msra.mxu0 %v1091
      %2099 = vmatprep.subr.mxu0 %v1100
      %2100 = vmatpush1.msra.mxu0 %v1099
      %2101 = vmatprep.subr.mxu0 %v1108
      %2102 = vmatpush1.msra.mxu0 %v1107
      %2103 = vmatprep.subr.mxu0 %v1116
      %2104 = vmatpush1.msra.mxu0 %v1115
      %2105 = vmatprep.subr.mxu0 %v1124
      %2106 = vmatpush1.msra.mxu0 %v1123
      %2107 = vmatprep.subr.mxu0 %v1132
      %2108 = vmatpush1.msra.mxu0 %v1131
      %2109 = vmatprep.subr.mxu0 %v1140
      %2110 = vmatpush1.msra.mxu0 %v1139
      %2111 = vmatprep.subr.mxu0 %v1148
      %2112 = vmatpush1.msra.mxu0 %v1147
      %2113 = vmatprep.subr.mxu0 %v1156
      %2114 = vmatpush1.msra.mxu0 %v1155
      %2115 = vmatprep.subr.mxu0 %v1164
      %2116 = vmatpush1.msra.mxu0 %v1163
      %2117 = vmatprep.subr.mxu0 %v1172
      %2118 = vmatpush1.msra.mxu0 %v1171
      %2119 = vmatprep.subr.mxu0 %v1180
      %2120 = vmatpush1.msra.mxu0 %v1179
      %2121 = vmatprep.subr.mxu0 %v1188
      %2122 = vmatpush1.msra.mxu0 %v1187
      %2123 = vmatprep.subr.mxu0 %v1196
      %2124 = vmatpush1.msra.mxu0 %v1195
      %2125 = vmatprep.subr.mxu0 %v1204
      %2126 = vmatpush1.msra.mxu0 %v1203
      %2127 = vmatprep.subr.mxu0 %v1212
      %2128 = vmatpush1.msra.mxu0 %v1211
      %2129 = vmatprep.subr.mxu0 %v1220
      %2130 = vmatpush1.msra.mxu0 %v1219
      %2131 = vmatprep.subr.mxu0 %v1228
      %2132 = vmatpush1.msra.mxu0 %v1227
      %2133 = vmatprep.subr.mxu0 %v1236
      %2134 = vmatpush1.msra.mxu0 %v1235
      %2135 = vmatprep.subr.mxu0 %v1244
      %2136 = vmatpush1.msra.mxu0 %v1243
      %2137 = vmatprep.subr.mxu0 %v1252
      %2138 = vmatpush1.msra.mxu0 %v1251
      %2139 = vmatprep.subr.mxu0 %v1260
      %2140 = vmatpush1.msra.mxu0 %v1259
      %2141 = vmatprep.mubr.f32.mxu0 %v1004
      %2142 = vmatmul.mubr.f32.gmra.mrb[0].mxu0 %v1003
      %v2143 = vpop.f32.mrb[0].mxu0
      %v2144 = vadd.f32 %v2040, %v2143
      %v2145 = vpop.f32.mrb[0].mxu0
      %v2146 = vadd.f32 %v2044, %v2145
      %2147 = vdwg.mxu0
      %2148 = vmatprep.subr.mxu0 %v1268
      %2149 = vmatpush1.msra.mxu0 %v1267
      %2150 = vmatprep.subr.mxu0 %v1276
      %2151 = vmatpush1.msra.mxu0 %v1275
      %2152 = vmatprep.subr.mxu0 %v1284
      %2153 = vmatpush1.msra.mxu0 %v1283
      %2154 = vmatprep.subr.mxu0 %v1292
      %2155 = vmatpush1.msra.mxu0 %v1291
      %2156 = vmatprep.subr.mxu0 %v1300
      %2157 = vmatpush1.msra.mxu0 %v1299
      %2158 = vmatprep.subr.mxu0 %v1308
      %2159 = vmatpush1.msra.mxu0 %v1307
      %2160 = vmatprep.subr.mxu0 %v1316
      %2161 = vmatpush1.msra.mxu0 %v1315
      %2162 = vmatprep.subr.mxu0 %v1324
      %2163 = vmatpush1.msra.mxu0 %v1323
      %2164 = vmatprep.subr.mxu0 %v1332
      %2165 = vmatpush1.msra.mxu0 %v1331
      %2166 = vmatprep.subr.mxu0 %v1340
      %2167 = vmatpush1.msra.mxu0 %v1339
      %2168 = vmatprep.subr.mxu0 %v1348
      %2169 = vmatpush1.msra.mxu0 %v1347
      %2170 = vmatprep.subr.mxu0 %v1356
      %2171 = vmatpush1.msra.mxu0 %v1355
      %2172 = vmatprep.subr.mxu0 %v1364
      %2173 = vmatpush1.msra.mxu0 %v1363
      %2174 = vmatprep.subr.mxu0 %v1372
      %2175 = vmatpush1.msra.mxu0 %v1371
      %2176 = vmatprep.subr.mxu0 %v1380
      %2177 = vmatpush1.msra.mxu0 %v1379
      %2178 = vmatprep.subr.mxu0 %v1388
      %2179 = vmatpush1.msra.mxu0 %v1387
      %2180 = vmatprep.subr.mxu0 %v1396
      %2181 = vmatpush1.msra.mxu0 %v1395
      %2182 = vmatprep.subr.mxu0 %v1404
      %2183 = vmatpush1.msra.mxu0 %v1403
      %2184 = vmatprep.subr.mxu0 %v1412
      %2185 = vmatpush1.msra.mxu0 %v1411
      %2186 = vmatprep.subr.mxu0 %v1420
      %2187 = vmatpush1.msra.mxu0 %v1419
      %2188 = vmatprep.subr.mxu0 %v1428
      %2189 = vmatpush1.msra.mxu0 %v1427
      %2190 = vmatprep.subr.mxu0 %v1436
      %2191 = vmatpush1.msra.mxu0 %v1435
      %2192 = vmatprep.subr.mxu0 %v1444
      %2193 = vmatpush1.msra.mxu0 %v1443
      %2194 = vmatprep.subr.mxu0 %v1452
      %2195 = vmatpush1.msra.mxu0 %v1451
      %2196 = vmatprep.subr.mxu0 %v1460
      %2197 = vmatpush1.msra.mxu0 %v1459
      %2198 = vmatprep.subr.mxu0 %v1468
      %2199 = vmatpush1.msra.mxu0 %v1467
      %2200 = vmatprep.subr.mxu0 %v1476
      %2201 = vmatpush1.msra.mxu0 %v1475
      %2202 = vmatprep.subr.mxu0 %v1484
      %2203 = vmatpush1.msra.mxu0 %v1483
      %2204 = vmatprep.subr.mxu0 %v1492
      %2205 = vmatpush1.msra.mxu0 %v1491
      %2206 = vmatprep.subr.mxu0 %v1500
      %2207 = vmatpush1.msra.mxu0 %v1499
      %2208 = vmatprep.subr.mxu0 %v1508
      %2209 = vmatpush1.msra.mxu0 %v1507
      %2210 = vmatprep.subr.mxu0 %v1516
      %2211 = vmatpush1.msra.mxu0 %v1515
      %2212 = vmatprep.mubr.f32.mxu0 %v1006
      %2213 = vmatmul.mubr.f32.gmra.mrb[0].mxu0 %v1005
      %v2214 = vpop.f32.mrb[0].mxu0
      %v2215 = vadd.f32 %v2144, %v2214
      %v2216 = vpop.f32.mrb[0].mxu0
      %v2217 = vadd.f32 %v2146, %v2216
      %2218 = vdwg.mxu0
      %2219 = vmatprep.subr.mxu0 %v1524
      %2220 = vmatpush1.msra.mxu0 %v1523
      %2221 = vmatprep.subr.mxu0 %v1532
      %2222 = vmatpush1.msra.mxu0 %v1531
      %2223 = vmatprep.subr.mxu0 %v1540
      %2224 = vmatpush1.msra.mxu0 %v1539
      %2225 = vmatprep.subr.mxu0 %v1548
      %2226 = vmatpush1.msra.mxu0 %v1547
      %2227 = vmatprep.subr.mxu0 %v1556
      %2228 = vmatpush1.msra.mxu0 %v1555
      %2229 = vmatprep.subr.mxu0 %v1564
      %2230 = vmatpush1.msra.mxu0 %v1563
      %2231 = vmatprep.subr.mxu0 %v1572
      %2232 = vmatpush1.msra.mxu0 %v1571
      %2233 = vmatprep.subr.mxu0 %v1580
      %2234 = vmatpush1.msra.mxu0 %v1579
      %2235 = vmatprep.subr.mxu0 %v1588
      %2236 = vmatpush1.msra.mxu0 %v1587
      %2237 = vmatprep.subr.mxu0 %v1596
      %2238 = vmatpush1.msra.mxu0 %v1595
      %2239 = vmatprep.subr.mxu0 %v1604
      %2240 = vmatpush1.msra.mxu0 %v1603
      %2241 = vmatprep.subr.mxu0 %v1612
      %2242 = vmatpush1.msra.mxu0 %v1611
      %2243 = vmatprep.subr.mxu0 %v1620
      %2244 = vmatpush1.msra.mxu0 %v1619
      %2245 = vmatprep.subr.mxu0 %v1628
      %2246 = vmatpush1.msra.mxu0 %v1627
      %2247 = vmatprep.subr.mxu0 %v1636
      %2248 = vmatpush1.msra.mxu0 %v1635
      %2249 = vmatprep.subr.mxu0 %v1644
      %2250 = vmatpush1.msra.mxu0 %v1643
      %2251 = vmatprep.subr.mxu0 %v1652
      %2252 = vmatpush1.msra.mxu0 %v1651
      %2253 = vmatprep.subr.mxu0 %v1660
      %2254 = vmatpush1.msra.mxu0 %v1659
      %2255 = vmatprep.subr.mxu0 %v1668
      %2256 = vmatpush1.msra.mxu0 %v1667
      %2257 = vmatprep.subr.mxu0 %v1676
      %2258 = vmatpush1.msra.mxu0 %v1675
      %2259 = vmatprep.subr.mxu0 %v1684
      %2260 = vmatpush1.msra.mxu0 %v1683
      %2261 = vmatprep.subr.mxu0 %v1692
      %2262 = vmatpush1.msra.mxu0 %v1691
      %2263 = vmatprep.subr.mxu0 %v1700
      %2264 = vmatpush1.msra.mxu0 %v1699
      %2265 = vmatprep.subr.mxu0 %v1708
      %2266 = vmatpush1.msra.mxu0 %v1707
      %2267 = vmatprep.subr.mxu0 %v1716
      %2268 = vmatpush1.msra.mxu0 %v1715
      %2269 = vmatprep.subr.mxu0 %v1724
      %2270 = vmatpush1.msra.mxu0 %v1723
      %2271 = vmatprep.subr.mxu0 %v1732
      %2272 = vmatpush1.msra.mxu0 %v1731
      %2273 = vmatprep.subr.mxu0 %v1740
      %2274 = vmatpush1.msra.mxu0 %v1739
      %2275 = vmatprep.subr.mxu0 %v1748
      %2276 = vmatpush1.msra.mxu0 %v1747
      %2277 = vmatprep.subr.mxu0 %v1756
      %2278 = vmatpush1.msra.mxu0 %v1755
      %2279 = vmatprep.subr.mxu0 %v1764
      %2280 = vmatpush1.msra.mxu0 %v1763
      %2281 = vmatprep.subr.mxu0 %v1772
      %2282 = vmatpush1.msra.mxu0 %v1771
      %2283 = vmatprep.mubr.f32.mxu0 %v1008
      %2284 = vmatmul.mubr.f32.gmra.mrb[0].mxu0 %v1007
      %v2285 = vpop.f32.mrb[0].mxu0
      %v2286 = vadd.f32 %v2215, %v2285
      %v2287 = vpop.f32.mrb[0].mxu0
      %v2288 = vadd.f32 %v2217, %v2287
      %2289 = vdwg.mxu0
      %2290 = vmatprep.subr.mxu0 %v1780
      %2291 = vmatpush1.msra.mxu0 %v1779
      %2292 = vmatprep.subr.mxu0 %v1788
      %2293 = vmatpush1.msra.mxu0 %v1787
      %2294 = vmatprep.subr.mxu0 %v1796
      %2295 = vmatpush1.msra.mxu0 %v1795
      %2296 = vmatprep.subr.mxu0 %v1804
      %2297 = vmatpush1.msra.mxu0 %v1803
      %2298 = vmatprep.subr.mxu0 %v1812
      %2299 = vmatpush1.msra.mxu0 %v1811
      %2300 = vmatprep.subr.mxu0 %v1820
      %2301 = vmatpush1.msra.mxu0 %v1819
      %2302 = vmatprep.subr.mxu0 %v1828
      %2303 = vmatpush1.msra.mxu0 %v1827
      %2304 = vmatprep.subr.mxu0 %v1836
      %2305 = vmatpush1.msra.mxu0 %v1835
      %2306 = vmatprep.subr.mxu0 %v1844
      %2307 = vmatpush1.msra.mxu0 %v1843
      %2308 = vmatprep.subr.mxu0 %v1852
      %2309 = vmatpush1.msra.mxu0 %v1851
      %2310 = vmatprep.subr.mxu0 %v1860
      %2311 = vmatpush1.msra.mxu0 %v1859
      %2312 = vmatprep.subr.mxu0 %v1868
      %2313 = vmatpush1.msra.mxu0 %v1867
      %2314 = vmatprep.subr.mxu0 %v1876
      %2315 = vmatpush1.msra.mxu0 %v1875
      %2316 = vmatprep.subr.mxu0 %v1884
      %2317 = vmatpush1.msra.mxu0 %v1883
      %2318 = vmatprep.subr.mxu0 %v1892
      %2319 = vmatpush1.msra.mxu0 %v1891
      %2320 = vmatprep.subr.mxu0 %v1900
      %2321 = vmatpush1.msra.mxu0 %v1899
      %2322 = vmatprep.subr.mxu0 %v1908
      %2323 = vmatpush1.msra.mxu0 %v1907
      %2324 = vmatprep.subr.mxu0 %v1916
      %2325 = vmatpush1.msra.mxu0 %v1915
      %2326 = vmatprep.subr.mxu0 %v1924
      %2327 = vmatpush1.msra.mxu0 %v1923
      %2328 = vmatprep.subr.mxu0 %v1932
      %2329 = vmatpush1.msra.mxu0 %v1931
      %2330 = vmatprep.subr.mxu0 %v1940
      %2331 = vmatpush1.msra.mxu0 %v1939
      %2332 = vmatprep.subr.mxu0 %v1948
      %2333 = vmatpush1.msra.mxu0 %v1947
      %2334 = vmatprep.subr.mxu0 %v1956
      %2335 = vmatpush1.msra.mxu0 %v1955
      %2336 = vmatprep.subr.mxu0 %v1964
      %2337 = vmatpush1.msra.mxu0 %v1963
      %2338 = vmatprep.subr.mxu0 %v1972
      %2339 = vmatpush1.msra.mxu0 %v1971
      %2340 = vmatprep.subr.mxu0 %v1980
      %2341 = vmatpush1.msra.mxu0 %v1979
      %2342 = vmatprep.subr.mxu0 %v1988
      %2343 = vmatpush1.msra.mxu0 %v1987
      %2344 = vmatprep.subr.mxu0 %v1996
      %2345 = vmatpush1.msra.mxu0 %v1995
      %2346 = vmatprep.subr.mxu0 %v2004
      %2347 = vmatpush1.msra.mxu0 %v2003
      %2348 = vmatprep.subr.mxu0 %v2012
      %2349 = vmatpush1.msra.mxu0 %v2011
      %2350 = vmatprep.subr.mxu0 %v2020
      %2351 = vmatpush1.msra.mxu0 %v2019
      %2352 = vmatprep.subr.mxu0 %v2028
      %2353 = vmatpush1.msra.mxu0 %v2027
      %2354 = vmatprep.mubr.f32.mxu0 %v1010
      %2355 = vmatmul.mubr.f32.gmra.mrb[0].mxu0 %v1009
      %v2356 = vpop.f32.mrb[0].mxu0
      %v2357 = vadd.f32 %v2286, %v2356
      %v2358 = vpop.f32.mrb[0].mxu0
      %v2359 = vadd.f32 %v2288, %v2358
      %2360 = vdwg.mxu0
      %2361 = vmatprep.subr.mxu0 %v1014
      %2362 = vmatpush1.msra.mxu0 %v1013
      %2363 = vmatprep.subr.mxu0 %v1022
      %2364 = vmatpush1.msra.mxu0 %v1021
      %2365 = vmatprep.subr.mxu0 %v1030
      %2366 = vmatpush1.msra.mxu0 %v1029
      %2367 = vmatprep.subr.mxu0 %v1038
      %2368 = vmatpush1.msra.mxu0 %v1037
      %2369 = vmatprep.subr.mxu0 %v1046
      %2370 = vmatpush1.msra.mxu0 %v1045
      %2371 = vmatprep.subr.mxu0 %v1054
      %2372 = vmatpush1.msra.mxu0 %v1053
      %2373 = vmatprep.subr.mxu0 %v1062
      %2374 = vmatpush1.msra.mxu0 %v1061
      %2375 = vmatprep.subr.mxu0 %v1070
      %2376 = vmatpush1.msra.mxu0 %v1069
      %2377 = vmatprep.subr.mxu0 %v1078
      %2378 = vmatpush1.msra.mxu0 %v1077
      %2379 = vmatprep.subr.mxu0 %v1086
      %2380 = vmatpush1.msra.mxu0 %v1085
      %2381 = vmatprep.subr.mxu0 %v1094
      %2382 = vmatpush1.msra.mxu0 %v1093
      %2383 = vmatprep.subr.mxu0 %v1102
      %2384 = vmatpush1.msra.mxu0 %v1101
      %2385 = vmatprep.subr.mxu0 %v1110
      %2386 = vmatpush1.msra.mxu0 %v1109
      %2387 = vmatprep.subr.mxu0 %v1118
      %2388 = vmatpush1.msra.mxu0 %v1117
      %2389 = vmatprep.subr.mxu0 %v1126
      %2390 = vmatpush1.msra.mxu0 %v1125
      %2391 = vmatprep.subr.mxu0 %v1134
      %2392 = vmatpush1.msra.mxu0 %v1133
      %2393 = vmatprep.subr.mxu0 %v1142
      %2394 = vmatpush1.msra.mxu0 %v1141
      %2395 = vmatprep.subr.mxu0 %v1150
      %2396 = vmatpush1.msra.mxu0 %v1149
      %2397 = vmatprep.subr.mxu0 %v1158
      %2398 = vmatpush1.msra.mxu0 %v1157
      %2399 = vmatprep.subr.mxu0 %v1166
      %2400 = vmatpush1.msra.mxu0 %v1165
      %2401 = vmatprep.subr.mxu0 %v1174
      %2402 = vmatpush1.msra.mxu0 %v1173
      %2403 = vmatprep.subr.mxu0 %v1182
      %2404 = vmatpush1.msra.mxu0 %v1181
      %2405 = vmatprep.subr.mxu0 %v1190
      %2406 = vmatpush1.msra.mxu0 %v1189
      %2407 = vmatprep.subr.mxu0 %v1198
      %2408 = vmatpush1.msra.mxu0 %v1197
      %2409 = vmatprep.subr.mxu0 %v1206
      %2410 = vmatpush1.msra.mxu0 %v1205
      %2411 = vmatprep.subr.mxu0 %v1214
      %2412 = vmatpush1.msra.mxu0 %v1213
      %2413 = vmatprep.subr.mxu0 %v1222
      %2414 = vmatpush1.msra.mxu0 %v1221
      %2415 = vmatprep.subr.mxu0 %v1230
      %2416 = vmatpush1.msra.mxu0 %v1229
      %2417 = vmatprep.subr.mxu0 %v1238
      %2418 = vmatpush1.msra.mxu0 %v1237
      %2419 = vmatprep.subr.mxu0 %v1246
      %2420 = vmatpush1.msra.mxu0 %v1245
      %2421 = vmatprep.subr.mxu0 %v1254
      %2422 = vmatpush1.msra.mxu0 %v1253
      %2423 = vmatprep.subr.mxu0 %v1262
      %2424 = vmatpush1.msra.mxu0 %v1261
      %2425 = vmatprep.mubr.f32.mxu0 %v1004
      %2426 = vmatmul.mubr.f32.gmra.mrb[0].mxu0 %v1003
      %v2427 = vpop.f32.mrb[0].mxu0
      %v2428 = vadd.f32 %v2048, %v2427
      %v2429 = vpop.f32.mrb[0].mxu0
      %v2430 = vadd.f32 %v2052, %v2429
      %2431 = vdwg.mxu0
      %2432 = vmatprep.subr.mxu0 %v1270
      %2433 = vmatpush1.msra.mxu0 %v1269
      %2434 = vmatprep.subr.mxu0 %v1278
      %2435 = vmatpush1.msra.mxu0 %v1277
      %2436 = vmatprep.subr.mxu0 %v1286
      %2437 = vmatpush1.msra.mxu0 %v1285
      %2438 = vmatprep.subr.mxu0 %v1294
      %2439 = vmatpush1.msra.mxu0 %v1293
      %2440 = vmatprep.subr.mxu0 %v1302
      %2441 = vmatpush1.msra.mxu0 %v1301
      %2442 = vmatprep.subr.mxu0 %v1310
      %2443 = vmatpush1.msra.mxu0 %v1309
      %2444 = vmatprep.subr.mxu0 %v1318
      %2445 = vmatpush1.msra.mxu0 %v1317
      %2446 = vmatprep.subr.mxu0 %v1326
      %2447 = vmatpush1.msra.mxu0 %v1325
      %2448 = vmatprep.subr.mxu0 %v1334
      %2449 = vmatpush1.msra.mxu0 %v1333
      %2450 = vmatprep.subr.mxu0 %v1342
      %2451 = vmatpush1.msra.mxu0 %v1341
      %2452 = vmatprep.subr.mxu0 %v1350
      %2453 = vmatpush1.msra.mxu0 %v1349
      %2454 = vmatprep.subr.mxu0 %v1358
      %2455 = vmatpush1.msra.mxu0 %v1357
      %2456 = vmatprep.subr.mxu0 %v1366
      %2457 = vmatpush1.msra.mxu0 %v1365
      %2458 = vmatprep.subr.mxu0 %v1374
      %2459 = vmatpush1.msra.mxu0 %v1373
      %2460 = vmatprep.subr.mxu0 %v1382
      %2461 = vmatpush1.msra.mxu0 %v1381
      %2462 = vmatprep.subr.mxu0 %v1390
      %2463 = vmatpush1.msra.mxu0 %v1389
      %2464 = vmatprep.subr.mxu0 %v1398
      %2465 = vmatpush1.msra.mxu0 %v1397
      %2466 = vmatprep.subr.mxu0 %v1406
      %2467 = vmatpush1.msra.mxu0 %v1405
      %2468 = vmatprep.subr.mxu0 %v1414
      %2469 = vmatpush1.msra.mxu0 %v1413
      %2470 = vmatprep.subr.mxu0 %v1422
      %2471 = vmatpush1.msra.mxu0 %v1421
      %2472 = vmatprep.subr.mxu0 %v1430
      %2473 = vmatpush1.msra.mxu0 %v1429
      %2474 = vmatprep.subr.mxu0 %v1438
      %2475 = vmatpush1.msra.mxu0 %v1437
      %2476 = vmatprep.subr.mxu0 %v1446
      %2477 = vmatpush1.msra.mxu0 %v1445
      %2478 = vmatprep.subr.mxu0 %v1454
      %2479 = vmatpush1.msra.mxu0 %v1453
      %2480 = vmatprep.subr.mxu0 %v1462
      %2481 = vmatpush1.msra.mxu0 %v1461
      %2482 = vmatprep.subr.mxu0 %v1470
      %2483 = vmatpush1.msra.mxu0 %v1469
      %2484 = vmatprep.subr.mxu0 %v1478
      %2485 = vmatpush1.msra.mxu0 %v1477
      %2486 = vmatprep.subr.mxu0 %v1486
      %2487 = vmatpush1.msra.mxu0 %v1485
      %2488 = vmatprep.subr.mxu0 %v1494
      %2489 = vmatpush1.msra.mxu0 %v1493
      %2490 = vmatprep.subr.mxu0 %v1502
      %2491 = vmatpush1.msra.mxu0 %v1501
      %2492 = vmatprep.subr.mxu0 %v1510
      %2493 = vmatpush1.msra.mxu0 %v1509
      %2494 = vmatprep.subr.mxu0 %v1518
      %2495 = vmatpush1.msra.mxu0 %v1517
      %2496 = vmatprep.mubr.f32.mxu0 %v1006
      %2497 = vmatmul.mubr.f32.gmra.mrb[0].mxu0 %v1005
      %v2498 = vpop.f32.mrb[0].mxu0
      %v2499 = vadd.f32 %v2428, %v2498
      %v2500 = vpop.f32.mrb[0].mxu0
      %v2501 = vadd.f32 %v2430, %v2500
      %2502 = vdwg.mxu0
      %2503 = vmatprep.subr.mxu0 %v1526
      %2504 = vmatpush1.msra.mxu0 %v1525
      %2505 = vmatprep.subr.mxu0 %v1534
      %2506 = vmatpush1.msra.mxu0 %v1533
      %2507 = vmatprep.subr.mxu0 %v1542
      %2508 = vmatpush1.msra.mxu0 %v1541
      %2509 = vmatprep.subr.mxu0 %v1550
      %2510 = vmatpush1.msra.mxu0 %v1549
      %2511 = vmatprep.subr.mxu0 %v1558
      %2512 = vmatpush1.msra.mxu0 %v1557
      %2513 = vmatprep.subr.mxu0 %v1566
      %2514 = vmatpush1.msra.mxu0 %v1565
      %2515 = vmatprep.subr.mxu0 %v1574
      %2516 = vmatpush1.msra.mxu0 %v1573
      %2517 = vmatprep.subr.mxu0 %v1582
      %2518 = vmatpush1.msra.mxu0 %v1581
      %2519 = vmatprep.subr.mxu0 %v1590
      %2520 = vmatpush1.msra.mxu0 %v1589
      %2521 = vmatprep.subr.mxu0 %v1598
      %2522 = vmatpush1.msra.mxu0 %v1597
      %2523 = vmatprep.subr.mxu0 %v1606
      %2524 = vmatpush1.msra.mxu0 %v1605
      %2525 = vmatprep.subr.mxu0 %v1614
      %2526 = vmatpush1.msra.mxu0 %v1613
      %2527 = vmatprep.subr.mxu0 %v1622
      %2528 = vmatpush1.msra.mxu0 %v1621
      %2529 = vmatprep.subr.mxu0 %v1630
      %2530 = vmatpush1.msra.mxu0 %v1629
      %2531 = vmatprep.subr.mxu0 %v1638
      %2532 = vmatpush1.msra.mxu0 %v1637
      %2533 = vmatprep.subr.mxu0 %v1646
      %2534 = vmatpush1.msra.mxu0 %v1645
      %2535 = vmatprep.subr.mxu0 %v1654
      %2536 = vmatpush1.msra.mxu0 %v1653
      %2537 = vmatprep.subr.mxu0 %v1662
      %2538 = vmatpush1.msra.mxu0 %v1661
      %2539 = vmatprep.subr.mxu0 %v1670
      %2540 = vmatpush1.msra.mxu0 %v1669
      %2541 = vmatprep.subr.mxu0 %v1678
      %2542 = vmatpush1.msra.mxu0 %v1677
      %2543 = vmatprep.subr.mxu0 %v1686
      %2544 = vmatpush1.msra.mxu0 %v1685
      %2545 = vmatprep.subr.mxu0 %v1694
      %2546 = vmatpush1.msra.mxu0 %v1693
      %2547 = vmatprep.subr.mxu0 %v1702
      %2548 = vmatpush1.msra.mxu0 %v1701
      %2549 = vmatprep.subr.mxu0 %v1710
      %2550 = vmatpush1.msra.mxu0 %v1709
      %2551 = vmatprep.subr.mxu0 %v1718
      %2552 = vmatpush1.msra.mxu0 %v1717
      %2553 = vmatprep.subr.mxu0 %v1726
      %2554 = vmatpush1.msra.mxu0 %v1725
      %2555 = vmatprep.subr.mxu0 %v1734
      %2556 = vmatpush1.msra.mxu0 %v1733
      %2557 = vmatprep.subr.mxu0 %v1742
      %2558 = vmatpush1.msra.mxu0 %v1741
      %2559 = vmatprep.subr.mxu0 %v1750
      %2560 = vmatpush1.msra.mxu0 %v1749
      %2561 = vmatprep.subr.mxu0 %v1758
      %2562 = vmatpush1.msra.mxu0 %v1757
      %2563 = vmatprep.subr.mxu0 %v1766
      %2564 = vmatpush1.msra.mxu0 %v1765
      %2565 = vmatprep.subr.mxu0 %v1774
      %2566 = vmatpush1.msra.mxu0 %v1773
      %2567 = vmatprep.mubr.f32.mxu0 %v1008
      %2568 = vmatmul.mubr.f32.gmra.mrb[0].mxu0 %v1007
      %v2569 = vpop.f32.mrb[0].mxu0
      %v2570 = vadd.f32 %v2499, %v2569
      %v2571 = vpop.f32.mrb[0].mxu0
      %v2572 = vadd.f32 %v2501, %v2571
      %2573 = vdwg.mxu0
      %2574 = vmatprep.subr.mxu0 %v1782
      %2575 = vmatpush1.msra.mxu0 %v1781
      %2576 = vmatprep.subr.mxu0 %v1790
      %2577 = vmatpush1.msra.mxu0 %v1789
      %2578 = vmatprep.subr.mxu0 %v1798
      %2579 = vmatpush1.msra.mxu0 %v1797
      %2580 = vmatprep.subr.mxu0 %v1806
      %2581 = vmatpush1.msra.mxu0 %v1805
      %2582 = vmatprep.subr.mxu0 %v1814
      %2583 = vmatpush1.msra.mxu0 %v1813
      %2584 = vmatprep.subr.mxu0 %v1822
      %2585 = vmatpush1.msra.mxu0 %v1821
      %2586 = vmatprep.subr.mxu0 %v1830
      %2587 = vmatpush1.msra.mxu0 %v1829
      %2588 = vmatprep.subr.mxu0 %v1838
      %2589 = vmatpush1.msra.mxu0 %v1837
      %2590 = vmatprep.subr.mxu0 %v1846
      %2591 = vmatpush1.msra.mxu0 %v1845
      %2592 = vmatprep.subr.mxu0 %v1854
      %2593 = vmatpush1.msra.mxu0 %v1853
      %2594 = vmatprep.subr.mxu0 %v1862
      %2595 = vmatpush1.msra.mxu0 %v1861
      %2596 = vmatprep.subr.mxu0 %v1870
      %2597 = vmatpush1.msra.mxu0 %v1869
      %2598 = vmatprep.subr.mxu0 %v1878
      %2599 = vmatpush1.msra.mxu0 %v1877
      %2600 = vmatprep.subr.mxu0 %v1886
      %2601 = vmatpush1.msra.mxu0 %v1885
      %2602 = vmatprep.subr.mxu0 %v1894
      %2603 = vmatpush1.msra.mxu0 %v1893
      %2604 = vmatprep.subr.mxu0 %v1902
      %2605 = vmatpush1.msra.mxu0 %v1901
      %2606 = vmatprep.subr.mxu0 %v1910
      %2607 = vmatpush1.msra.mxu0 %v1909
      %2608 = vmatprep.subr.mxu0 %v1918
      %2609 = vmatpush1.msra.mxu0 %v1917
      %2610 = vmatprep.subr.mxu0 %v1926
      %2611 = vmatpush1.msra.mxu0 %v1925
      %2612 = vmatprep.subr.mxu0 %v1934
      %2613 = vmatpush1.msra.mxu0 %v1933
      %2614 = vmatprep.subr.mxu0 %v1942
      %2615 = vmatpush1.msra.mxu0 %v1941
      %2616 = vmatprep.subr.mxu0 %v1950
      %2617 = vmatpush1.msra.mxu0 %v1949
      %2618 = vmatprep.subr.mxu0 %v1958
      %2619 = vmatpush1.msra.mxu0 %v1957
      %2620 = vmatprep.subr.mxu0 %v1966
      %2621 = vmatpush1.msra.mxu0 %v1965
      %2622 = vmatprep.subr.mxu0 %v1974
      %2623 = vmatpush1.msra.mxu0 %v1973
      %2624 = vmatprep.subr.mxu0 %v1982
      %2625 = vmatpush1.msra.mxu0 %v1981
      %2626 = vmatprep.subr.mxu0 %v1990
      %2627 = vmatpush1.msra.mxu0 %v1989
      %2628 = vmatprep.subr.mxu0 %v1998
      %2629 = vmatpush1.msra.mxu0 %v1997
      %2630 = vmatprep.subr.mxu0 %v2006
      %2631 = vmatpush1.msra.mxu0 %v2005
      %2632 = vmatprep.subr.mxu0 %v2014
      %2633 = vmatpush1.msra.mxu0 %v2013
      %2634 = vmatprep.subr.mxu0 %v2022
      %2635 = vmatpush1.msra.mxu0 %v2021
      %2636 = vmatprep.subr.mxu0 %v2030
      %2637 = vmatpush1.msra.mxu0 %v2029
      %2638 = vmatprep.mubr.f32.mxu0 %v1010
      %2639 = vmatmul.mubr.f32.gmra.mrb[0].mxu0 %v1009
      %v2640 = vpop.f32.mrb[0].mxu0
      %v2641 = vadd.f32 %v2570, %v2640
      %v2642 = vpop.f32.mrb[0].mxu0
      %v2643 = vadd.f32 %v2572, %v2642
      %2644 = vdwg.mxu0
      %2645 = vmatprep.subr.mxu0 %v1016
      %2646 = vmatpush1.msra.mxu0 %v1015
      %2647 = vmatprep.subr.mxu0 %v1024
      %2648 = vmatpush1.msra.mxu0 %v1023
      %2649 = vmatprep.subr.mxu0 %v1032
      %2650 = vmatpush1.msra.mxu0 %v1031
      %2651 = vmatprep.subr.mxu0 %v1040
      %2652 = vmatpush1.msra.mxu0 %v1039
      %2653 = vmatprep.subr.mxu0 %v1048
      %2654 = vmatpush1.msra.mxu0 %v1047
      %2655 = vmatprep.subr.mxu0 %v1056
      %2656 = vmatpush1.msra.mxu0 %v1055
      %2657 = vmatprep.subr.mxu0 %v1064
      %2658 = vmatpush1.msra.mxu0 %v1063
      %2659 = vmatprep.subr.mxu0 %v1072
      %2660 = vmatpush1.msra.mxu0 %v1071
      %2661 = vmatprep.subr.mxu0 %v1080
      %2662 = vmatpush1.msra.mxu0 %v1079
      %2663 = vmatprep.subr.mxu0 %v1088
      %2664 = vmatpush1.msra.mxu0 %v1087
      %2665 = vmatprep.subr.mxu0 %v1096
      %2666 = vmatpush1.msra.mxu0 %v1095
      %2667 = vmatprep.subr.mxu0 %v1104
      %2668 = vmatpush1.msra.mxu0 %v1103
      %2669 = vmatprep.subr.mxu0 %v1112
      %2670 = vmatpush1.msra.mxu0 %v1111
      %2671 = vmatprep.subr.mxu0 %v1120
      %2672 = vmatpush1.msra.mxu0 %v1119
      %2673 = vmatprep.subr.mxu0 %v1128
      %2674 = vmatpush1.msra.mxu0 %v1127
      %2675 = vmatprep.subr.mxu0 %v1136
      %2676 = vmatpush1.msra.mxu0 %v1135
      %2677 = vmatprep.subr.mxu0 %v1144
      %2678 = vmatpush1.msra.mxu0 %v1143
      %2679 = vmatprep.subr.mxu0 %v1152
      %2680 = vmatpush1.msra.mxu0 %v1151
      %2681 = vmatprep.subr.mxu0 %v1160
      %2682 = vmatpush1.msra.mxu0 %v1159
      %2683 = vmatprep.subr.mxu0 %v1168
      %2684 = vmatpush1.msra.mxu0 %v1167
      %2685 = vmatprep.subr.mxu0 %v1176
      %2686 = vmatpush1.msra.mxu0 %v1175
      %2687 = vmatprep.subr.mxu0 %v1184
      %2688 = vmatpush1.msra.mxu0 %v1183
      %2689 = vmatprep.subr.mxu0 %v1192
      %2690 = vmatpush1.msra.mxu0 %v1191
      %2691 = vmatprep.subr.mxu0 %v1200
      %2692 = vmatpush1.msra.mxu0 %v1199
      %2693 = vmatprep.subr.mxu0 %v1208
      %2694 = vmatpush1.msra.mxu0 %v1207
      %2695 = vmatprep.subr.mxu0 %v1216
      %2696 = vmatpush1.msra.mxu0 %v1215
      %2697 = vmatprep.subr.mxu0 %v1224
      %2698 = vmatpush1.msra.mxu0 %v1223
      %2699 = vmatprep.subr.mxu0 %v1232
      %2700 = vmatpush1.msra.mxu0 %v1231
      %2701 = vmatprep.subr.mxu0 %v1240
      %2702 = vmatpush1.msra.mxu0 %v1239
      %2703 = vmatprep.subr.mxu0 %v1248
      %2704 = vmatpush1.msra.mxu0 %v1247
      %2705 = vmatprep.subr.mxu0 %v1256
      %2706 = vmatpush1.msra.mxu0 %v1255
      %2707 = vmatprep.subr.mxu0 %v1264
      %2708 = vmatpush1.msra.mxu0 %v1263
      %2709 = vmatprep.mubr.f32.mxu0 %v1004
      %2710 = vmatmul.mubr.f32.gmra.mrb[0].mxu0 %v1003
      %v2711 = vpop.f32.mrb[0].mxu0
      %v2712 = vadd.f32 %v2056, %v2711
      %v2713 = vpop.f32.mrb[0].mxu0
      %v2714 = vadd.f32 %v2060, %v2713
      %2715 = vdwg.mxu0
      %2716 = vmatprep.subr.mxu0 %v1272
      %2717 = vmatpush1.msra.mxu0 %v1271
      %2718 = vmatprep.subr.mxu0 %v1280
      %2719 = vmatpush1.msra.mxu0 %v1279
      %2720 = vmatprep.subr.mxu0 %v1288
      %2721 = vmatpush1.msra.mxu0 %v1287
      %2722 = vmatprep.subr.mxu0 %v1296
      %2723 = vmatpush1.msra.mxu0 %v1295
      %2724 = vmatprep.subr.mxu0 %v1304
      %2725 = vmatpush1.msra.mxu0 %v1303
      %2726 = vmatprep.subr.mxu0 %v1312
      %2727 = vmatpush1.msra.mxu0 %v1311
      %2728 = vmatprep.subr.mxu0 %v1320
      %2729 = vmatpush1.msra.mxu0 %v1319
      %2730 = vmatprep.subr.mxu0 %v1328
      %2731 = vmatpush1.msra.mxu0 %v1327
      %2732 = vmatprep.subr.mxu0 %v1336
      %2733 = vmatpush1.msra.mxu0 %v1335
      %2734 = vmatprep.subr.mxu0 %v1344
      %2735 = vmatpush1.msra.mxu0 %v1343
      %2736 = vmatprep.subr.mxu0 %v1352
      %2737 = vmatpush1.msra.mxu0 %v1351
      %2738 = vmatprep.subr.mxu0 %v1360
      %2739 = vmatpush1.msra.mxu0 %v1359
      %2740 = vmatprep.subr.mxu0 %v1368
      %2741 = vmatpush1.msra.mxu0 %v1367
      %2742 = vmatprep.subr.mxu0 %v1376
      %2743 = vmatpush1.msra.mxu0 %v1375
      %2744 = vmatprep.subr.mxu0 %v1384
      %2745 = vmatpush1.msra.mxu0 %v1383
      %2746 = vmatprep.subr.mxu0 %v1392
      %2747 = vmatpush1.msra.mxu0 %v1391
      %2748 = vmatprep.subr.mxu0 %v1400
      %2749 = vmatpush1.msra.mxu0 %v1399
      %2750 = vmatprep.subr.mxu0 %v1408
      %2751 = vmatpush1.msra.mxu0 %v1407
      %2752 = vmatprep.subr.mxu0 %v1416
      %2753 = vmatpush1.msra.mxu0 %v1415
      %2754 = vmatprep.subr.mxu0 %v1424
      %2755 = vmatpush1.msra.mxu0 %v1423
      %2756 = vmatprep.subr.mxu0 %v1432
      %2757 = vmatpush1.msra.mxu0 %v1431
      %2758 = vmatprep.subr.mxu0 %v1440
      %2759 = vmatpush1.msra.mxu0 %v1439
      %2760 = vmatprep.subr.mxu0 %v1448
      %2761 = vmatpush1.msra.mxu0 %v1447
      %2762 = vmatprep.subr.mxu0 %v1456
      %2763 = vmatpush1.msra.mxu0 %v1455
      %2764 = vmatprep.subr.mxu0 %v1464
      %2765 = vmatpush1.msra.mxu0 %v1463
      %2766 = vmatprep.subr.mxu0 %v1472
      %2767 = vmatpush1.msra.mxu0 %v1471
      %2768 = vmatprep.subr.mxu0 %v1480
      %2769 = vmatpush1.msra.mxu0 %v1479
      %2770 = vmatprep.subr.mxu0 %v1488
      %2771 = vmatpush1.msra.mxu0 %v1487
      %2772 = vmatprep.subr.mxu0 %v1496
      %2773 = vmatpush1.msra.mxu0 %v1495
      %2774 = vmatprep.subr.mxu0 %v1504
      %2775 = vmatpush1.msra.mxu0 %v1503
      %2776 = vmatprep.subr.mxu0 %v1512
      %2777 = vmatpush1.msra.mxu0 %v1511
      %2778 = vmatprep.subr.mxu0 %v1520
      %2779 = vmatpush1.msra.mxu0 %v1519
      %2780 = vmatprep.mubr.f32.mxu0 %v1006
      %2781 = vmatmul.mubr.f32.gmra.mrb[0].mxu0 %v1005
      %v2782 = vpop.f32.mrb[0].mxu0
      %v2783 = vadd.f32 %v2712, %v2782
      %v2784 = vpop.f32.mrb[0].mxu0
      %v2785 = vadd.f32 %v2714, %v2784
      %2786 = vdwg.mxu0
      %2787 = vmatprep.subr.mxu0 %v1528
      %2788 = vmatpush1.msra.mxu0 %v1527
      %2789 = vmatprep.subr.mxu0 %v1536
      %2790 = vmatpush1.msra.mxu0 %v1535
      %2791 = vmatprep.subr.mxu0 %v1544
      %2792 = vmatpush1.msra.mxu0 %v1543
      %2793 = vmatprep.subr.mxu0 %v1552
      %2794 = vmatpush1.msra.mxu0 %v1551
      %2795 = vmatprep.subr.mxu0 %v1560
      %2796 = vmatpush1.msra.mxu0 %v1559
      %2797 = vmatprep.subr.mxu0 %v1568
      %2798 = vmatpush1.msra.mxu0 %v1567
      %2799 = vmatprep.subr.mxu0 %v1576
      %2800 = vmatpush1.msra.mxu0 %v1575
      %2801 = vmatprep.subr.mxu0 %v1584
      %2802 = vmatpush1.msra.mxu0 %v1583
      %2803 = vmatprep.subr.mxu0 %v1592
      %2804 = vmatpush1.msra.mxu0 %v1591
      %2805 = vmatprep.subr.mxu0 %v1600
      %2806 = vmatpush1.msra.mxu0 %v1599
      %2807 = vmatprep.subr.mxu0 %v1608
      %2808 = vmatpush1.msra.mxu0 %v1607
      %2809 = vmatprep.subr.mxu0 %v1616
      %2810 = vmatpush1.msra.mxu0 %v1615
      %2811 = vmatprep.subr.mxu0 %v1624
      %2812 = vmatpush1.msra.mxu0 %v1623
      %2813 = vmatprep.subr.mxu0 %v1632
      %2814 = vmatpush1.msra.mxu0 %v1631
      %2815 = vmatprep.subr.mxu0 %v1640
      %2816 = vmatpush1.msra.mxu0 %v1639
      %2817 = vmatprep.subr.mxu0 %v1648
      %2818 = vmatpush1.msra.mxu0 %v1647
      %2819 = vmatprep.subr.mxu0 %v1656
      %2820 = vmatpush1.msra.mxu0 %v1655
      %2821 = vmatprep.subr.mxu0 %v1664
      %2822 = vmatpush1.msra.mxu0 %v1663
      %2823 = vmatprep.subr.mxu0 %v1672
      %2824 = vmatpush1.msra.mxu0 %v1671
      %2825 = vmatprep.subr.mxu0 %v1680
      %2826 = vmatpush1.msra.mxu0 %v1679
      %2827 = vmatprep.subr.mxu0 %v1688
      %2828 = vmatpush1.msra.mxu0 %v1687
      %2829 = vmatprep.subr.mxu0 %v1696
      %2830 = vmatpush1.msra.mxu0 %v1695
      %2831 = vmatprep.subr.mxu0 %v1704
      %2832 = vmatpush1.msra.mxu0 %v1703
      %2833 = vmatprep.subr.mxu0 %v1712
      %2834 = vmatpush1.msra.mxu0 %v1711
      %2835 = vmatprep.subr.mxu0 %v1720
      %2836 = vmatpush1.msra.mxu0 %v1719
      %2837 = vmatprep.subr.mxu0 %v1728
      %2838 = vmatpush1.msra.mxu0 %v1727
      %2839 = vmatprep.subr.mxu0 %v1736
      %2840 = vmatpush1.msra.mxu0 %v1735
      %2841 = vmatprep.subr.mxu0 %v1744
      %2842 = vmatpush1.msra.mxu0 %v1743
      %2843 = vmatprep.subr.mxu0 %v1752
      %2844 = vmatpush1.msra.mxu0 %v1751
      %2845 = vmatprep.subr.mxu0 %v1760
      %2846 = vmatpush1.msra.mxu0 %v1759
      %2847 = vmatprep.subr.mxu0 %v1768
      %2848 = vmatpush1.msra.mxu0 %v1767
      %2849 = vmatprep.subr.mxu0 %v1776
      %2850 = vmatpush1.msra.mxu0 %v1775
      %2851 = vmatprep.mubr.f32.mxu0 %v1008
      %2852 = vmatmul.mubr.f32.gmra.mrb[0].mxu0 %v1007
      %v2853 = vpop.f32.mrb[0].mxu0
      %v2854 = vadd.f32 %v2783, %v2853
      %v2855 = vpop.f32.mrb[0].mxu0
      %v2856 = vadd.f32 %v2785, %v2855
      %2857 = vdwg.mxu0
      %2858 = vmatprep.subr.mxu0 %v1784
      %2859 = vmatpush1.msra.mxu0 %v1783
      %2860 = vmatprep.subr.mxu0 %v1792
      %2861 = vmatpush1.msra.mxu0 %v1791
      %2862 = vmatprep.subr.mxu0 %v1800
      %2863 = vmatpush1.msra.mxu0 %v1799
      %2864 = vmatprep.subr.mxu0 %v1808
      %2865 = vmatpush1.msra.mxu0 %v1807
      %2866 = vmatprep.subr.mxu0 %v1816
      %2867 = vmatpush1.msra.mxu0 %v1815
      %2868 = vmatprep.subr.mxu0 %v1824
      %2869 = vmatpush1.msra.mxu0 %v1823
      %2870 = vmatprep.subr.mxu0 %v1832
      %2871 = vmatpush1.msra.mxu0 %v1831
      %2872 = vmatprep.subr.mxu0 %v1840
      %2873 = vmatpush1.msra.mxu0 %v1839
      %2874 = vmatprep.subr.mxu0 %v1848
      %2875 = vmatpush1.msra.mxu0 %v1847
      %2876 = vmatprep.subr.mxu0 %v1856
      %2877 = vmatpush1.msra.mxu0 %v1855
      %2878 = vmatprep.subr.mxu0 %v1864
      %2879 = vmatpush1.msra.mxu0 %v1863
      %2880 = vmatprep.subr.mxu0 %v1872
      %2881 = vmatpush1.msra.mxu0 %v1871
      %2882 = vmatprep.subr.mxu0 %v1880
      %2883 = vmatpush1.msra.mxu0 %v1879
      %2884 = vmatprep.subr.mxu0 %v1888
      %2885 = vmatpush1.msra.mxu0 %v1887
      %2886 = vmatprep.subr.mxu0 %v1896
      %2887 = vmatpush1.msra.mxu0 %v1895
      %2888 = vmatprep.subr.mxu0 %v1904
      %2889 = vmatpush1.msra.mxu0 %v1903
      %2890 = vmatprep.subr.mxu0 %v1912
      %2891 = vmatpush1.msra.mxu0 %v1911
      %2892 = vmatprep.subr.mxu0 %v1920
      %2893 = vmatpush1.msra.mxu0 %v1919
      %2894 = vmatprep.subr.mxu0 %v1928
      %2895 = vmatpush1.msra.mxu0 %v1927
      %2896 = vmatprep.subr.mxu0 %v1936
      %2897 = vmatpush1.msra.mxu0 %v1935
      %2898 = vmatprep.subr.mxu0 %v1944
      %2899 = vmatpush1.msra.mxu0 %v1943
      %2900 = vmatprep.subr.mxu0 %v1952
      %2901 = vmatpush1.msra.mxu0 %v1951
      %2902 = vmatprep.subr.mxu0 %v1960
      %2903 = vmatpush1.msra.mxu0 %v1959
      %2904 = vmatprep.subr.mxu0 %v1968
      %2905 = vmatpush1.msra.mxu0 %v1967
      %2906 = vmatprep.subr.mxu0 %v1976
      %2907 = vmatpush1.msra.mxu0 %v1975
      %2908 = vmatprep.subr.mxu0 %v1984
      %2909 = vmatpush1.msra.mxu0 %v1983
      %2910 = vmatprep.subr.mxu0 %v1992
      %2911 = vmatpush1.msra.mxu0 %v1991
      %2912 = vmatprep.subr.mxu0 %v2000
      %2913 = vmatpush1.msra.mxu0 %v1999
      %2914 = vmatprep.subr.mxu0 %v2008
      %2915 = vmatpush1.msra.mxu0 %v2007
      %2916 = vmatprep.subr.mxu0 %v2016
      %2917 = vmatpush1.msra.mxu0 %v2015
      %2918 = vmatprep.subr.mxu0 %v2024
      %2919 = vmatpush1.msra.mxu0 %v2023
      %2920 = vmatprep.subr.mxu0 %v2032
      %2921 = vmatpush1.msra.mxu0 %v2031
      %2922 = vmatprep.mubr.f32.mxu0 %v1010
      %2923 = vmatmul.mubr.f32.gmra.mrb[0].mxu0 %v1009
      %v2924 = vpop.f32.mrb[0].mxu0
      %v2925 = vadd.f32 %v2854, %v2924
      %v2926 = vpop.f32.mrb[0].mxu0
      %v2927 = vadd.f32 %v2856, %v2926
      %2928 = vdwg.mxu0
      %2929 = vmatprep.subr.mxu0 %v1018
      %2930 = vmatpush1.msra.mxu0 %v1017
      %2931 = vmatprep.subr.mxu0 %v1026
      %2932 = vmatpush1.msra.mxu0 %v1025
      %2933 = vmatprep.subr.mxu0 %v1034
      %2934 = vmatpush1.msra.mxu0 %v1033
      %2935 = vmatprep.subr.mxu0 %v1042
      %2936 = vmatpush1.msra.mxu0 %v1041
      %2937 = vmatprep.subr.mxu0 %v1050
      %2938 = vmatpush1.msra.mxu0 %v1049
      %2939 = vmatprep.subr.mxu0 %v1058
      %2940 = vmatpush1.msra.mxu0 %v1057
      %2941 = vmatprep.subr.mxu0 %v1066
      %2942 = vmatpush1.msra.mxu0 %v1065
      %2943 = vmatprep.subr.mxu0 %v1074
      %2944 = vmatpush1.msra.mxu0 %v1073
      %2945 = vmatprep.subr.mxu0 %v1082
      %2946 = vmatpush1.msra.mxu0 %v1081
      %2947 = vmatprep.subr.mxu0 %v1090
      %2948 = vmatpush1.msra.mxu0 %v1089
      %2949 = vmatprep.subr.mxu0 %v1098
      %2950 = vmatpush1.msra.mxu0 %v1097
      %2951 = vmatprep.subr.mxu0 %v1106
      %2952 = vmatpush1.msra.mxu0 %v1105
      %2953 = vmatprep.subr.mxu0 %v1114
      %2954 = vmatpush1.msra.mxu0 %v1113
      %2955 = vmatprep.subr.mxu0 %v1122
      %2956 = vmatpush1.msra.mxu0 %v1121
      %2957 = vmatprep.subr.mxu0 %v1130
      %2958 = vmatpush1.msra.mxu0 %v1129
      %2959 = vmatprep.subr.mxu0 %v1138
      %2960 = vmatpush1.msra.mxu0 %v1137
      %2961 = vmatprep.subr.mxu0 %v1146
      %2962 = vmatpush1.msra.mxu0 %v1145
      %2963 = vmatprep.subr.mxu0 %v1154
      %2964 = vmatpush1.msra.mxu0 %v1153
      %2965 = vmatprep.subr.mxu0 %v1162
      %2966 = vmatpush1.msra.mxu0 %v1161
      %2967 = vmatprep.subr.mxu0 %v1170
      %2968 = vmatpush1.msra.mxu0 %v1169
      %2969 = vmatprep.subr.mxu0 %v1178
      %2970 = vmatpush1.msra.mxu0 %v1177
      %2971 = vmatprep.subr.mxu0 %v1186
      %2972 = vmatpush1.msra.mxu0 %v1185
      %2973 = vmatprep.subr.mxu0 %v1194
      %2974 = vmatpush1.msra.mxu0 %v1193
      %2975 = vmatprep.subr.mxu0 %v1202
      %2976 = vmatpush1.msra.mxu0 %v1201
      %2977 = vmatprep.subr.mxu0 %v1210
      %2978 = vmatpush1.msra.mxu0 %v1209
      %2979 = vmatprep.subr.mxu0 %v1218
      %2980 = vmatpush1.msra.mxu0 %v1217
      %2981 = vmatprep.subr.mxu0 %v1226
      %2982 = vmatpush1.msra.mxu0 %v1225
      %2983 = vmatprep.subr.mxu0 %v1234
      %2984 = vmatpush1.msra.mxu0 %v1233
      %2985 = vmatprep.subr.mxu0 %v1242
      %2986 = vmatpush1.msra.mxu0 %v1241
      %2987 = vmatprep.subr.mxu0 %v1250
      %2988 = vmatpush1.msra.mxu0 %v1249
      %2989 = vmatprep.subr.mxu0 %v1258
      %2990 = vmatpush1.msra.mxu0 %v1257
      %2991 = vmatprep.subr.mxu0 %v1266
      %2992 = vmatpush1.msra.mxu0 %v1265
      %2993 = vmatprep.mubr.f32.mxu0 %v1004
      %2994 = vmatmul.mubr.f32.gmra.mrb[0].mxu0 %v1003
      %v2995 = vpop.f32.mrb[0].mxu0
      %v2996 = vadd.f32 %v2064, %v2995
      %v2997 = vpop.f32.mrb[0].mxu0
      %v2998 = vadd.f32 %v2068, %v2997
      %2999 = vdwg.mxu0
      %3000 = vmatprep.subr.mxu0 %v1274
      %3001 = vmatpush1.msra.mxu0 %v1273
      %3002 = vmatprep.subr.mxu0 %v1282
      %3003 = vmatpush1.msra.mxu0 %v1281
      %3004 = vmatprep.subr.mxu0 %v1290
      %3005 = vmatpush1.msra.mxu0 %v1289
      %3006 = vmatprep.subr.mxu0 %v1298
      %3007 = vmatpush1.msra.mxu0 %v1297
      %3008 = vmatprep.subr.mxu0 %v1306
      %3009 = vmatpush1.msra.mxu0 %v1305
      %3010 = vmatprep.subr.mxu0 %v1314
      %3011 = vmatpush1.msra.mxu0 %v1313
      %3012 = vmatprep.subr.mxu0 %v1322
      %3013 = vmatpush1.msra.mxu0 %v1321
      %3014 = vmatprep.subr.mxu0 %v1330
      %3015 = vmatpush1.msra.mxu0 %v1329
      %3016 = vmatprep.subr.mxu0 %v1338
      %3017 = vmatpush1.msra.mxu0 %v1337
      %3018 = vmatprep.subr.mxu0 %v1346
      %3019 = vmatpush1.msra.mxu0 %v1345
      %3020 = vmatprep.subr.mxu0 %v1354
      %3021 = vmatpush1.msra.mxu0 %v1353
      %3022 = vmatprep.subr.mxu0 %v1362
      %3023 = vmatpush1.msra.mxu0 %v1361
      %3024 = vmatprep.subr.mxu0 %v1370
      %3025 = vmatpush1.msra.mxu0 %v1369
      %3026 = vmatprep.subr.mxu0 %v1378
      %3027 = vmatpush1.msra.mxu0 %v1377
      %3028 = vmatprep.subr.mxu0 %v1386
      %3029 = vmatpush1.msra.mxu0 %v1385
      %3030 = vmatprep.subr.mxu0 %v1394
      %3031 = vmatpush1.msra.mxu0 %v1393
      %3032 = vmatprep.subr.mxu0 %v1402
      %3033 = vmatpush1.msra.mxu0 %v1401
      %3034 = vmatprep.subr.mxu0 %v1410
      %3035 = vmatpush1.msra.mxu0 %v1409
      %3036 = vmatprep.subr.mxu0 %v1418
      %3037 = vmatpush1.msra.mxu0 %v1417
      %3038 = vmatprep.subr.mxu0 %v1426
      %3039 = vmatpush1.msra.mxu0 %v1425
      %3040 = vmatprep.subr.mxu0 %v1434
      %3041 = vmatpush1.msra.mxu0 %v1433
      %3042 = vmatprep.subr.mxu0 %v1442
      %3043 = vmatpush1.msra.mxu0 %v1441
      %3044 = vmatprep.subr.mxu0 %v1450
      %3045 = vmatpush1.msra.mxu0 %v1449
      %3046 = vmatprep.subr.mxu0 %v1458
      %3047 = vmatpush1.msra.mxu0 %v1457
      %3048 = vmatprep.subr.mxu0 %v1466
      %3049 = vmatpush1.msra.mxu0 %v1465
      %3050 = vmatprep.subr.mxu0 %v1474
      %3051 = vmatpush1.msra.mxu0 %v1473
      %3052 = vmatprep.subr.mxu0 %v1482
      %3053 = vmatpush1.msra.mxu0 %v1481
      %3054 = vmatprep.subr.mxu0 %v1490
      %3055 = vmatpush1.msra.mxu0 %v1489
      %3056 = vmatprep.subr.mxu0 %v1498
      %3057 = vmatpush1.msra.mxu0 %v1497
      %3058 = vmatprep.subr.mxu0 %v1506
      %3059 = vmatpush1.msra.mxu0 %v1505
      %3060 = vmatprep.subr.mxu0 %v1514
      %3061 = vmatpush1.msra.mxu0 %v1513
      %3062 = vmatprep.subr.mxu0 %v1522
      %3063 = vmatpush1.msra.mxu0 %v1521
      %3064 = vmatprep.mubr.f32.mxu0 %v1006
      %3065 = vmatmul.mubr.f32.gmra.mrb[0].mxu0 %v1005
      %v3066 = vpop.f32.mrb[0].mxu0
      %v3067 = vadd.f32 %v2996, %v3066
      %v3068 = vpop.f32.mrb[0].mxu0
      %v3069 = vadd.f32 %v2998, %v3068
      %3070 = vdwg.mxu0
      %3071 = vmatprep.subr.mxu0 %v1530
      %3072 = vmatpush1.msra.mxu0 %v1529
      %3073 = vmatprep.subr.mxu0 %v1538
      %3074 = vmatpush1.msra.mxu0 %v1537
      %3075 = vmatprep.subr.mxu0 %v1546
      %3076 = vmatpush1.msra.mxu0 %v1545
      %3077 = vmatprep.subr.mxu0 %v1554
      %3078 = vmatpush1.msra.mxu0 %v1553
      %3079 = vmatprep.subr.mxu0 %v1562
      %3080 = vmatpush1.msra.mxu0 %v1561
      %3081 = vmatprep.subr.mxu0 %v1570
      %3082 = vmatpush1.msra.mxu0 %v1569
      %3083 = vmatprep.subr.mxu0 %v1578
      %3084 = vmatpush1.msra.mxu0 %v1577
      %3085 = vmatprep.subr.mxu0 %v1586
      %3086 = vmatpush1.msra.mxu0 %v1585
      %3087 = vmatprep.subr.mxu0 %v1594
      %3088 = vmatpush1.msra.mxu0 %v1593
      %3089 = vmatprep.subr.mxu0 %v1602
      %3090 = vmatpush1.msra.mxu0 %v1601
      %3091 = vmatprep.subr.mxu0 %v1610
      %3092 = vmatpush1.msra.mxu0 %v1609
      %3093 = vmatprep.subr.mxu0 %v1618
      %3094 = vmatpush1.msra.mxu0 %v1617
      %3095 = vmatprep.subr.mxu0 %v1626
      %3096 = vmatpush1.msra.mxu0 %v1625
      %3097 = vmatprep.subr.mxu0 %v1634
      %3098 = vmatpush1.msra.mxu0 %v1633
      %3099 = vmatprep.subr.mxu0 %v1642
      %3100 = vmatpush1.msra.mxu0 %v1641
      %3101 = vmatprep.subr.mxu0 %v1650
      %3102 = vmatpush1.msra.mxu0 %v1649
      %3103 = vmatprep.subr.mxu0 %v1658
      %3104 = vmatpush1.msra.mxu0 %v1657
      %3105 = vmatprep.subr.mxu0 %v1666
      %3106 = vmatpush1.msra.mxu0 %v1665
      %3107 = vmatprep.subr.mxu0 %v1674
      %3108 = vmatpush1.msra.mxu0 %v1673
      %3109 = vmatprep.subr.mxu0 %v1682
      %3110 = vmatpush1.msra.mxu0 %v1681
      %3111 = vmatprep.subr.mxu0 %v1690
      %3112 = vmatpush1.msra.mxu0 %v1689
      %3113 = vmatprep.subr.mxu0 %v1698
      %3114 = vmatpush1.msra.mxu0 %v1697
      %3115 = vmatprep.subr.mxu0 %v1706
      %3116 = vmatpush1.msra.mxu0 %v1705
      %3117 = vmatprep.subr.mxu0 %v1714
      %3118 = vmatpush1.msra.mxu0 %v1713
      %3119 = vmatprep.subr.mxu0 %v1722
      %3120 = vmatpush1.msra.mxu0 %v1721
      %3121 = vmatprep.subr.mxu0 %v1730
      %3122 = vmatpush1.msra.mxu0 %v1729
      %3123 = vmatprep.subr.mxu0 %v1738
      %3124 = vmatpush1.msra.mxu0 %v1737
      %3125 = vmatprep.subr.mxu0 %v1746
      %3126 = vmatpush1.msra.mxu0 %v1745
      %3127 = vmatprep.subr.mxu0 %v1754
      %3128 = vmatpush1.msra.mxu0 %v1753
      %3129 = vmatprep.subr.mxu0 %v1762
      %3130 = vmatpush1.msra.mxu0 %v1761
      %3131 = vmatprep.subr.mxu0 %v1770
      %3132 = vmatpush1.msra.mxu0 %v1769
      %3133 = vmatprep.subr.mxu0 %v1778
      %3134 = vmatpush1.msra.mxu0 %v1777
      %3135 = vmatprep.mubr.f32.mxu0 %v1008
      %3136 = vmatmul.mubr.f32.gmra.mrb[0].mxu0 %v1007
      %v3137 = vpop.f32.mrb[0].mxu0
      %v3138 = vadd.f32 %v3067, %v3137
      %v3139 = vpop.f32.mrb[0].mxu0
      %v3140 = vadd.f32 %v3069, %v3139
      %3141 = vdwg.mxu0
      %3142 = vmatprep.subr.mxu0 %v1786
      %3143 = vmatpush1.msra.mxu0 %v1785
      %3144 = vmatprep.subr.mxu0 %v1794
      %3145 = vmatpush1.msra.mxu0 %v1793
      %3146 = vmatprep.subr.mxu0 %v1802
      %3147 = vmatpush1.msra.mxu0 %v1801
      %3148 = vmatprep.subr.mxu0 %v1810
      %3149 = vmatpush1.msra.mxu0 %v1809
      %3150 = vmatprep.subr.mxu0 %v1818
      %3151 = vmatpush1.msra.mxu0 %v1817
      %3152 = vmatprep.subr.mxu0 %v1826
      %3153 = vmatpush1.msra.mxu0 %v1825
      %3154 = vmatprep.subr.mxu0 %v1834
      %3155 = vmatpush1.msra.mxu0 %v1833
      %3156 = vmatprep.subr.mxu0 %v1842
      %3157 = vmatpush1.msra.mxu0 %v1841
      %3158 = vmatprep.subr.mxu0 %v1850
      %3159 = vmatpush1.msra.mxu0 %v1849
      %3160 = vmatprep.subr.mxu0 %v1858
      %3161 = vmatpush1.msra.mxu0 %v1857
      %3162 = vmatprep.subr.mxu0 %v1866
      %3163 = vmatpush1.msra.mxu0 %v1865
      %3164 = vmatprep.subr.mxu0 %v1874
      %3165 = vmatpush1.msra.mxu0 %v1873
      %3166 = vmatprep.subr.mxu0 %v1882
      %3167 = vmatpush1.msra.mxu0 %v1881
      %3168 = vmatprep.subr.mxu0 %v1890
      %3169 = vmatpush1.msra.mxu0 %v1889
      %3170 = vmatprep.subr.mxu0 %v1898
      %3171 = vmatpush1.msra.mxu0 %v1897
      %3172 = vmatprep.subr.mxu0 %v1906
      %3173 = vmatpush1.msra.mxu0 %v1905
      %3174 = vmatprep.subr.mxu0 %v1914
      %3175 = vmatpush1.msra.mxu0 %v1913
      %3176 = vmatprep.subr.mxu0 %v1922
      %3177 = vmatpush1.msra.mxu0 %v1921
      %3178 = vmatprep.subr.mxu0 %v1930
      %3179 = vmatpush1.msra.mxu0 %v1929
      %3180 = vmatprep.subr.mxu0 %v1938
      %3181 = vmatpush1.msra.mxu0 %v1937
      %3182 = vmatprep.subr.mxu0 %v1946
      %3183 = vmatpush1.msra.mxu0 %v1945
      %3184 = vmatprep.subr.mxu0 %v1954
      %3185 = vmatpush1.msra.mxu0 %v1953
      %3186 = vmatprep.subr.mxu0 %v1962
      %3187 = vmatpush1.msra.mxu0 %v1961
      %3188 = vmatprep.subr.mxu0 %v1970
      %3189 = vmatpush1.msra.mxu0 %v1969
      %3190 = vmatprep.subr.mxu0 %v1978
      %3191 = vmatpush1.msra.mxu0 %v1977
      %3192 = vmatprep.subr.mxu0 %v1986
      %3193 = vmatpush1.msra.mxu0 %v1985
      %3194 = vmatprep.subr.mxu0 %v1994
      %3195 = vmatpush1.msra.mxu0 %v1993
      %3196 = vmatprep.subr.mxu0 %v2002
      %3197 = vmatpush1.msra.mxu0 %v2001
      %3198 = vmatprep.subr.mxu0 %v2010
      %3199 = vmatpush1.msra.mxu0 %v2009
      %3200 = vmatprep.subr.mxu0 %v2018
      %3201 = vmatpush1.msra.mxu0 %v2017
      %3202 = vmatprep.subr.mxu0 %v2026
      %3203 = vmatpush1.msra.mxu0 %v2025
      %3204 = vmatprep.subr.mxu0 %v2034
      %3205 = vmatpush1.msra.mxu0 %v2033
      %3206 = vmatprep.mubr.f32.mxu0 %v1010
      %3207 = vmatmul.mubr.f32.gmra.mrb[0].mxu0 %v1009
      %v3208 = vpop.f32.mrb[0].mxu0
      %v3209 = vadd.f32 %v3138, %v3208
      %v3210 = vpop.f32.mrb[0].mxu0
      %v3211 = vadd.f32 %v3140, %v3210
      %3212 = vdwg.mxu0
      %v3213 = vmax.f32 %v2357, 0.0
      %v3214 = vmax.f32 %v2359, 0.0
      %v3215 = vmax.f32 %v2641, 0.0
      %v3216 = vmax.f32 %v2643, 0.0
      %v3217 = vmax.f32 %v2925, 0.0
      %v3218 = vmax.f32 %v2927, 0.0
      %v3219 = vmax.f32 %v3209, 0.0
      %v3220 = vmax.f32 %v3211, 0.0
      %v3221 = vld [vmem:[#allocation8] sm:$0xff]
      %v3222 = vld [vmem:[#allocation8 + $0x8] sm:$0xff]
      %v3223 = vld [vmem:[#allocation8 + $0x10] sm:$0xff]
      %v3224 = vld [vmem:[#allocation8 + $0x18] sm:$0xff]
      %v3225 = vld [vmem:[#allocation8 + $0x20] sm:$0xff]
      %v3226 = vld [vmem:[#allocation8 + $0x28] sm:$0xff]
      %v3227 = vld [vmem:[#allocation8 + $0x30] sm:$0xff]
      %v3228 = vld [vmem:[#allocation8 + $0x38] sm:$0xff]
      %v3229 = vld [vmem:[#allocation8 + $0x40] sm:$0xff]
      %v3230 = vld [vmem:[#allocation8 + $0x48] sm:$0xff]
      %v3231 = vld [vmem:[#allocation8 + $0x50] sm:$0xff]
      %v3232 = vld [vmem:[#allocation8 + $0x58] sm:$0xff]
      %v3233 = vld [vmem:[#allocation8 + $0x60] sm:$0xff]
      %v3234 = vld [vmem:[#allocation8 + $0x68] sm:$0xff]
      %v3235 = vld [vmem:[#allocation8 + $0x70] sm:$0xff]
      %v3236 = vld [vmem:[#allocation8 + $0x78] sm:$0xff]
      %v3237 = vld [vmem:[#allocation8 + $0x80] sm:$0xff]
      %v3238 = vld [vmem:[#allocation8 + $0x88] sm:$0xff]
      %v3239 = vld [vmem:[#allocation8 + $0x90] sm:$0xff]
      %v3240 = vld [vmem:[#allocation8 + $0x98] sm:$0xff]
      %v3241 = vld [vmem:[#allocation8 + $0xa0] sm:$0xff]
      %v3242 = vld [vmem:[#allocation8 + $0xa8] sm:$0xff]
      %v3243 = vld [vmem:[#allocation8 + $0xb0] sm:$0xff]
      %v3244 = vld [vmem:[#allocation8 + $0xb8] sm:$0xff]
      %v3245 = vld [vmem:[#allocation8 + $0xc0] sm:$0xff]
      %v3246 = vld [vmem:[#allocation8 + $0xc8] sm:$0xff]
      %v3247 = vld [vmem:[#allocation8 + $0xd0] sm:$0xff]
      %v3248 = vld [vmem:[#allocation8 + $0xd8] sm:$0xff]
      %v3249 = vld [vmem:[#allocation8 + $0xe0] sm:$0xff]
      %v3250 = vld [vmem:[#allocation8 + $0xe8] sm:$0xff]
      %v3251 = vld [vmem:[#allocation8 + $0xf0] sm:$0xff]
      %v3252 = vld [vmem:[#allocation8 + $0xf8] sm:$0xff]
      %v3253 = vld [vmem:[#allocation8 + $0x100] sm:$0xff]
      %v3254 = vld [vmem:[#allocation8 + $0x108] sm:$0xff]
      %v3255 = vld [vmem:[#allocation8 + $0x110] sm:$0xff]
      %v3256 = vld [vmem:[#allocation8 + $0x118] sm:$0xff]
      %v3257 = vld [vmem:[#allocation8 + $0x120] sm:$0xff]
      %v3258 = vld [vmem:[#allocation8 + $0x128] sm:$0xff]
      %v3259 = vld [vmem:[#allocation8 + $0x130] sm:$0xff]
      %v3260 = vld [vmem:[#allocation8 + $0x138] sm:$0xff]
      %v3261 = vld [vmem:[#allocation8 + $0x140] sm:$0xff]
      %v3262 = vld [vmem:[#allocation8 + $0x148] sm:$0xff]
      %v3263 = vld [vmem:[#allocation8 + $0x150] sm:$0xff]
      %v3264 = vld [vmem:[#allocation8 + $0x158] sm:$0xff]
      %v3265 = vld [vmem:[#allocation8 + $0x160] sm:$0xff]
      %v3266 = vld [vmem:[#allocation8 + $0x168] sm:$0xff]
      %v3267 = vld [vmem:[#allocation8 + $0x170] sm:$0xff]
      %v3268 = vld [vmem:[#allocation8 + $0x178] sm:$0xff]
      %v3269 = vld [vmem:[#allocation8 + $0x180] sm:$0xff]
      %v3270 = vld [vmem:[#allocation8 + $0x188] sm:$0xff]
      %v3271 = vld [vmem:[#allocation8 + $0x190] sm:$0xff]
      %v3272 = vld [vmem:[#allocation8 + $0x198] sm:$0xff]
      %v3273 = vld [vmem:[#allocation8 + $0x1a0] sm:$0xff]
      %v3274 = vld [vmem:[#allocation8 + $0x1a8] sm:$0xff]
      %v3275 = vld [vmem:[#allocation8 + $0x1b0] sm:$0xff]
      %v3276 = vld [vmem:[#allocation8 + $0x1b8] sm:$0xff]
      %v3277 = vld [vmem:[#allocation8 + $0x1c0] sm:$0xff]
      %v3278 = vld [vmem:[#allocation8 + $0x1c8] sm:$0xff]
      %v3279 = vld [vmem:[#allocation8 + $0x1d0] sm:$0xff]
      %v3280 = vld [vmem:[#allocation8 + $0x1d8] sm:$0xff]
      %v3281 = vld [vmem:[#allocation8 + $0x1e0] sm:$0xff]
      %v3282 = vld [vmem:[#allocation8 + $0x1e8] sm:$0xff]
      %v3283 = vld [vmem:[#allocation8 + $0x1f0] sm:$0xff]
      %v3284 = vld [vmem:[#allocation8 + $0x1f8] sm:$0xff]
      %v3285 = vld [vmem:[#allocation8 + $0x200] sm:$0xff]
      %v3286 = vld [vmem:[#allocation8 + $0x208] sm:$0xff]
      %v3287 = vld [vmem:[#allocation8 + $0x210] sm:$0xff]
      %v3288 = vld [vmem:[#allocation8 + $0x218] sm:$0xff]
      %v3289 = vld [vmem:[#allocation8 + $0x220] sm:$0xff]
      %v3290 = vld [vmem:[#allocation8 + $0x228] sm:$0xff]
      %v3291 = vld [vmem:[#allocation8 + $0x230] sm:$0xff]
      %v3292 = vld [vmem:[#allocation8 + $0x238] sm:$0xff]
      %v3293 = vld [vmem:[#allocation8 + $0x240] sm:$0xff]
      %v3294 = vld [vmem:[#allocation8 + $0x248] sm:$0xff]
      %v3295 = vld [vmem:[#allocation8 + $0x250] sm:$0xff]
      %v3296 = vld [vmem:[#allocation8 + $0x258] sm:$0xff]
      %v3297 = vld [vmem:[#allocation8 + $0x260] sm:$0xff]
      %v3298 = vld [vmem:[#allocation8 + $0x268] sm:$0xff]
      %v3299 = vld [vmem:[#allocation8 + $0x270] sm:$0xff]
      %v3300 = vld [vmem:[#allocation8 + $0x278] sm:$0xff]
      %v3301 = vld [vmem:[#allocation8 + $0x280] sm:$0xff]
      %v3302 = vld [vmem:[#allocation8 + $0x288] sm:$0xff]
      %v3303 = vld [vmem:[#allocation8 + $0x290] sm:$0xff]
      %v3304 = vld [vmem:[#allocation8 + $0x298] sm:$0xff]
      %v3305 = vld [vmem:[#allocation8 + $0x2a0] sm:$0xff]
      %v3306 = vld [vmem:[#allocation8 + $0x2a8] sm:$0xff]
      %v3307 = vld [vmem:[#allocation8 + $0x2b0] sm:$0xff]
      %v3308 = vld [vmem:[#allocation8 + $0x2b8] sm:$0xff]
      %v3309 = vld [vmem:[#allocation8 + $0x2c0] sm:$0xff]
      %v3310 = vld [vmem:[#allocation8 + $0x2c8] sm:$0xff]
      %v3311 = vld [vmem:[#allocation8 + $0x2d0] sm:$0xff]
      %v3312 = vld [vmem:[#allocation8 + $0x2d8] sm:$0xff]
      %v3313 = vld [vmem:[#allocation8 + $0x2e0] sm:$0xff]
      %v3314 = vld [vmem:[#allocation8 + $0x2e8] sm:$0xff]
      %v3315 = vld [vmem:[#allocation8 + $0x2f0] sm:$0xff]
      %v3316 = vld [vmem:[#allocation8 + $0x2f8] sm:$0xff]
      %v3317 = vld [vmem:[#allocation8 + $0x300] sm:$0xff]
      %v3318 = vld [vmem:[#allocation8 + $0x308] sm:$0xff]
      %v3319 = vld [vmem:[#allocation8 + $0x310] sm:$0xff]
      %v3320 = vld [vmem:[#allocation8 + $0x318] sm:$0xff]
      %v3321 = vld [vmem:[#allocation8 + $0x320] sm:$0xff]
      %v3322 = vld [vmem:[#allocation8 + $0x328] sm:$0xff]
      %v3323 = vld [vmem:[#allocation8 + $0x330] sm:$0xff]
      %v3324 = vld [vmem:[#allocation8 + $0x338] sm:$0xff]
      %v3325 = vld [vmem:[#allocation8 + $0x340] sm:$0xff]
      %v3326 = vld [vmem:[#allocation8 + $0x348] sm:$0xff]
      %v3327 = vld [vmem:[#allocation8 + $0x350] sm:$0xff]
      %v3328 = vld [vmem:[#allocation8 + $0x358] sm:$0xff]
      %v3329 = vld [vmem:[#allocation8 + $0x360] sm:$0xff]
      %v3330 = vld [vmem:[#allocation8 + $0x368] sm:$0xff]
      %v3331 = vld [vmem:[#allocation8 + $0x370] sm:$0xff]
      %v3332 = vld [vmem:[#allocation8 + $0x378] sm:$0xff]
      %v3333 = vld [vmem:[#allocation8 + $0x380] sm:$0xff]
      %v3334 = vld [vmem:[#allocation8 + $0x388] sm:$0xff]
      %v3335 = vld [vmem:[#allocation8 + $0x390] sm:$0xff]
      %v3336 = vld [vmem:[#allocation8 + $0x398] sm:$0xff]
      %v3337 = vld [vmem:[#allocation8 + $0x3a0] sm:$0xff]
      %v3338 = vld [vmem:[#allocation8 + $0x3a8] sm:$0xff]
      %v3339 = vld [vmem:[#allocation8 + $0x3b0] sm:$0xff]
      %v3340 = vld [vmem:[#allocation8 + $0x3b8] sm:$0xff]
      %v3341 = vld [vmem:[#allocation8 + $0x3c0] sm:$0xff]
      %v3342 = vld [vmem:[#allocation8 + $0x3c8] sm:$0xff]
      %v3343 = vld [vmem:[#allocation8 + $0x3d0] sm:$0xff]
      %v3344 = vld [vmem:[#allocation8 + $0x3d8] sm:$0xff]
      %v3345 = vld [vmem:[#allocation8 + $0x3e0] sm:$0xff]
      %v3346 = vld [vmem:[#allocation8 + $0x3e8] sm:$0xff]
      %v3347 = vld [vmem:[#allocation8 + $0x3f0] sm:$0xff]
      %v3348 = vld [vmem:[#allocation8 + $0x3f8] sm:$0xff]
      %v3349 = vld [vmem:[#allocation8 + $0x400] sm:$0xff]
      %v3350 = vld [vmem:[#allocation8 + $0x408] sm:$0xff]
      %v3351 = vld [vmem:[#allocation8 + $0x410] sm:$0xff]
      %v3352 = vld [vmem:[#allocation8 + $0x418] sm:$0xff]
      %v3353 = vld [vmem:[#allocation8 + $0x420] sm:$0xff]
      %v3354 = vld [vmem:[#allocation8 + $0x428] sm:$0xff]
      %v3355 = vld [vmem:[#allocation8 + $0x430] sm:$0xff]
      %v3356 = vld [vmem:[#allocation8 + $0x438] sm:$0xff]
      %v3357 = vld [vmem:[#allocation8 + $0x440] sm:$0xff]
      %v3358 = vld [vmem:[#allocation8 + $0x448] sm:$0xff]
      %v3359 = vld [vmem:[#allocation8 + $0x450] sm:$0xff]
      %v3360 = vld [vmem:[#allocation8 + $0x458] sm:$0xff]
      %v3361 = vld [vmem:[#allocation8 + $0x460] sm:$0xff]
      %v3362 = vld [vmem:[#allocation8 + $0x468] sm:$0xff]
      %v3363 = vld [vmem:[#allocation8 + $0x470] sm:$0xff]
      %v3364 = vld [vmem:[#allocation8 + $0x478] sm:$0xff]
      %v3365 = vld [vmem:[#allocation8 + $0x480] sm:$0xff]
      %v3366 = vld [vmem:[#allocation8 + $0x488] sm:$0xff]
      %v3367 = vld [vmem:[#allocation8 + $0x490] sm:$0xff]
      %v3368 = vld [vmem:[#allocation8 + $0x498] sm:$0xff]
      %v3369 = vld [vmem:[#allocation8 + $0x4a0] sm:$0xff]
      %v3370 = vld [vmem:[#allocation8 + $0x4a8] sm:$0xff]
      %v3371 = vld [vmem:[#allocation8 + $0x4b0] sm:$0xff]
      %v3372 = vld [vmem:[#allocation8 + $0x4b8] sm:$0xff]
      %v3373 = vld [vmem:[#allocation8 + $0x4c0] sm:$0xff]
      %v3374 = vld [vmem:[#allocation8 + $0x4c8] sm:$0xff]
      %v3375 = vld [vmem:[#allocation8 + $0x4d0] sm:$0xff]
      %v3376 = vld [vmem:[#allocation8 + $0x4d8] sm:$0xff]
      %v3377 = vld [vmem:[#allocation8 + $0x4e0] sm:$0xff]
      %v3378 = vld [vmem:[#allocation8 + $0x4e8] sm:$0xff]
      %v3379 = vld [vmem:[#allocation8 + $0x4f0] sm:$0xff]
      %v3380 = vld [vmem:[#allocation8 + $0x4f8] sm:$0xff]
      %v3381 = vld [vmem:[#allocation8 + $0x500] sm:$0xff]
      %v3382 = vld [vmem:[#allocation8 + $0x508] sm:$0xff]
      %v3383 = vld [vmem:[#allocation8 + $0x510] sm:$0xff]
      %v3384 = vld [vmem:[#allocation8 + $0x518] sm:$0xff]
      %v3385 = vld [vmem:[#allocation8 + $0x520] sm:$0xff]
      %v3386 = vld [vmem:[#allocation8 + $0x528] sm:$0xff]
      %v3387 = vld [vmem:[#allocation8 + $0x530] sm:$0xff]
      %v3388 = vld [vmem:[#allocation8 + $0x538] sm:$0xff]
      %v3389 = vld [vmem:[#allocation8 + $0x540] sm:$0xff]
      %v3390 = vld [vmem:[#allocation8 + $0x548] sm:$0xff]
      %v3391 = vld [vmem:[#allocation8 + $0x550] sm:$0xff]
      %v3392 = vld [vmem:[#allocation8 + $0x558] sm:$0xff]
      %v3393 = vld [vmem:[#allocation8 + $0x560] sm:$0xff]
      %v3394 = vld [vmem:[#allocation8 + $0x568] sm:$0xff]
      %v3395 = vld [vmem:[#allocation8 + $0x570] sm:$0xff]
      %v3396 = vld [vmem:[#allocation8 + $0x578] sm:$0xff]
      %v3397 = vld [vmem:[#allocation8 + $0x580] sm:$0xff]
      %v3398 = vld [vmem:[#allocation8 + $0x588] sm:$0xff]
      %v3399 = vld [vmem:[#allocation8 + $0x590] sm:$0xff]
      %v3400 = vld [vmem:[#allocation8 + $0x598] sm:$0xff]
      %v3401 = vld [vmem:[#allocation8 + $0x5a0] sm:$0xff]
      %v3402 = vld [vmem:[#allocation8 + $0x5a8] sm:$0xff]
      %v3403 = vld [vmem:[#allocation8 + $0x5b0] sm:$0xff]
      %v3404 = vld [vmem:[#allocation8 + $0x5b8] sm:$0xff]
      %v3405 = vld [vmem:[#allocation8 + $0x5c0] sm:$0xff]
      %v3406 = vld [vmem:[#allocation8 + $0x5c8] sm:$0xff]
      %v3407 = vld [vmem:[#allocation8 + $0x5d0] sm:$0xff]
      %v3408 = vld [vmem:[#allocation8 + $0x5d8] sm:$0xff]
      %v3409 = vld [vmem:[#allocation8 + $0x5e0] sm:$0xff]
      %v3410 = vld [vmem:[#allocation8 + $0x5e8] sm:$0xff]
      %v3411 = vld [vmem:[#allocation8 + $0x5f0] sm:$0xff]
      %v3412 = vld [vmem:[#allocation8 + $0x5f8] sm:$0xff]
      %v3413 = vld [vmem:[#allocation8 + $0x600] sm:$0xff]
      %v3414 = vld [vmem:[#allocation8 + $0x608] sm:$0xff]
      %v3415 = vld [vmem:[#allocation8 + $0x610] sm:$0xff]
      %v3416 = vld [vmem:[#allocation8 + $0x618] sm:$0xff]
      %v3417 = vld [vmem:[#allocation8 + $0x620] sm:$0xff]
      %v3418 = vld [vmem:[#allocation8 + $0x628] sm:$0xff]
      %v3419 = vld [vmem:[#allocation8 + $0x630] sm:$0xff]
      %v3420 = vld [vmem:[#allocation8 + $0x638] sm:$0xff]
      %v3421 = vld [vmem:[#allocation8 + $0x640] sm:$0xff]
      %v3422 = vld [vmem:[#allocation8 + $0x648] sm:$0xff]
      %v3423 = vld [vmem:[#allocation8 + $0x650] sm:$0xff]
      %v3424 = vld [vmem:[#allocation8 + $0x658] sm:$0xff]
      %v3425 = vld [vmem:[#allocation8 + $0x660] sm:$0xff]
      %v3426 = vld [vmem:[#allocation8 + $0x668] sm:$0xff]
      %v3427 = vld [vmem:[#allocation8 + $0x670] sm:$0xff]
      %v3428 = vld [vmem:[#allocation8 + $0x678] sm:$0xff]
      %v3429 = vld [vmem:[#allocation8 + $0x680] sm:$0xff]
      %v3430 = vld [vmem:[#allocation8 + $0x688] sm:$0xff]
      %v3431 = vld [vmem:[#allocation8 + $0x690] sm:$0xff]
      %v3432 = vld [vmem:[#allocation8 + $0x698] sm:$0xff]
      %v3433 = vld [vmem:[#allocation8 + $0x6a0] sm:$0xff]
      %v3434 = vld [vmem:[#allocation8 + $0x6a8] sm:$0xff]
      %v3435 = vld [vmem:[#allocation8 + $0x6b0] sm:$0xff]
      %v3436 = vld [vmem:[#allocation8 + $0x6b8] sm:$0xff]
      %v3437 = vld [vmem:[#allocation8 + $0x6c0] sm:$0xff]
      %v3438 = vld [vmem:[#allocation8 + $0x6c8] sm:$0xff]
      %v3439 = vld [vmem:[#allocation8 + $0x6d0] sm:$0xff]
      %v3440 = vld [vmem:[#allocation8 + $0x6d8] sm:$0xff]
      %v3441 = vld [vmem:[#allocation8 + $0x6e0] sm:$0xff]
      %v3442 = vld [vmem:[#allocation8 + $0x6e8] sm:$0xff]
      %v3443 = vld [vmem:[#allocation8 + $0x6f0] sm:$0xff]
      %v3444 = vld [vmem:[#allocation8 + $0x6f8] sm:$0xff]
      %v3445 = vld [vmem:[#allocation8 + $0x700] sm:$0xff]
      %v3446 = vld [vmem:[#allocation8 + $0x708] sm:$0xff]
      %v3447 = vld [vmem:[#allocation8 + $0x710] sm:$0xff]
      %v3448 = vld [vmem:[#allocation8 + $0x718] sm:$0xff]
      %v3449 = vld [vmem:[#allocation8 + $0x720] sm:$0xff]
      %v3450 = vld [vmem:[#allocation8 + $0x728] sm:$0xff]
      %v3451 = vld [vmem:[#allocation8 + $0x730] sm:$0xff]
      %v3452 = vld [vmem:[#allocation8 + $0x738] sm:$0xff]
      %v3453 = vld [vmem:[#allocation8 + $0x740] sm:$0xff]
      %v3454 = vld [vmem:[#allocation8 + $0x748] sm:$0xff]
      %v3455 = vld [vmem:[#allocation8 + $0x750] sm:$0xff]
      %v3456 = vld [vmem:[#allocation8 + $0x758] sm:$0xff]
      %v3457 = vld [vmem:[#allocation8 + $0x760] sm:$0xff]
      %v3458 = vld [vmem:[#allocation8 + $0x768] sm:$0xff]
      %v3459 = vld [vmem:[#allocation8 + $0x770] sm:$0xff]
      %v3460 = vld [vmem:[#allocation8 + $0x778] sm:$0xff]
      %v3461 = vld [vmem:[#allocation8 + $0x780] sm:$0xff]
      %v3462 = vld [vmem:[#allocation8 + $0x788] sm:$0xff]
      %v3463 = vld [vmem:[#allocation8 + $0x790] sm:$0xff]
      %v3464 = vld [vmem:[#allocation8 + $0x798] sm:$0xff]
      %v3465 = vld [vmem:[#allocation8 + $0x7a0] sm:$0xff]
      %v3466 = vld [vmem:[#allocation8 + $0x7a8] sm:$0xff]
      %v3467 = vld [vmem:[#allocation8 + $0x7b0] sm:$0xff]
      %v3468 = vld [vmem:[#allocation8 + $0x7b8] sm:$0xff]
      %v3469 = vld [vmem:[#allocation8 + $0x7c0] sm:$0xff]
      %v3470 = vld [vmem:[#allocation8 + $0x7c8] sm:$0xff]
      %v3471 = vld [vmem:[#allocation8 + $0x7d0] sm:$0xff]
      %v3472 = vld [vmem:[#allocation8 + $0x7d8] sm:$0xff]
      %v3473 = vld [vmem:[#allocation8 + $0x7e0] sm:$0xff]
      %v3474 = vld [vmem:[#allocation8 + $0x7e8] sm:$0xff]
      %v3475 = vld [vmem:[#allocation8 + $0x7f0] sm:$0xff]
      %v3476 = vld [vmem:[#allocation8 + $0x7f8] sm:$0xff]
      %v3477 = vld [vmem:[#allocation8 + $0x800] sm:$0xff]
      %v3478 = vld [vmem:[#allocation8 + $0x808] sm:$0xff]
      %v3479 = vld [vmem:[#allocation8 + $0x810] sm:$0xff]
      %v3480 = vld [vmem:[#allocation8 + $0x818] sm:$0xff]
      %v3481 = vld [vmem:[#allocation8 + $0x820] sm:$0xff]
      %v3482 = vld [vmem:[#allocation8 + $0x828] sm:$0xff]
      %v3483 = vld [vmem:[#allocation8 + $0x830] sm:$0xff]
      %v3484 = vld [vmem:[#allocation8 + $0x838] sm:$0xff]
      %v3485 = vld [vmem:[#allocation8 + $0x840] sm:$0xff]
      %v3486 = vld [vmem:[#allocation8 + $0x848] sm:$0xff]
      %v3487 = vld [vmem:[#allocation8 + $0x850] sm:$0xff]
      %v3488 = vld [vmem:[#allocation8 + $0x858] sm:$0xff]
      %v3489 = vld [vmem:[#allocation8 + $0x860] sm:$0xff]
      %v3490 = vld [vmem:[#allocation8 + $0x868] sm:$0xff]
      %v3491 = vld [vmem:[#allocation8 + $0x870] sm:$0xff]
      %v3492 = vld [vmem:[#allocation8 + $0x878] sm:$0xff]
      %v3493 = vld [vmem:[#allocation8 + $0x880] sm:$0xff]
      %v3494 = vld [vmem:[#allocation8 + $0x888] sm:$0xff]
      %v3495 = vld [vmem:[#allocation8 + $0x890] sm:$0xff]
      %v3496 = vld [vmem:[#allocation8 + $0x898] sm:$0xff]
      %v3497 = vld [vmem:[#allocation8 + $0x8a0] sm:$0xff]
      %v3498 = vld [vmem:[#allocation8 + $0x8a8] sm:$0xff]
      %v3499 = vld [vmem:[#allocation8 + $0x8b0] sm:$0xff]
      %v3500 = vld [vmem:[#allocation8 + $0x8b8] sm:$0xff]
      %v3501 = vld [vmem:[#allocation8 + $0x8c0] sm:$0xff]
      %v3502 = vld [vmem:[#allocation8 + $0x8c8] sm:$0xff]
      %v3503 = vld [vmem:[#allocation8 + $0x8d0] sm:$0xff]
      %v3504 = vld [vmem:[#allocation8 + $0x8d8] sm:$0xff]
      %v3505 = vld [vmem:[#allocation8 + $0x8e0] sm:$0xff]
      %v3506 = vld [vmem:[#allocation8 + $0x8e8] sm:$0xff]
      %v3507 = vld [vmem:[#allocation8 + $0x8f0] sm:$0xff]
      %v3508 = vld [vmem:[#allocation8 + $0x8f8] sm:$0xff]
      %v3509 = vld [vmem:[#allocation8 + $0x900] sm:$0xff]
      %v3510 = vld [vmem:[#allocation8 + $0x908] sm:$0xff]
      %v3511 = vld [vmem:[#allocation8 + $0x910] sm:$0xff]
      %v3512 = vld [vmem:[#allocation8 + $0x918] sm:$0xff]
      %v3513 = vld [vmem:[#allocation8 + $0x920] sm:$0xff]
      %v3514 = vld [vmem:[#allocation8 + $0x928] sm:$0xff]
      %v3515 = vld [vmem:[#allocation8 + $0x930] sm:$0xff]
      %v3516 = vld [vmem:[#allocation8 + $0x938] sm:$0xff]
      %v3517 = vld [vmem:[#allocation8 + $0x940] sm:$0xff]
      %v3518 = vld [vmem:[#allocation8 + $0x948] sm:$0xff]
      %v3519 = vld [vmem:[#allocation8 + $0x950] sm:$0xff]
      %v3520 = vld [vmem:[#allocation8 + $0x958] sm:$0xff]
      %v3521 = vld [vmem:[#allocation8 + $0x960] sm:$0xff]
      %v3522 = vld [vmem:[#allocation8 + $0x968] sm:$0xff]
      %v3523 = vld [vmem:[#allocation8 + $0x970] sm:$0xff]
      %v3524 = vld [vmem:[#allocation8 + $0x978] sm:$0xff]
      %v3525 = vld [vmem:[#allocation8 + $0x980] sm:$0xff]
      %v3526 = vld [vmem:[#allocation8 + $0x988] sm:$0xff]
      %v3527 = vld [vmem:[#allocation8 + $0x990] sm:$0xff]
      %v3528 = vld [vmem:[#allocation8 + $0x998] sm:$0xff]
      %v3529 = vld [vmem:[#allocation8 + $0x9a0] sm:$0xff]
      %v3530 = vld [vmem:[#allocation8 + $0x9a8] sm:$0xff]
      %v3531 = vld [vmem:[#allocation8 + $0x9b0] sm:$0xff]
      %v3532 = vld [vmem:[#allocation8 + $0x9b8] sm:$0xff]
      %v3533 = vld [vmem:[#allocation8 + $0x9c0] sm:$0xff]
      %v3534 = vld [vmem:[#allocation8 + $0x9c8] sm:$0xff]
      %v3535 = vld [vmem:[#allocation8 + $0x9d0] sm:$0xff]
      %v3536 = vld [vmem:[#allocation8 + $0x9d8] sm:$0xff]
      %v3537 = vld [vmem:[#allocation8 + $0x9e0] sm:$0xff]
      %v3538 = vld [vmem:[#allocation8 + $0x9e8] sm:$0xff]
      %v3539 = vld [vmem:[#allocation8 + $0x9f0] sm:$0xff]
      %v3540 = vld [vmem:[#allocation8 + $0x9f8] sm:$0xff]
      %v3541 = vld [vmem:[#allocation8 + $0xa00] sm:$0xff]
      %v3542 = vld [vmem:[#allocation8 + $0xa08] sm:$0xff]
      %v3543 = vld [vmem:[#allocation8 + $0xa10] sm:$0xff]
      %v3544 = vld [vmem:[#allocation8 + $0xa18] sm:$0xff]
      %v3545 = vld [vmem:[#allocation8 + $0xa20] sm:$0xff]
      %v3546 = vld [vmem:[#allocation8 + $0xa28] sm:$0xff]
      %v3547 = vld [vmem:[#allocation8 + $0xa30] sm:$0xff]
      %v3548 = vld [vmem:[#allocation8 + $0xa38] sm:$0xff]
      %v3549 = vld [vmem:[#allocation8 + $0xa40] sm:$0xff]
      %v3550 = vld [vmem:[#allocation8 + $0xa48] sm:$0xff]
      %v3551 = vld [vmem:[#allocation8 + $0xa50] sm:$0xff]
      %v3552 = vld [vmem:[#allocation8 + $0xa58] sm:$0xff]
      %v3553 = vld [vmem:[#allocation8 + $0xa60] sm:$0xff]
      %v3554 = vld [vmem:[#allocation8 + $0xa68] sm:$0xff]
      %v3555 = vld [vmem:[#allocation8 + $0xa70] sm:$0xff]
      %v3556 = vld [vmem:[#allocation8 + $0xa78] sm:$0xff]
      %v3557 = vld [vmem:[#allocation8 + $0xa80] sm:$0xff]
      %v3558 = vld [vmem:[#allocation8 + $0xa88] sm:$0xff]
      %v3559 = vld [vmem:[#allocation8 + $0xa90] sm:$0xff]
      %v3560 = vld [vmem:[#allocation8 + $0xa98] sm:$0xff]
      %v3561 = vld [vmem:[#allocation8 + $0xaa0] sm:$0xff]
      %v3562 = vld [vmem:[#allocation8 + $0xaa8] sm:$0xff]
      %v3563 = vld [vmem:[#allocation8 + $0xab0] sm:$0xff]
      %v3564 = vld [vmem:[#allocation8 + $0xab8] sm:$0xff]
      %v3565 = vld [vmem:[#allocation8 + $0xac0] sm:$0xff]
      %v3566 = vld [vmem:[#allocation8 + $0xac8] sm:$0xff]
      %v3567 = vld [vmem:[#allocation8 + $0xad0] sm:$0xff]
      %v3568 = vld [vmem:[#allocation8 + $0xad8] sm:$0xff]
      %v3569 = vld [vmem:[#allocation8 + $0xae0] sm:$0xff]
      %v3570 = vld [vmem:[#allocation8 + $0xae8] sm:$0xff]
      %v3571 = vld [vmem:[#allocation8 + $0xaf0] sm:$0xff]
      %v3572 = vld [vmem:[#allocation8 + $0xaf8] sm:$0xff]
      %v3573 = vld [vmem:[#allocation8 + $0xb00] sm:$0xff]
      %v3574 = vld [vmem:[#allocation8 + $0xb08] sm:$0xff]
      %v3575 = vld [vmem:[#allocation8 + $0xb10] sm:$0xff]
      %v3576 = vld [vmem:[#allocation8 + $0xb18] sm:$0xff]
      %v3577 = vld [vmem:[#allocation8 + $0xb20] sm:$0xff]
      %v3578 = vld [vmem:[#allocation8 + $0xb28] sm:$0xff]
      %v3579 = vld [vmem:[#allocation8 + $0xb30] sm:$0xff]
      %v3580 = vld [vmem:[#allocation8 + $0xb38] sm:$0xff]
      %v3581 = vld [vmem:[#allocation8 + $0xb40] sm:$0xff]
      %v3582 = vld [vmem:[#allocation8 + $0xb48] sm:$0xff]
      %v3583 = vld [vmem:[#allocation8 + $0xb50] sm:$0xff]
      %v3584 = vld [vmem:[#allocation8 + $0xb58] sm:$0xff]
      %v3585 = vld [vmem:[#allocation8 + $0xb60] sm:$0xff]
      %v3586 = vld [vmem:[#allocation8 + $0xb68] sm:$0xff]
      %v3587 = vld [vmem:[#allocation8 + $0xb70] sm:$0xff]
      %v3588 = vld [vmem:[#allocation8 + $0xb78] sm:$0xff]
      %v3589 = vld [vmem:[#allocation8 + $0xb80] sm:$0xff]
      %v3590 = vld [vmem:[#allocation8 + $0xb88] sm:$0xff]
      %v3591 = vld [vmem:[#allocation8 + $0xb90] sm:$0xff]
      %v3592 = vld [vmem:[#allocation8 + $0xb98] sm:$0xff]
      %v3593 = vld [vmem:[#allocation8 + $0xba0] sm:$0xff]
      %v3594 = vld [vmem:[#allocation8 + $0xba8] sm:$0xff]
      %v3595 = vld [vmem:[#allocation8 + $0xbb0] sm:$0xff]
      %v3596 = vld [vmem:[#allocation8 + $0xbb8] sm:$0xff]
      %v3597 = vld [vmem:[#allocation8 + $0xbc0] sm:$0xff]
      %v3598 = vld [vmem:[#allocation8 + $0xbc8] sm:$0xff]
      %v3599 = vld [vmem:[#allocation8 + $0xbd0] sm:$0xff]
      %v3600 = vld [vmem:[#allocation8 + $0xbd8] sm:$0xff]
      %v3601 = vld [vmem:[#allocation8 + $0xbe0] sm:$0xff]
      %v3602 = vld [vmem:[#allocation8 + $0xbe8] sm:$0xff]
      %v3603 = vld [vmem:[#allocation8 + $0xbf0] sm:$0xff]
      %v3604 = vld [vmem:[#allocation8 + $0xbf8] sm:$0xff]
      %v3605 = vld [vmem:[#allocation8 + $0xc00] sm:$0xff]
      %v3606 = vld [vmem:[#allocation8 + $0xc08] sm:$0xff]
      %v3607 = vld [vmem:[#allocation8 + $0xc10] sm:$0xff]
      %v3608 = vld [vmem:[#allocation8 + $0xc18] sm:$0xff]
      %v3609 = vld [vmem:[#allocation8 + $0xc20] sm:$0xff]
      %v3610 = vld [vmem:[#allocation8 + $0xc28] sm:$0xff]
      %v3611 = vld [vmem:[#allocation8 + $0xc30] sm:$0xff]
      %v3612 = vld [vmem:[#allocation8 + $0xc38] sm:$0xff]
      %v3613 = vld [vmem:[#allocation8 + $0xc40] sm:$0xff]
      %v3614 = vld [vmem:[#allocation8 + $0xc48] sm:$0xff]
      %v3615 = vld [vmem:[#allocation8 + $0xc50] sm:$0xff]
      %v3616 = vld [vmem:[#allocation8 + $0xc58] sm:$0xff]
      %v3617 = vld [vmem:[#allocation8 + $0xc60] sm:$0xff]
      %v3618 = vld [vmem:[#allocation8 + $0xc68] sm:$0xff]
      %v3619 = vld [vmem:[#allocation8 + $0xc70] sm:$0xff]
      %v3620 = vld [vmem:[#allocation8 + $0xc78] sm:$0xff]
      %v3621 = vld [vmem:[#allocation8 + $0xc80] sm:$0xff]
      %v3622 = vld [vmem:[#allocation8 + $0xc88] sm:$0xff]
      %v3623 = vld [vmem:[#allocation8 + $0xc90] sm:$0xff]
      %v3624 = vld [vmem:[#allocation8 + $0xc98] sm:$0xff]
      %v3625 = vld [vmem:[#allocation8 + $0xca0] sm:$0xff]
      %v3626 = vld [vmem:[#allocation8 + $0xca8] sm:$0xff]
      %v3627 = vld [vmem:[#allocation8 + $0xcb0] sm:$0xff]
      %v3628 = vld [vmem:[#allocation8 + $0xcb8] sm:$0xff]
      %v3629 = vld [vmem:[#allocation8 + $0xcc0] sm:$0xff]
      %v3630 = vld [vmem:[#allocation8 + $0xcc8] sm:$0xff]
      %v3631 = vld [vmem:[#allocation8 + $0xcd0] sm:$0xff]
      %v3632 = vld [vmem:[#allocation8 + $0xcd8] sm:$0xff]
      %v3633 = vld [vmem:[#allocation8 + $0xce0] sm:$0xff]
      %v3634 = vld [vmem:[#allocation8 + $0xce8] sm:$0xff]
      %v3635 = vld [vmem:[#allocation8 + $0xcf0] sm:$0xff]
      %v3636 = vld [vmem:[#allocation8 + $0xcf8] sm:$0xff]
      %v3637 = vld [vmem:[#allocation8 + $0xd00] sm:$0xff]
      %v3638 = vld [vmem:[#allocation8 + $0xd08] sm:$0xff]
      %v3639 = vld [vmem:[#allocation8 + $0xd10] sm:$0xff]
      %v3640 = vld [vmem:[#allocation8 + $0xd18] sm:$0xff]
      %v3641 = vld [vmem:[#allocation8 + $0xd20] sm:$0xff]
      %v3642 = vld [vmem:[#allocation8 + $0xd28] sm:$0xff]
      %v3643 = vld [vmem:[#allocation8 + $0xd30] sm:$0xff]
      %v3644 = vld [vmem:[#allocation8 + $0xd38] sm:$0xff]
      %v3645 = vld [vmem:[#allocation8 + $0xd40] sm:$0xff]
      %v3646 = vld [vmem:[#allocation8 + $0xd48] sm:$0xff]
      %v3647 = vld [vmem:[#allocation8 + $0xd50] sm:$0xff]
      %v3648 = vld [vmem:[#allocation8 + $0xd58] sm:$0xff]
      %v3649 = vld [vmem:[#allocation8 + $0xd60] sm:$0xff]
      %v3650 = vld [vmem:[#allocation8 + $0xd68] sm:$0xff]
      %v3651 = vld [vmem:[#allocation8 + $0xd70] sm:$0xff]
      %v3652 = vld [vmem:[#allocation8 + $0xd78] sm:$0xff]
      %v3653 = vld [vmem:[#allocation8 + $0xd80] sm:$0xff]
      %v3654 = vld [vmem:[#allocation8 + $0xd88] sm:$0xff]
      %v3655 = vld [vmem:[#allocation8 + $0xd90] sm:$0xff]
      %v3656 = vld [vmem:[#allocation8 + $0xd98] sm:$0xff]
      %v3657 = vld [vmem:[#allocation8 + $0xda0] sm:$0xff]
      %v3658 = vld [vmem:[#allocation8 + $0xda8] sm:$0xff]
      %v3659 = vld [vmem:[#allocation8 + $0xdb0] sm:$0xff]
      %v3660 = vld [vmem:[#allocation8 + $0xdb8] sm:$0xff]
      %v3661 = vld [vmem:[#allocation8 + $0xdc0] sm:$0xff]
      %v3662 = vld [vmem:[#allocation8 + $0xdc8] sm:$0xff]
      %v3663 = vld [vmem:[#allocation8 + $0xdd0] sm:$0xff]
      %v3664 = vld [vmem:[#allocation8 + $0xdd8] sm:$0xff]
      %v3665 = vld [vmem:[#allocation8 + $0xde0] sm:$0xff]
      %v3666 = vld [vmem:[#allocation8 + $0xde8] sm:$0xff]
      %v3667 = vld [vmem:[#allocation8 + $0xdf0] sm:$0xff]
      %v3668 = vld [vmem:[#allocation8 + $0xdf8] sm:$0xff]
      %v3669 = vld [vmem:[#allocation8 + $0xe00] sm:$0xff]
      %v3670 = vld [vmem:[#allocation8 + $0xe08] sm:$0xff]
      %v3671 = vld [vmem:[#allocation8 + $0xe10] sm:$0xff]
      %v3672 = vld [vmem:[#allocation8 + $0xe18] sm:$0xff]
      %v3673 = vld [vmem:[#allocation8 + $0xe20] sm:$0xff]
      %v3674 = vld [vmem:[#allocation8 + $0xe28] sm:$0xff]
      %v3675 = vld [vmem:[#allocation8 + $0xe30] sm:$0xff]
      %v3676 = vld [vmem:[#allocation8 + $0xe38] sm:$0xff]
      %v3677 = vld [vmem:[#allocation8 + $0xe40] sm:$0xff]
      %v3678 = vld [vmem:[#allocation8 + $0xe48] sm:$0xff]
      %v3679 = vld [vmem:[#allocation8 + $0xe50] sm:$0xff]
      %v3680 = vld [vmem:[#allocation8 + $0xe58] sm:$0xff]
      %v3681 = vld [vmem:[#allocation8 + $0xe60] sm:$0xff]
      %v3682 = vld [vmem:[#allocation8 + $0xe68] sm:$0xff]
      %v3683 = vld [vmem:[#allocation8 + $0xe70] sm:$0xff]
      %v3684 = vld [vmem:[#allocation8 + $0xe78] sm:$0xff]
      %v3685 = vld [vmem:[#allocation8 + $0xe80] sm:$0xff]
      %v3686 = vld [vmem:[#allocation8 + $0xe88] sm:$0xff]
      %v3687 = vld [vmem:[#allocation8 + $0xe90] sm:$0xff]
      %v3688 = vld [vmem:[#allocation8 + $0xe98] sm:$0xff]
      %v3689 = vld [vmem:[#allocation8 + $0xea0] sm:$0xff]
      %v3690 = vld [vmem:[#allocation8 + $0xea8] sm:$0xff]
      %v3691 = vld [vmem:[#allocation8 + $0xeb0] sm:$0xff]
      %v3692 = vld [vmem:[#allocation8 + $0xeb8] sm:$0xff]
      %v3693 = vld [vmem:[#allocation8 + $0xec0] sm:$0xff]
      %v3694 = vld [vmem:[#allocation8 + $0xec8] sm:$0xff]
      %v3695 = vld [vmem:[#allocation8 + $0xed0] sm:$0xff]
      %v3696 = vld [vmem:[#allocation8 + $0xed8] sm:$0xff]
      %v3697 = vld [vmem:[#allocation8 + $0xee0] sm:$0xff]
      %v3698 = vld [vmem:[#allocation8 + $0xee8] sm:$0xff]
      %v3699 = vld [vmem:[#allocation8 + $0xef0] sm:$0xff]
      %v3700 = vld [vmem:[#allocation8 + $0xef8] sm:$0xff]
      %v3701 = vld [vmem:[#allocation8 + $0xf00] sm:$0xff]
      %v3702 = vld [vmem:[#allocation8 + $0xf08] sm:$0xff]
      %v3703 = vld [vmem:[#allocation8 + $0xf10] sm:$0xff]
      %v3704 = vld [vmem:[#allocation8 + $0xf18] sm:$0xff]
      %v3705 = vld [vmem:[#allocation8 + $0xf20] sm:$0xff]
      %v3706 = vld [vmem:[#allocation8 + $0xf28] sm:$0xff]
      %v3707 = vld [vmem:[#allocation8 + $0xf30] sm:$0xff]
      %v3708 = vld [vmem:[#allocation8 + $0xf38] sm:$0xff]
      %v3709 = vld [vmem:[#allocation8 + $0xf40] sm:$0xff]
      %v3710 = vld [vmem:[#allocation8 + $0xf48] sm:$0xff]
      %v3711 = vld [vmem:[#allocation8 + $0xf50] sm:$0xff]
      %v3712 = vld [vmem:[#allocation8 + $0xf58] sm:$0xff]
      %v3713 = vld [vmem:[#allocation8 + $0xf60] sm:$0xff]
      %v3714 = vld [vmem:[#allocation8 + $0xf68] sm:$0xff]
      %v3715 = vld [vmem:[#allocation8 + $0xf70] sm:$0xff]
      %v3716 = vld [vmem:[#allocation8 + $0xf78] sm:$0xff]
      %v3717 = vld [vmem:[#allocation8 + $0xf80] sm:$0xff]
      %v3718 = vld [vmem:[#allocation8 + $0xf88] sm:$0xff]
      %v3719 = vld [vmem:[#allocation8 + $0xf90] sm:$0xff]
      %v3720 = vld [vmem:[#allocation8 + $0xf98] sm:$0xff]
      %v3721 = vld [vmem:[#allocation8 + $0xfa0] sm:$0xff]
      %v3722 = vld [vmem:[#allocation8 + $0xfa8] sm:$0xff]
      %v3723 = vld [vmem:[#allocation8 + $0xfb0] sm:$0xff]
      %v3724 = vld [vmem:[#allocation8 + $0xfb8] sm:$0xff]
      %v3725 = vld [vmem:[#allocation8 + $0xfc0] sm:$0xff]
      %v3726 = vld [vmem:[#allocation8 + $0xfc8] sm:$0xff]
      %v3727 = vld [vmem:[#allocation8 + $0xfd0] sm:$0xff]
      %v3728 = vld [vmem:[#allocation8 + $0xfd8] sm:$0xff]
      %v3729 = vld [vmem:[#allocation8 + $0xfe0] sm:$0xff]
      %v3730 = vld [vmem:[#allocation8 + $0xfe8] sm:$0xff]
      %v3731 = vld [vmem:[#allocation8 + $0xff0] sm:$0xff]
      %v3732 = vld [vmem:[#allocation8 + $0xff8] sm:$0xff]
      %v3733 = vld [vmem:[#allocation10] sm:$0xf]
      %v3735 = vlaneseq
      %v3736 = vshrl.u32 %v3735, 7
      %v3737 = vsub.s32 0, %v3736
      %v3738 = vrot.slane %v3733, %v3737
      %v3739 = vlaneseq
      %v3740 = vshrl.u32 %v3739, 7
      %v3741 = vsub.s32 1, %v3740
      %v3742 = vrot.slane %v3733, %v3741
      %v3743 = vlaneseq
      %v3744 = vshrl.u32 %v3743, 7
      %v3745 = vsub.s32 2, %v3744
      %v3746 = vrot.slane %v3733, %v3745
      %v3747 = vlaneseq
      %v3748 = vshrl.u32 %v3747, 7
      %v3749 = vsub.s32 3, %v3748
      %v3750 = vrot.slane %v3733, %v3749
      %3755 = vmatprep.subr.mxu0 %v3222
      %3756 = vmatpush1.msra.mxu0 %v3221
      %3757 = vmatprep.subr.mxu0 %v3226
      %3758 = vmatpush1.msra.mxu0 %v3225
      %3759 = vmatprep.subr.mxu0 %v3230
      %3760 = vmatpush1.msra.mxu0 %v3229
      %3761 = vmatprep.subr.mxu0 %v3234
      %3762 = vmatpush1.msra.mxu0 %v3233
      %3763 = vmatprep.subr.mxu0 %v3238
      %3764 = vmatpush1.msra.mxu0 %v3237
      %3765 = vmatprep.subr.mxu0 %v3242
      %3766 = vmatpush1.msra.mxu0 %v3241
      %3767 = vmatprep.subr.mxu0 %v3246
      %3768 = vmatpush1.msra.mxu0 %v3245
      %3769 = vmatprep.subr.mxu0 %v3250
      %3770 = vmatpush1.msra.mxu0 %v3249
      %3771 = vmatprep.subr.mxu0 %v3254
      %3772 = vmatpush1.msra.mxu0 %v3253
      %3773 = vmatprep.subr.mxu0 %v3258
      %3774 = vmatpush1.msra.mxu0 %v3257
      %3775 = vmatprep.subr.mxu0 %v3262
      %3776 = vmatpush1.msra.mxu0 %v3261
      %3777 = vmatprep.subr.mxu0 %v3266
      %3778 = vmatpush1.msra.mxu0 %v3265
      %3779 = vmatprep.subr.mxu0 %v3270
      %3780 = vmatpush1.msra.mxu0 %v3269
      %3781 = vmatprep.subr.mxu0 %v3274
      %3782 = vmatpush1.msra.mxu0 %v3273
      %3783 = vmatprep.subr.mxu0 %v3278
      %3784 = vmatpush1.msra.mxu0 %v3277
      %3785 = vmatprep.subr.mxu0 %v3282
      %3786 = vmatpush1.msra.mxu0 %v3281
      %3787 = vmatprep.subr.mxu0 %v3286
      %3788 = vmatpush1.msra.mxu0 %v3285
      %3789 = vmatprep.subr.mxu0 %v3290
      %3790 = vmatpush1.msra.mxu0 %v3289
      %3791 = vmatprep.subr.mxu0 %v3294
      %3792 = vmatpush1.msra.mxu0 %v3293
      %3793 = vmatprep.subr.mxu0 %v3298
      %3794 = vmatpush1.msra.mxu0 %v3297
      %3795 = vmatprep.subr.mxu0 %v3302
      %3796 = vmatpush1.msra.mxu0 %v3301
      %3797 = vmatprep.subr.mxu0 %v3306
      %3798 = vmatpush1.msra.mxu0 %v3305
      %3799 = vmatprep.subr.mxu0 %v3310
      %3800 = vmatpush1.msra.mxu0 %v3309
      %3801 = vmatprep.subr.mxu0 %v3314
      %3802 = vmatpush1.msra.mxu0 %v3313
      %3803 = vmatprep.subr.mxu0 %v3318
      %3804 = vmatpush1.msra.mxu0 %v3317
      %3805 = vmatprep.subr.mxu0 %v3322
      %3806 = vmatpush1.msra.mxu0 %v3321
      %3807 = vmatprep.subr.mxu0 %v3326
      %3808 = vmatpush1.msra.mxu0 %v3325
      %3809 = vmatprep.subr.mxu0 %v3330
      %3810 = vmatpush1.msra.mxu0 %v3329
      %3811 = vmatprep.subr.mxu0 %v3334
      %3812 = vmatpush1.msra.mxu0 %v3333
      %3813 = vmatprep.subr.mxu0 %v3338
      %3814 = vmatpush1.msra.mxu0 %v3337
      %3815 = vmatprep.subr.mxu0 %v3342
      %3816 = vmatpush1.msra.mxu0 %v3341
      %3817 = vmatprep.subr.mxu0 %v3346
      %3818 = vmatpush1.msra.mxu0 %v3345
      %3819 = vmatprep.mubr.f32.mxu0 %v3214
      %3820 = vmatmul.mubr.f32.gmra.mrb[0].mxu0 %v3213
      %v3821 = vpop.f32.mrb[0].mxu0
      %v3822 = vadd.f32 %v3738, %v3821
      %v3823 = vpop.f32.mrb[0].mxu0
      %v3824 = vadd.f32 %v3742, %v3823
      %3825 = vdwg.mxu0
      %3826 = vmatprep.subr.mxu0 %v3350
      %3827 = vmatpush1.msra.mxu0 %v3349
      %3828 = vmatprep.subr.mxu0 %v3354
      %3829 = vmatpush1.msra.mxu0 %v3353
      %3830 = vmatprep.subr.mxu0 %v3358
      %3831 = vmatpush1.msra.mxu0 %v3357
      %3832 = vmatprep.subr.mxu0 %v3362
      %3833 = vmatpush1.msra.mxu0 %v3361
      %3834 = vmatprep.subr.mxu0 %v3366
      %3835 = vmatpush1.msra.mxu0 %v3365
      %3836 = vmatprep.subr.mxu0 %v3370
      %3837 = vmatpush1.msra.mxu0 %v3369
      %3838 = vmatprep.subr.mxu0 %v3374
      %3839 = vmatpush1.msra.mxu0 %v3373
      %3840 = vmatprep.subr.mxu0 %v3378
      %3841 = vmatpush1.msra.mxu0 %v3377
      %3842 = vmatprep.subr.mxu0 %v3382
      %3843 = vmatpush1.msra.mxu0 %v3381
      %3844 = vmatprep.subr.mxu0 %v3386
      %3845 = vmatpush1.msra.mxu0 %v3385
      %3846 = vmatprep.subr.mxu0 %v3390
      %3847 = vmatpush1.msra.mxu0 %v3389
      %3848 = vmatprep.subr.mxu0 %v3394
      %3849 = vmatpush1.msra.mxu0 %v3393
      %3850 = vmatprep.subr.mxu0 %v3398
      %3851 = vmatpush1.msra.mxu0 %v3397
      %3852 = vmatprep.subr.mxu0 %v3402
      %3853 = vmatpush1.msra.mxu0 %v3401
      %3854 = vmatprep.subr.mxu0 %v3406
      %3855 = vmatpush1.msra.mxu0 %v3405
      %3856 = vmatprep.subr.mxu0 %v3410
      %3857 = vmatpush1.msra.mxu0 %v3409
      %3858 = vmatprep.subr.mxu0 %v3414
      %3859 = vmatpush1.msra.mxu0 %v3413
      %3860 = vmatprep.subr.mxu0 %v3418
      %3861 = vmatpush1.msra.mxu0 %v3417
      %3862 = vmatprep.subr.mxu0 %v3422
      %3863 = vmatpush1.msra.mxu0 %v3421
      %3864 = vmatprep.subr.mxu0 %v3426
      %3865 = vmatpush1.msra.mxu0 %v3425
      %3866 = vmatprep.subr.mxu0 %v3430
      %3867 = vmatpush1.msra.mxu0 %v3429
      %3868 = vmatprep.subr.mxu0 %v3434
      %3869 = vmatpush1.msra.mxu0 %v3433
      %3870 = vmatprep.subr.mxu0 %v3438
      %3871 = vmatpush1.msra.mxu0 %v3437
      %3872 = vmatprep.subr.mxu0 %v3442
      %3873 = vmatpush1.msra.mxu0 %v3441
      %3874 = vmatprep.subr.mxu0 %v3446
      %3875 = vmatpush1.msra.mxu0 %v3445
      %3876 = vmatprep.subr.mxu0 %v3450
      %3877 = vmatpush1.msra.mxu0 %v3449
      %3878 = vmatprep.subr.mxu0 %v3454
      %3879 = vmatpush1.msra.mxu0 %v3453
      %3880 = vmatprep.subr.mxu0 %v3458
      %3881 = vmatpush1.msra.mxu0 %v3457
      %3882 = vmatprep.subr.mxu0 %v3462
      %3883 = vmatpush1.msra.mxu0 %v3461
      %3884 = vmatprep.subr.mxu0 %v3466
      %3885 = vmatpush1.msra.mxu0 %v3465
      %3886 = vmatprep.subr.mxu0 %v3470
      %3887 = vmatpush1.msra.mxu0 %v3469
      %3888 = vmatprep.subr.mxu0 %v3474
      %3889 = vmatpush1.msra.mxu0 %v3473
      %3890 = vmatprep.mubr.f32.mxu0 %v3216
      %3891 = vmatmul.mubr.f32.gmra.mrb[0].mxu0 %v3215
      %v3892 = vpop.f32.mrb[0].mxu0
      %v3893 = vadd.f32 %v3822, %v3892
      %v3894 = vpop.f32.mrb[0].mxu0
      %v3895 = vadd.f32 %v3824, %v3894
      %3896 = vdwg.mxu0
      %3897 = vmatprep.subr.mxu0 %v3478
      %3898 = vmatpush1.msra.mxu0 %v3477
      %3899 = vmatprep.subr.mxu0 %v3482
      %3900 = vmatpush1.msra.mxu0 %v3481
      %3901 = vmatprep.subr.mxu0 %v3486
      %3902 = vmatpush1.msra.mxu0 %v3485
      %3903 = vmatprep.subr.mxu0 %v3490
      %3904 = vmatpush1.msra.mxu0 %v3489
      %3905 = vmatprep.subr.mxu0 %v3494
      %3906 = vmatpush1.msra.mxu0 %v3493
      %3907 = vmatprep.subr.mxu0 %v3498
      %3908 = vmatpush1.msra.mxu0 %v3497
      %3909 = vmatprep.subr.mxu0 %v3502
      %3910 = vmatpush1.msra.mxu0 %v3501
      %3911 = vmatprep.subr.mxu0 %v3506
      %3912 = vmatpush1.msra.mxu0 %v3505
      %3913 = vmatprep.subr.mxu0 %v3510
      %3914 = vmatpush1.msra.mxu0 %v3509
      %3915 = vmatprep.subr.mxu0 %v3514
      %3916 = vmatpush1.msra.mxu0 %v3513
      %3917 = vmatprep.subr.mxu0 %v3518
      %3918 = vmatpush1.msra.mxu0 %v3517
      %3919 = vmatprep.subr.mxu0 %v3522
      %3920 = vmatpush1.msra.mxu0 %v3521
      %3921 = vmatprep.subr.mxu0 %v3526
      %3922 = vmatpush1.msra.mxu0 %v3525
      %3923 = vmatprep.subr.mxu0 %v3530
      %3924 = vmatpush1.msra.mxu0 %v3529
      %3925 = vmatprep.subr.mxu0 %v3534
      %3926 = vmatpush1.msra.mxu0 %v3533
      %3927 = vmatprep.subr.mxu0 %v3538
      %3928 = vmatpush1.msra.mxu0 %v3537
      %3929 = vmatprep.subr.mxu0 %v3542
      %3930 = vmatpush1.msra.mxu0 %v3541
      %3931 = vmatprep.subr.mxu0 %v3546
      %3932 = vmatpush1.msra.mxu0 %v3545
      %3933 = vmatprep.subr.mxu0 %v3550
      %3934 = vmatpush1.msra.mxu0 %v3549
      %3935 = vmatprep.subr.mxu0 %v3554
      %3936 = vmatpush1.msra.mxu0 %v3553
      %3937 = vmatprep.subr.mxu0 %v3558
      %3938 = vmatpush1.msra.mxu0 %v3557
      %3939 = vmatprep.subr.mxu0 %v3562
      %3940 = vmatpush1.msra.mxu0 %v3561
      %3941 = vmatprep.subr.mxu0 %v3566
      %3942 = vmatpush1.msra.mxu0 %v3565
      %3943 = vmatprep.subr.mxu0 %v3570
      %3944 = vmatpush1.msra.mxu0 %v3569
      %3945 = vmatprep.subr.mxu0 %v3574
      %3946 = vmatpush1.msra.mxu0 %v3573
      %3947 = vmatprep.subr.mxu0 %v3578
      %3948 = vmatpush1.msra.mxu0 %v3577
      %3949 = vmatprep.subr.mxu0 %v3582
      %3950 = vmatpush1.msra.mxu0 %v3581
      %3951 = vmatprep.subr.mxu0 %v3586
      %3952 = vmatpush1.msra.mxu0 %v3585
      %3953 = vmatprep.subr.mxu0 %v3590
      %3954 = vmatpush1.msra.mxu0 %v3589
      %3955 = vmatprep.subr.mxu0 %v3594
      %3956 = vmatpush1.msra.mxu0 %v3593
      %3957 = vmatprep.subr.mxu0 %v3598
      %3958 = vmatpush1.msra.mxu0 %v3597
      %3959 = vmatprep.subr.mxu0 %v3602
      %3960 = vmatpush1.msra.mxu0 %v3601
      %3961 = vmatprep.mubr.f32.mxu0 %v3218
      %3962 = vmatmul.mubr.f32.gmra.mrb[0].mxu0 %v3217
      %v3963 = vpop.f32.mrb[0].mxu0
      %v3964 = vadd.f32 %v3893, %v3963
      %v3965 = vpop.f32.mrb[0].mxu0
      %v3966 = vadd.f32 %v3895, %v3965
      %3967 = vdwg.mxu0
      %3968 = vmatprep.subr.mxu0 %v3606
      %3969 = vmatpush1.msra.mxu0 %v3605
      %3970 = vmatprep.subr.mxu0 %v3610
      %3971 = vmatpush1.msra.mxu0 %v3609
      %3972 = vmatprep.subr.mxu0 %v3614
      %3973 = vmatpush1.msra.mxu0 %v3613
      %3974 = vmatprep.subr.mxu0 %v3618
      %3975 = vmatpush1.msra.mxu0 %v3617
      %3976 = vmatprep.subr.mxu0 %v3622
      %3977 = vmatpush1.msra.mxu0 %v3621
      %3978 = vmatprep.subr.mxu0 %v3626
      %3979 = vmatpush1.msra.mxu0 %v3625
      %3980 = vmatprep.subr.mxu0 %v3630
      %3981 = vmatpush1.msra.mxu0 %v3629
      %3982 = vmatprep.subr.mxu0 %v3634
      %3983 = vmatpush1.msra.mxu0 %v3633
      %3984 = vmatprep.subr.mxu0 %v3638
      %3985 = vmatpush1.msra.mxu0 %v3637
      %3986 = vmatprep.subr.mxu0 %v3642
      %3987 = vmatpush1.msra.mxu0 %v3641
      %3988 = vmatprep.subr.mxu0 %v3646
      %3989 = vmatpush1.msra.mxu0 %v3645
      %3990 = vmatprep.subr.mxu0 %v3650
      %3991 = vmatpush1.msra.mxu0 %v3649
      %3992 = vmatprep.subr.mxu0 %v3654
      %3993 = vmatpush1.msra.mxu0 %v3653
      %3994 = vmatprep.subr.mxu0 %v3658
      %3995 = vmatpush1.msra.mxu0 %v3657
      %3996 = vmatprep.subr.mxu0 %v3662
      %3997 = vmatpush1.msra.mxu0 %v3661
      %3998 = vmatprep.subr.mxu0 %v3666
      %3999 = vmatpush1.msra.mxu0 %v3665
      %4000 = vmatprep.subr.mxu0 %v3670
      %4001 = vmatpush1.msra.mxu0 %v3669
      %4002 = vmatprep.subr.mxu0 %v3674
      %4003 = vmatpush1.msra.mxu0 %v3673
      %4004 = vmatprep.subr.mxu0 %v3678
      %4005 = vmatpush1.msra.mxu0 %v3677
      %4006 = vmatprep.subr.mxu0 %v3682
      %4007 = vmatpush1.msra.mxu0 %v3681
      %4008 = vmatprep.subr.mxu0 %v3686
      %4009 = vmatpush1.msra.mxu0 %v3685
      %4010 = vmatprep.subr.mxu0 %v3690
      %4011 = vmatpush1.msra.mxu0 %v3689
      %4012 = vmatprep.subr.mxu0 %v3694
      %4013 = vmatpush1.msra.mxu0 %v3693
      %4014 = vmatprep.subr.mxu0 %v3698
      %4015 = vmatpush1.msra.mxu0 %v3697
      %4016 = vmatprep.subr.mxu0 %v3702
      %4017 = vmatpush1.msra.mxu0 %v3701
      %4018 = vmatprep.subr.mxu0 %v3706
      %4019 = vmatpush1.msra.mxu0 %v3705
      %4020 = vmatprep.subr.mxu0 %v3710
      %4021 = vmatpush1.msra.mxu0 %v3709
      %4022 = vmatprep.subr.mxu0 %v3714
      %4023 = vmatpush1.msra.mxu0 %v3713
      %4024 = vmatprep.subr.mxu0 %v3718
      %4025 = vmatpush1.msra.mxu0 %v3717
      %4026 = vmatprep.subr.mxu0 %v3722
      %4027 = vmatpush1.msra.mxu0 %v3721
      %4028 = vmatprep.subr.mxu0 %v3726
      %4029 = vmatpush1.msra.mxu0 %v3725
      %4030 = vmatprep.subr.mxu0 %v3730
      %4031 = vmatpush1.msra.mxu0 %v3729
      %4032 = vmatprep.mubr.f32.mxu0 %v3220
      %4033 = vmatmul.mubr.f32.gmra.mrb[0].mxu0 %v3219
      %v4034 = vpop.f32.mrb[0].mxu0
      %v4035 = vadd.f32 %v3964, %v4034
      %v4036 = vpop.f32.mrb[0].mxu0
      %v4037 = vadd.f32 %v3966, %v4036
      %4038 = vdwg.mxu0
      %4039 = vmatprep.subr.mxu0 %v3224
      %4040 = vmatpush1.msra.mxu0 %v3223
      %4041 = vmatprep.subr.mxu0 %v3228
      %4042 = vmatpush1.msra.mxu0 %v3227
      %4043 = vmatprep.subr.mxu0 %v3232
      %4044 = vmatpush1.msra.mxu0 %v3231
      %4045 = vmatprep.subr.mxu0 %v3236
      %4046 = vmatpush1.msra.mxu0 %v3235
      %4047 = vmatprep.subr.mxu0 %v3240
      %4048 = vmatpush1.msra.mxu0 %v3239
      %4049 = vmatprep.subr.mxu0 %v3244
      %4050 = vmatpush1.msra.mxu0 %v3243
      %4051 = vmatprep.subr.mxu0 %v3248
      %4052 = vmatpush1.msra.mxu0 %v3247
      %4053 = vmatprep.subr.mxu0 %v3252
      %4054 = vmatpush1.msra.mxu0 %v3251
      %4055 = vmatprep.subr.mxu0 %v3256
      %4056 = vmatpush1.msra.mxu0 %v3255
      %4057 = vmatprep.subr.mxu0 %v3260
      %4058 = vmatpush1.msra.mxu0 %v3259
      %4059 = vmatprep.subr.mxu0 %v3264
      %4060 = vmatpush1.msra.mxu0 %v3263
      %4061 = vmatprep.subr.mxu0 %v3268
      %4062 = vmatpush1.msra.mxu0 %v3267
      %4063 = vmatprep.subr.mxu0 %v3272
      %4064 = vmatpush1.msra.mxu0 %v3271
      %4065 = vmatprep.subr.mxu0 %v3276
      %4066 = vmatpush1.msra.mxu0 %v3275
      %4067 = vmatprep.subr.mxu0 %v3280
      %4068 = vmatpush1.msra.mxu0 %v3279
      %4069 = vmatprep.subr.mxu0 %v3284
      %4070 = vmatpush1.msra.mxu0 %v3283
      %4071 = vmatprep.subr.mxu0 %v3288
      %4072 = vmatpush1.msra.mxu0 %v3287
      %4073 = vmatprep.subr.mxu0 %v3292
      %4074 = vmatpush1.msra.mxu0 %v3291
      %4075 = vmatprep.subr.mxu0 %v3296
      %4076 = vmatpush1.msra.mxu0 %v3295
      %4077 = vmatprep.subr.mxu0 %v3300
      %4078 = vmatpush1.msra.mxu0 %v3299
      %4079 = vmatprep.subr.mxu0 %v3304
      %4080 = vmatpush1.msra.mxu0 %v3303
      %4081 = vmatprep.subr.mxu0 %v3308
      %4082 = vmatpush1.msra.mxu0 %v3307
      %4083 = vmatprep.subr.mxu0 %v3312
      %4084 = vmatpush1.msra.mxu0 %v3311
      %4085 = vmatprep.subr.mxu0 %v3316
      %4086 = vmatpush1.msra.mxu0 %v3315
      %4087 = vmatprep.subr.mxu0 %v3320
      %4088 = vmatpush1.msra.mxu0 %v3319
      %4089 = vmatprep.subr.mxu0 %v3324
      %4090 = vmatpush1.msra.mxu0 %v3323
      %4091 = vmatprep.subr.mxu0 %v3328
      %4092 = vmatpush1.msra.mxu0 %v3327
      %4093 = vmatprep.subr.mxu0 %v3332
      %4094 = vmatpush1.msra.mxu0 %v3331
      %4095 = vmatprep.subr.mxu0 %v3336
      %4096 = vmatpush1.msra.mxu0 %v3335
      %4097 = vmatprep.subr.mxu0 %v3340
      %4098 = vmatpush1.msra.mxu0 %v3339
      %4099 = vmatprep.subr.mxu0 %v3344
      %4100 = vmatpush1.msra.mxu0 %v3343
      %4101 = vmatprep.subr.mxu0 %v3348
      %4102 = vmatpush1.msra.mxu0 %v3347
      %4103 = vmatprep.mubr.f32.mxu0 %v3214
      %4104 = vmatmul.mubr.f32.gmra.mrb[0].mxu0 %v3213
      %v4105 = vpop.f32.mrb[0].mxu0
      %v4106 = vadd.f32 %v3746, %v4105
      %v4107 = vpop.f32.mrb[0].mxu0
      %v4108 = vadd.f32 %v3750, %v4107
      %4109 = vdwg.mxu0
      %4110 = vmatprep.subr.mxu0 %v3352
      %4111 = vmatpush1.msra.mxu0 %v3351
      %4112 = vmatprep.subr.mxu0 %v3356
      %4113 = vmatpush1.msra.mxu0 %v3355
      %4114 = vmatprep.subr.mxu0 %v3360
      %4115 = vmatpush1.msra.mxu0 %v3359
      %4116 = vmatprep.subr.mxu0 %v3364
      %4117 = vmatpush1.msra.mxu0 %v3363
      %4118 = vmatprep.subr.mxu0 %v3368
      %4119 = vmatpush1.msra.mxu0 %v3367
      %4120 = vmatprep.subr.mxu0 %v3372
      %4121 = vmatpush1.msra.mxu0 %v3371
      %4122 = vmatprep.subr.mxu0 %v3376
      %4123 = vmatpush1.msra.mxu0 %v3375
      %4124 = vmatprep.subr.mxu0 %v3380
      %4125 = vmatpush1.msra.mxu0 %v3379
      %4126 = vmatprep.subr.mxu0 %v3384
      %4127 = vmatpush1.msra.mxu0 %v3383
      %4128 = vmatprep.subr.mxu0 %v3388
      %4129 = vmatpush1.msra.mxu0 %v3387
      %4130 = vmatprep.subr.mxu0 %v3392
      %4131 = vmatpush1.msra.mxu0 %v3391
      %4132 = vmatprep.subr.mxu0 %v3396
      %4133 = vmatpush1.msra.mxu0 %v3395
      %4134 = vmatprep.subr.mxu0 %v3400
      %4135 = vmatpush1.msra.mxu0 %v3399
      %4136 = vmatprep.subr.mxu0 %v3404
      %4137 = vmatpush1.msra.mxu0 %v3403
      %4138 = vmatprep.subr.mxu0 %v3408
      %4139 = vmatpush1.msra.mxu0 %v3407
      %4140 = vmatprep.subr.mxu0 %v3412
      %4141 = vmatpush1.msra.mxu0 %v3411
      %4142 = vmatprep.subr.mxu0 %v3416
      %4143 = vmatpush1.msra.mxu0 %v3415
      %4144 = vmatprep.subr.mxu0 %v3420
      %4145 = vmatpush1.msra.mxu0 %v3419
      %4146 = vmatprep.subr.mxu0 %v3424
      %4147 = vmatpush1.msra.mxu0 %v3423
      %4148 = vmatprep.subr.mxu0 %v3428
      %4149 = vmatpush1.msra.mxu0 %v3427
      %4150 = vmatprep.subr.mxu0 %v3432
      %4151 = vmatpush1.msra.mxu0 %v3431
      %4152 = vmatprep.subr.mxu0 %v3436
      %4153 = vmatpush1.msra.mxu0 %v3435
      %4154 = vmatprep.subr.mxu0 %v3440
      %4155 = vmatpush1.msra.mxu0 %v3439
      %4156 = vmatprep.subr.mxu0 %v3444
      %4157 = vmatpush1.msra.mxu0 %v3443
      %4158 = vmatprep.subr.mxu0 %v3448
      %4159 = vmatpush1.msra.mxu0 %v3447
      %4160 = vmatprep.subr.mxu0 %v3452
      %4161 = vmatpush1.msra.mxu0 %v3451
      %4162 = vmatprep.subr.mxu0 %v3456
      %4163 = vmatpush1.msra.mxu0 %v3455
      %4164 = vmatprep.subr.mxu0 %v3460
      %4165 = vmatpush1.msra.mxu0 %v3459
      %4166 = vmatprep.subr.mxu0 %v3464
      %4167 = vmatpush1.msra.mxu0 %v3463
      %4168 = vmatprep.subr.mxu0 %v3468
      %4169 = vmatpush1.msra.mxu0 %v3467
      %4170 = vmatprep.subr.mxu0 %v3472
      %4171 = vmatpush1.msra.mxu0 %v3471
      %4172 = vmatprep.subr.mxu0 %v3476
      %4173 = vmatpush1.msra.mxu0 %v3475
      %4174 = vmatprep.mubr.f32.mxu0 %v3216
      %4175 = vmatmul.mubr.f32.gmra.mrb[0].mxu0 %v3215
      %v4176 = vpop.f32.mrb[0].mxu0
      %v4177 = vadd.f32 %v4106, %v4176
      %v4178 = vpop.f32.mrb[0].mxu0
      %v4179 = vadd.f32 %v4108, %v4178
      %4180 = vdwg.mxu0
      %4181 = vmatprep.subr.mxu0 %v3480
      %4182 = vmatpush1.msra.mxu0 %v3479
      %4183 = vmatprep.subr.mxu0 %v3484
      %4184 = vmatpush1.msra.mxu0 %v3483
      %4185 = vmatprep.subr.mxu0 %v3488
      %4186 = vmatpush1.msra.mxu0 %v3487
      %4187 = vmatprep.subr.mxu0 %v3492
      %4188 = vmatpush1.msra.mxu0 %v3491
      %4189 = vmatprep.subr.mxu0 %v3496
      %4190 = vmatpush1.msra.mxu0 %v3495
      %4191 = vmatprep.subr.mxu0 %v3500
      %4192 = vmatpush1.msra.mxu0 %v3499
      %4193 = vmatprep.subr.mxu0 %v3504
      %4194 = vmatpush1.msra.mxu0 %v3503
      %4195 = vmatprep.subr.mxu0 %v3508
      %4196 = vmatpush1.msra.mxu0 %v3507
      %4197 = vmatprep.subr.mxu0 %v3512
      %4198 = vmatpush1.msra.mxu0 %v3511
      %4199 = vmatprep.subr.mxu0 %v3516
      %4200 = vmatpush1.msra.mxu0 %v3515
      %4201 = vmatprep.subr.mxu0 %v3520
      %4202 = vmatpush1.msra.mxu0 %v3519
      %4203 = vmatprep.subr.mxu0 %v3524
      %4204 = vmatpush1.msra.mxu0 %v3523
      %4205 = vmatprep.subr.mxu0 %v3528
      %4206 = vmatpush1.msra.mxu0 %v3527
      %4207 = vmatprep.subr.mxu0 %v3532
      %4208 = vmatpush1.msra.mxu0 %v3531
      %4209 = vmatprep.subr.mxu0 %v3536
      %4210 = vmatpush1.msra.mxu0 %v3535
      %4211 = vmatprep.subr.mxu0 %v3540
      %4212 = vmatpush1.msra.mxu0 %v3539
      %4213 = vmatprep.subr.mxu0 %v3544
      %4214 = vmatpush1.msra.mxu0 %v3543
      %4215 = vmatprep.subr.mxu0 %v3548
      %4216 = vmatpush1.msra.mxu0 %v3547
      %4217 = vmatprep.subr.mxu0 %v3552
      %4218 = vmatpush1.msra.mxu0 %v3551
      %4219 = vmatprep.subr.mxu0 %v3556
      %4220 = vmatpush1.msra.mxu0 %v3555
      %4221 = vmatprep.subr.mxu0 %v3560
      %4222 = vmatpush1.msra.mxu0 %v3559
      %4223 = vmatprep.subr.mxu0 %v3564
      %4224 = vmatpush1.msra.mxu0 %v3563
      %4225 = vmatprep.subr.mxu0 %v3568
      %4226 = vmatpush1.msra.mxu0 %v3567
      %4227 = vmatprep.subr.mxu0 %v3572
      %4228 = vmatpush1.msra.mxu0 %v3571
      %4229 = vmatprep.subr.mxu0 %v3576
      %4230 = vmatpush1.msra.mxu0 %v3575
      %4231 = vmatprep.subr.mxu0 %v3580
      %4232 = vmatpush1.msra.mxu0 %v3579
      %4233 = vmatprep.subr.mxu0 %v3584
      %4234 = vmatpush1.msra.mxu0 %v3583
      %4235 = vmatprep.subr.mxu0 %v3588
      %4236 = vmatpush1.msra.mxu0 %v3587
      %4237 = vmatprep.subr.mxu0 %v3592
      %4238 = vmatpush1.msra.mxu0 %v3591
      %4239 = vmatprep.subr.mxu0 %v3596
      %4240 = vmatpush1.msra.mxu0 %v3595
      %4241 = vmatprep.subr.mxu0 %v3600
      %4242 = vmatpush1.msra.mxu0 %v3599
      %4243 = vmatprep.subr.mxu0 %v3604
      %4244 = vmatpush1.msra.mxu0 %v3603
      %4245 = vmatprep.mubr.f32.mxu0 %v3218
      %4246 = vmatmul.mubr.f32.gmra.mrb[0].mxu0 %v3217
      %v4247 = vpop.f32.mrb[0].mxu0
      %v4248 = vadd.f32 %v4177, %v4247
      %v4249 = vpop.f32.mrb[0].mxu0
      %v4250 = vadd.f32 %v4179, %v4249
      %4251 = vdwg.mxu0
      %4252 = vmatprep.subr.mxu0 %v3608
      %4253 = vmatpush1.msra.mxu0 %v3607
      %4254 = vmatprep.subr.mxu0 %v3612
      %4255 = vmatpush1.msra.mxu0 %v3611
      %4256 = vmatprep.subr.mxu0 %v3616
      %4257 = vmatpush1.msra.mxu0 %v3615
      %4258 = vmatprep.subr.mxu0 %v3620
      %4259 = vmatpush1.msra.mxu0 %v3619
      %4260 = vmatprep.subr.mxu0 %v3624
      %4261 = vmatpush1.msra.mxu0 %v3623
      %4262 = vmatprep.subr.mxu0 %v3628
      %4263 = vmatpush1.msra.mxu0 %v3627
      %4264 = vmatprep.subr.mxu0 %v3632
      %4265 = vmatpush1.msra.mxu0 %v3631
      %4266 = vmatprep.subr.mxu0 %v3636
      %4267 = vmatpush1.msra.mxu0 %v3635
      %4268 = vmatprep.subr.mxu0 %v3640
      %4269 = vmatpush1.msra.mxu0 %v3639
      %4270 = vmatprep.subr.mxu0 %v3644
      %4271 = vmatpush1.msra.mxu0 %v3643
      %4272 = vmatprep.subr.mxu0 %v3648
      %4273 = vmatpush1.msra.mxu0 %v3647
      %4274 = vmatprep.subr.mxu0 %v3652
      %4275 = vmatpush1.msra.mxu0 %v3651
      %4276 = vmatprep.subr.mxu0 %v3656
      %4277 = vmatpush1.msra.mxu0 %v3655
      %4278 = vmatprep.subr.mxu0 %v3660
      %4279 = vmatpush1.msra.mxu0 %v3659
      %4280 = vmatprep.subr.mxu0 %v3664
      %4281 = vmatpush1.msra.mxu0 %v3663
      %4282 = vmatprep.subr.mxu0 %v3668
      %4283 = vmatpush1.msra.mxu0 %v3667
      %4284 = vmatprep.subr.mxu0 %v3672
      %4285 = vmatpush1.msra.mxu0 %v3671
      %4286 = vmatprep.subr.mxu0 %v3676
      %4287 = vmatpush1.msra.mxu0 %v3675
      %4288 = vmatprep.subr.mxu0 %v3680
      %4289 = vmatpush1.msra.mxu0 %v3679
      %4290 = vmatprep.subr.mxu0 %v3684
      %4291 = vmatpush1.msra.mxu0 %v3683
      %4292 = vmatprep.subr.mxu0 %v3688
      %4293 = vmatpush1.msra.mxu0 %v3687
      %4294 = vmatprep.subr.mxu0 %v3692
      %4295 = vmatpush1.msra.mxu0 %v3691
      %4296 = vmatprep.subr.mxu0 %v3696
      %4297 = vmatpush1.msra.mxu0 %v3695
      %4298 = vmatprep.subr.mxu0 %v3700
      %4299 = vmatpush1.msra.mxu0 %v3699
      %4300 = vmatprep.subr.mxu0 %v3704
      %4301 = vmatpush1.msra.mxu0 %v3703
      %4302 = vmatprep.subr.mxu0 %v3708
      %4303 = vmatpush1.msra.mxu0 %v3707
      %4304 = vmatprep.subr.mxu0 %v3712
      %4305 = vmatpush1.msra.mxu0 %v3711
      %4306 = vmatprep.subr.mxu0 %v3716
      %4307 = vmatpush1.msra.mxu0 %v3715
      %4308 = vmatprep.subr.mxu0 %v3720
      %4309 = vmatpush1.msra.mxu0 %v3719
      %4310 = vmatprep.subr.mxu0 %v3724
      %4311 = vmatpush1.msra.mxu0 %v3723
      %4312 = vmatprep.subr.mxu0 %v3728
      %4313 = vmatpush1.msra.mxu0 %v3727
      %4314 = vmatprep.subr.mxu0 %v3732
      %4315 = vmatpush1.msra.mxu0 %v3731
      %4316 = vmatprep.mubr.f32.mxu0 %v3220
      %4317 = vmatmul.mubr.f32.gmra.mrb[0].mxu0 %v3219
      %v4318 = vpop.f32.mrb[0].mxu0
      %v4319 = vadd.f32 %v4248, %v4318
      %v4320 = vpop.f32.mrb[0].mxu0
      %v4321 = vadd.f32 %v4250, %v4320
      %4322 = vdwg.mxu0
      %v4323 = vmax.f32 %v4035, 0.0
      %v4324 = vmax.f32 %v4037, 0.0
      %v4325 = vmax.f32 %v4319, 0.0
      %v4326 = vmax.f32 %v4321, 0.0
      %v4327 = vld [vmem:[#allocation11] sm:$0xff]
      %v4328 = vld [vmem:[#allocation11 + $0x8] sm:$0xff]
      %v4329 = vld [vmem:[#allocation11 + $0x10] sm:$0xff]
      %v4330 = vld [vmem:[#allocation11 + $0x18] sm:$0xff]
      %v4331 = vld [vmem:[#allocation11 + $0x20] sm:$0xff]
      %v4332 = vld [vmem:[#allocation11 + $0x28] sm:$0xff]
      %v4333 = vld [vmem:[#allocation11 + $0x30] sm:$0xff]
      %v4334 = vld [vmem:[#allocation11 + $0x38] sm:$0xff]
      %v4335 = vld [vmem:[#allocation11 + $0x40] sm:$0xff]
      %v4336 = vld [vmem:[#allocation11 + $0x48] sm:$0xff]
      %v4337 = vld [vmem:[#allocation11 + $0x50] sm:$0xff]
      %v4338 = vld [vmem:[#allocation11 + $0x58] sm:$0xff]
      %v4339 = vld [vmem:[#allocation11 + $0x60] sm:$0xff]
      %v4340 = vld [vmem:[#allocation11 + $0x68] sm:$0xff]
      %v4341 = vld [vmem:[#allocation11 + $0x70] sm:$0xff]
      %v4342 = vld [vmem:[#allocation11 + $0x78] sm:$0xff]
      %v4343 = vld [vmem:[#allocation11 + $0x80] sm:$0xff]
      %v4344 = vld [vmem:[#allocation11 + $0x88] sm:$0xff]
      %v4345 = vld [vmem:[#allocation11 + $0x90] sm:$0xff]
      %v4346 = vld [vmem:[#allocation11 + $0x98] sm:$0xff]
      %v4347 = vld [vmem:[#allocation11 + $0xa0] sm:$0xff]
      %v4348 = vld [vmem:[#allocation11 + $0xa8] sm:$0xff]
      %v4349 = vld [vmem:[#allocation11 + $0xb0] sm:$0xff]
      %v4350 = vld [vmem:[#allocation11 + $0xb8] sm:$0xff]
      %v4351 = vld [vmem:[#allocation11 + $0xc0] sm:$0xff]
      %v4352 = vld [vmem:[#allocation11 + $0xc8] sm:$0xff]
      %v4353 = vld [vmem:[#allocation11 + $0xd0] sm:$0xff]
      %v4354 = vld [vmem:[#allocation11 + $0xd8] sm:$0xff]
      %v4355 = vld [vmem:[#allocation11 + $0xe0] sm:$0xff]
      %v4356 = vld [vmem:[#allocation11 + $0xe8] sm:$0xff]
      %v4357 = vld [vmem:[#allocation11 + $0xf0] sm:$0xff]
      %v4358 = vld [vmem:[#allocation11 + $0xf8] sm:$0xff]
      %v4359 = vld [vmem:[#allocation11 + $0x100] sm:$0xff]
      %v4360 = vld [vmem:[#allocation11 + $0x108] sm:$0xff]
      %v4361 = vld [vmem:[#allocation11 + $0x110] sm:$0xff]
      %v4362 = vld [vmem:[#allocation11 + $0x118] sm:$0xff]
      %v4363 = vld [vmem:[#allocation11 + $0x120] sm:$0xff]
      %v4364 = vld [vmem:[#allocation11 + $0x128] sm:$0xff]
      %v4365 = vld [vmem:[#allocation11 + $0x130] sm:$0xff]
      %v4366 = vld [vmem:[#allocation11 + $0x138] sm:$0xff]
      %v4367 = vld [vmem:[#allocation11 + $0x140] sm:$0xff]
      %v4368 = vld [vmem:[#allocation11 + $0x148] sm:$0xff]
      %v4369 = vld [vmem:[#allocation11 + $0x150] sm:$0xff]
      %v4370 = vld [vmem:[#allocation11 + $0x158] sm:$0xff]
      %v4371 = vld [vmem:[#allocation11 + $0x160] sm:$0xff]
      %v4372 = vld [vmem:[#allocation11 + $0x168] sm:$0xff]
      %v4373 = vld [vmem:[#allocation11 + $0x170] sm:$0xff]
      %v4374 = vld [vmem:[#allocation11 + $0x178] sm:$0xff]
      %v4375 = vld [vmem:[#allocation11 + $0x180] sm:$0xff]
      %v4376 = vld [vmem:[#allocation11 + $0x188] sm:$0xff]
      %v4377 = vld [vmem:[#allocation11 + $0x190] sm:$0xff]
      %v4378 = vld [vmem:[#allocation11 + $0x198] sm:$0xff]
      %v4379 = vld [vmem:[#allocation11 + $0x1a0] sm:$0xff]
      %v4380 = vld [vmem:[#allocation11 + $0x1a8] sm:$0xff]
      %v4381 = vld [vmem:[#allocation11 + $0x1b0] sm:$0xff]
      %v4382 = vld [vmem:[#allocation11 + $0x1b8] sm:$0xff]
      %v4383 = vld [vmem:[#allocation11 + $0x1c0] sm:$0xff]
      %v4384 = vld [vmem:[#allocation11 + $0x1c8] sm:$0xff]
      %v4385 = vld [vmem:[#allocation11 + $0x1d0] sm:$0xff]
      %v4386 = vld [vmem:[#allocation11 + $0x1d8] sm:$0xff]
      %v4387 = vld [vmem:[#allocation11 + $0x1e0] sm:$0xff]
      %v4388 = vld [vmem:[#allocation11 + $0x1e8] sm:$0xff]
      %v4389 = vld [vmem:[#allocation11 + $0x1f0] sm:$0xff]
      %v4390 = vld [vmem:[#allocation11 + $0x1f8] sm:$0xff]
      %v4391 = vld [vmem:[#allocation11 + $0x200] sm:$0xff]
      %v4392 = vld [vmem:[#allocation11 + $0x208] sm:$0xff]
      %v4393 = vld [vmem:[#allocation11 + $0x210] sm:$0xff]
      %v4394 = vld [vmem:[#allocation11 + $0x218] sm:$0xff]
      %v4395 = vld [vmem:[#allocation11 + $0x220] sm:$0xff]
      %v4396 = vld [vmem:[#allocation11 + $0x228] sm:$0xff]
      %v4397 = vld [vmem:[#allocation11 + $0x230] sm:$0xff]
      %v4398 = vld [vmem:[#allocation11 + $0x238] sm:$0xff]
      %v4399 = vld [vmem:[#allocation11 + $0x240] sm:$0xff]
      %v4400 = vld [vmem:[#allocation11 + $0x248] sm:$0xff]
      %v4401 = vld [vmem:[#allocation11 + $0x250] sm:$0xff]
      %v4402 = vld [vmem:[#allocation11 + $0x258] sm:$0xff]
      %v4403 = vld [vmem:[#allocation11 + $0x260] sm:$0xff]
      %v4404 = vld [vmem:[#allocation11 + $0x268] sm:$0xff]
      %v4405 = vld [vmem:[#allocation11 + $0x270] sm:$0xff]
      %v4406 = vld [vmem:[#allocation11 + $0x278] sm:$0xff]
      %v4407 = vld [vmem:[#allocation11 + $0x280] sm:$0xff]
      %v4408 = vld [vmem:[#allocation11 + $0x288] sm:$0xff]
      %v4409 = vld [vmem:[#allocation11 + $0x290] sm:$0xff]
      %v4410 = vld [vmem:[#allocation11 + $0x298] sm:$0xff]
      %v4411 = vld [vmem:[#allocation11 + $0x2a0] sm:$0xff]
      %v4412 = vld [vmem:[#allocation11 + $0x2a8] sm:$0xff]
      %v4413 = vld [vmem:[#allocation11 + $0x2b0] sm:$0xff]
      %v4414 = vld [vmem:[#allocation11 + $0x2b8] sm:$0xff]
      %v4415 = vld [vmem:[#allocation11 + $0x2c0] sm:$0xff]
      %v4416 = vld [vmem:[#allocation11 + $0x2c8] sm:$0xff]
      %v4417 = vld [vmem:[#allocation11 + $0x2d0] sm:$0xff]
      %v4418 = vld [vmem:[#allocation11 + $0x2d8] sm:$0xff]
      %v4419 = vld [vmem:[#allocation11 + $0x2e0] sm:$0xff]
      %v4420 = vld [vmem:[#allocation11 + $0x2e8] sm:$0xff]
      %v4421 = vld [vmem:[#allocation11 + $0x2f0] sm:$0xff]
      %v4422 = vld [vmem:[#allocation11 + $0x2f8] sm:$0xff]
      %v4423 = vld [vmem:[#allocation11 + $0x300] sm:$0xff]
      %v4424 = vld [vmem:[#allocation11 + $0x308] sm:$0xff]
      %v4425 = vld [vmem:[#allocation11 + $0x310] sm:$0xff]
      %v4426 = vld [vmem:[#allocation11 + $0x318] sm:$0xff]
      %v4427 = vld [vmem:[#allocation11 + $0x320] sm:$0xff]
      %v4428 = vld [vmem:[#allocation11 + $0x328] sm:$0xff]
      %v4429 = vld [vmem:[#allocation11 + $0x330] sm:$0xff]
      %v4430 = vld [vmem:[#allocation11 + $0x338] sm:$0xff]
      %v4431 = vld [vmem:[#allocation11 + $0x340] sm:$0xff]
      %v4432 = vld [vmem:[#allocation11 + $0x348] sm:$0xff]
      %v4433 = vld [vmem:[#allocation11 + $0x350] sm:$0xff]
      %v4434 = vld [vmem:[#allocation11 + $0x358] sm:$0xff]
      %v4435 = vld [vmem:[#allocation11 + $0x360] sm:$0xff]
      %v4436 = vld [vmem:[#allocation11 + $0x368] sm:$0xff]
      %v4437 = vld [vmem:[#allocation11 + $0x370] sm:$0xff]
      %v4438 = vld [vmem:[#allocation11 + $0x378] sm:$0xff]
      %v4439 = vld [vmem:[#allocation11 + $0x380] sm:$0xff]
      %v4440 = vld [vmem:[#allocation11 + $0x388] sm:$0xff]
      %v4441 = vld [vmem:[#allocation11 + $0x390] sm:$0xff]
      %v4442 = vld [vmem:[#allocation11 + $0x398] sm:$0xff]
      %v4443 = vld [vmem:[#allocation11 + $0x3a0] sm:$0xff]
      %v4444 = vld [vmem:[#allocation11 + $0x3a8] sm:$0xff]
      %v4445 = vld [vmem:[#allocation11 + $0x3b0] sm:$0xff]
      %v4446 = vld [vmem:[#allocation11 + $0x3b8] sm:$0xff]
      %v4447 = vld [vmem:[#allocation11 + $0x3c0] sm:$0xff]
      %v4448 = vld [vmem:[#allocation11 + $0x3c8] sm:$0xff]
      %v4449 = vld [vmem:[#allocation11 + $0x3d0] sm:$0xff]
      %v4450 = vld [vmem:[#allocation11 + $0x3d8] sm:$0xff]
      %v4451 = vld [vmem:[#allocation11 + $0x3e0] sm:$0xff]
      %v4452 = vld [vmem:[#allocation11 + $0x3e8] sm:$0xff]
      %v4453 = vld [vmem:[#allocation11 + $0x3f0] sm:$0xff]
      %v4454 = vld [vmem:[#allocation11 + $0x3f8] sm:$0xff]
      %v4455 = vld [vmem:[#allocation13] sm:$0x3]
      %v4457 = vlaneseq
      %v4458 = vshrl.u32 %v4457, 7
      %v4459 = vsub.s32 0, %v4458
      %v4460 = vrot.slane %v4455, %v4459
      %v4461 = vlaneseq
      %v4462 = vshrl.u32 %v4461, 7
      %v4463 = vsub.s32 1, %v4462
      %v4464 = vrot.slane %v4455, %v4463
      %4467 = vmatprep.subr.mxu0 %v4328
      %4468 = vmatpush1.msra.mxu0 %v4327
      %4469 = vmatprep.subr.mxu0 %v4330
      %4470 = vmatpush1.msra.mxu0 %v4329
      %4471 = vmatprep.subr.mxu0 %v4332
      %4472 = vmatpush1.msra.mxu0 %v4331
      %4473 = vmatprep.subr.mxu0 %v4334
      %4474 = vmatpush1.msra.mxu0 %v4333
      %4475 = vmatprep.subr.mxu0 %v4336
      %4476 = vmatpush1.msra.mxu0 %v4335
      %4477 = vmatprep.subr.mxu0 %v4338
      %4478 = vmatpush1.msra.mxu0 %v4337
      %4479 = vmatprep.subr.mxu0 %v4340
      %4480 = vmatpush1.msra.mxu0 %v4339
      %4481 = vmatprep.subr.mxu0 %v4342
      %4482 = vmatpush1.msra.mxu0 %v4341
      %4483 = vmatprep.subr.mxu0 %v4344
      %4484 = vmatpush1.msra.mxu0 %v4343
      %4485 = vmatprep.subr.mxu0 %v4346
      %4486 = vmatpush1.msra.mxu0 %v4345
      %4487 = vmatprep.subr.mxu0 %v4348
      %4488 = vmatpush1.msra.mxu0 %v4347
      %4489 = vmatprep.subr.mxu0 %v4350
      %4490 = vmatpush1.msra.mxu0 %v4349
      %4491 = vmatprep.subr.mxu0 %v4352
      %4492 = vmatpush1.msra.mxu0 %v4351
      %4493 = vmatprep.subr.mxu0 %v4354
      %4494 = vmatpush1.msra.mxu0 %v4353
      %4495 = vmatprep.subr.mxu0 %v4356
      %4496 = vmatpush1.msra.mxu0 %v4355
      %4497 = vmatprep.subr.mxu0 %v4358
      %4498 = vmatpush1.msra.mxu0 %v4357
      %4499 = vmatprep.subr.mxu0 %v4360
      %4500 = vmatpush1.msra.mxu0 %v4359
      %4501 = vmatprep.subr.mxu0 %v4362
      %4502 = vmatpush1.msra.mxu0 %v4361
      %4503 = vmatprep.subr.mxu0 %v4364
      %4504 = vmatpush1.msra.mxu0 %v4363
      %4505 = vmatprep.subr.mxu0 %v4366
      %4506 = vmatpush1.msra.mxu0 %v4365
      %4507 = vmatprep.subr.mxu0 %v4368
      %4508 = vmatpush1.msra.mxu0 %v4367
      %4509 = vmatprep.subr.mxu0 %v4370
      %4510 = vmatpush1.msra.mxu0 %v4369
      %4511 = vmatprep.subr.mxu0 %v4372
      %4512 = vmatpush1.msra.mxu0 %v4371
      %4513 = vmatprep.subr.mxu0 %v4374
      %4514 = vmatpush1.msra.mxu0 %v4373
      %4515 = vmatprep.subr.mxu0 %v4376
      %4516 = vmatpush1.msra.mxu0 %v4375
      %4517 = vmatprep.subr.mxu0 %v4378
      %4518 = vmatpush1.msra.mxu0 %v4377
      %4519 = vmatprep.subr.mxu0 %v4380
      %4520 = vmatpush1.msra.mxu0 %v4379
      %4521 = vmatprep.subr.mxu0 %v4382
      %4522 = vmatpush1.msra.mxu0 %v4381
      %4523 = vmatprep.subr.mxu0 %v4384
      %4524 = vmatpush1.msra.mxu0 %v4383
      %4525 = vmatprep.subr.mxu0 %v4386
      %4526 = vmatpush1.msra.mxu0 %v4385
      %4527 = vmatprep.subr.mxu0 %v4388
      %4528 = vmatpush1.msra.mxu0 %v4387
      %4529 = vmatprep.subr.mxu0 %v4390
      %4530 = vmatpush1.msra.mxu0 %v4389
      %4531 = vmatprep.mubr.f32.mxu0 %v4324
      %4532 = vmatmul.mubr.f32.gmra.mrb[0].mxu0 %v4323
      %v4533 = vpop.f32.mrb[0].mxu0
      %v4534 = vadd.f32 %v4460, %v4533
      %v4535 = vpop.f32.mrb[0].mxu0
      %v4536 = vadd.f32 %v4464, %v4535
      %4537 = vdwg.mxu0
      %4538 = vmatprep.subr.mxu0 %v4392
      %4539 = vmatpush1.msra.mxu0 %v4391
      %4540 = vmatprep.subr.mxu0 %v4394
      %4541 = vmatpush1.msra.mxu0 %v4393
      %4542 = vmatprep.subr.mxu0 %v4396
      %4543 = vmatpush1.msra.mxu0 %v4395
      %4544 = vmatprep.subr.mxu0 %v4398
      %4545 = vmatpush1.msra.mxu0 %v4397
      %4546 = vmatprep.subr.mxu0 %v4400
      %4547 = vmatpush1.msra.mxu0 %v4399
      %4548 = vmatprep.subr.mxu0 %v4402
      %4549 = vmatpush1.msra.mxu0 %v4401
      %4550 = vmatprep.subr.mxu0 %v4404
      %4551 = vmatpush1.msra.mxu0 %v4403
      %4552 = vmatprep.subr.mxu0 %v4406
      %4553 = vmatpush1.msra.mxu0 %v4405
      %4554 = vmatprep.subr.mxu0 %v4408
      %4555 = vmatpush1.msra.mxu0 %v4407
      %4556 = vmatprep.subr.mxu0 %v4410
      %4557 = vmatpush1.msra.mxu0 %v4409
      %4558 = vmatprep.subr.mxu0 %v4412
      %4559 = vmatpush1.msra.mxu0 %v4411
      %4560 = vmatprep.subr.mxu0 %v4414
      %4561 = vmatpush1.msra.mxu0 %v4413
      %4562 = vmatprep.subr.mxu0 %v4416
      %4563 = vmatpush1.msra.mxu0 %v4415
      %4564 = vmatprep.subr.mxu0 %v4418
      %4565 = vmatpush1.msra.mxu0 %v4417
      %4566 = vmatprep.subr.mxu0 %v4420
      %4567 = vmatpush1.msra.mxu0 %v4419
      %4568 = vmatprep.subr.mxu0 %v4422
      %4569 = vmatpush1.msra.mxu0 %v4421
      %4570 = vmatprep.subr.mxu0 %v4424
      %4571 = vmatpush1.msra.mxu0 %v4423
      %4572 = vmatprep.subr.mxu0 %v4426
      %4573 = vmatpush1.msra.mxu0 %v4425
      %4574 = vmatprep.subr.mxu0 %v4428
      %4575 = vmatpush1.msra.mxu0 %v4427
      %4576 = vmatprep.subr.mxu0 %v4430
      %4577 = vmatpush1.msra.mxu0 %v4429
      %4578 = vmatprep.subr.mxu0 %v4432
      %4579 = vmatpush1.msra.mxu0 %v4431
      %4580 = vmatprep.subr.mxu0 %v4434
      %4581 = vmatpush1.msra.mxu0 %v4433
      %4582 = vmatprep.subr.mxu0 %v4436
      %4583 = vmatpush1.msra.mxu0 %v4435
      %4584 = vmatprep.subr.mxu0 %v4438
      %4585 = vmatpush1.msra.mxu0 %v4437
      %4586 = vmatprep.subr.mxu0 %v4440
      %4587 = vmatpush1.msra.mxu0 %v4439
      %4588 = vmatprep.subr.mxu0 %v4442
      %4589 = vmatpush1.msra.mxu0 %v4441
      %4590 = vmatprep.subr.mxu0 %v4444
      %4591 = vmatpush1.msra.mxu0 %v4443
      %4592 = vmatprep.subr.mxu0 %v4446
      %4593 = vmatpush1.msra.mxu0 %v4445
      %4594 = vmatprep.subr.mxu0 %v4448
      %4595 = vmatpush1.msra.mxu0 %v4447
      %4596 = vmatprep.subr.mxu0 %v4450
      %4597 = vmatpush1.msra.mxu0 %v4449
      %4598 = vmatprep.subr.mxu0 %v4452
      %4599 = vmatpush1.msra.mxu0 %v4451
      %4600 = vmatprep.subr.mxu0 %v4454
      %4601 = vmatpush1.msra.mxu0 %v4453
      %4602 = vmatprep.mubr.f32.mxu0 %v4326
      %4603 = vmatmul.mubr.f32.gmra.mrb[0].mxu0 %v4325
      %v4604 = vpop.f32.mrb[0].mxu0
      %v4605 = vadd.f32 %v4534, %v4604
      %v4606 = vpop.f32.mrb[0].mxu0
      %v4607 = vadd.f32 %v4536, %v4606
      %4608 = vdwg.mxu0
      %v4609 = vmax.f32 %v4605, 0.0
      %v4610 = vmax.f32 %v4607, 0.0
      %v4611 = vld [vmem:[#allocation14] sm:$0xff]
      %v4612 = vld [vmem:[#allocation14 + $0x8] sm:$0xff]
      %v4613 = vld [vmem:[#allocation14 + $0x10] sm:$0xff]
      %v4614 = vld [vmem:[#allocation14 + $0x18] sm:$0xff]
      %v4615 = vld [vmem:[#allocation14 + $0x20] sm:$0xff]
      %v4616 = vld [vmem:[#allocation14 + $0x28] sm:$0xff]
      %v4617 = vld [vmem:[#allocation14 + $0x30] sm:$0xff]
      %v4618 = vld [vmem:[#allocation14 + $0x38] sm:$0xff]
      %v4619 = vld [vmem:[#allocation14 + $0x40] sm:$0xff]
      %v4620 = vld [vmem:[#allocation14 + $0x48] sm:$0xff]
      %v4621 = vld [vmem:[#allocation14 + $0x50] sm:$0xff]
      %v4622 = vld [vmem:[#allocation14 + $0x58] sm:$0xff]
      %v4623 = vld [vmem:[#allocation14 + $0x60] sm:$0xff]
      %v4624 = vld [vmem:[#allocation14 + $0x68] sm:$0xff]
      %v4625 = vld [vmem:[#allocation14 + $0x70] sm:$0xff]
      %v4626 = vld [vmem:[#allocation14 + $0x78] sm:$0xff]
      %v4627 = vld [vmem:[#allocation14 + $0x80] sm:$0xff]
      %v4628 = vld [vmem:[#allocation14 + $0x88] sm:$0xff]
      %v4629 = vld [vmem:[#allocation14 + $0x90] sm:$0xff]
      %v4630 = vld [vmem:[#allocation14 + $0x98] sm:$0xff]
      %v4631 = vld [vmem:[#allocation14 + $0xa0] sm:$0xff]
      %v4632 = vld [vmem:[#allocation14 + $0xa8] sm:$0xff]
      %v4633 = vld [vmem:[#allocation14 + $0xb0] sm:$0xff]
      %v4634 = vld [vmem:[#allocation14 + $0xb8] sm:$0xff]
      %v4635 = vld [vmem:[#allocation14 + $0xc0] sm:$0xff]
      %v4636 = vld [vmem:[#allocation14 + $0xc8] sm:$0xff]
      %v4637 = vld [vmem:[#allocation14 + $0xd0] sm:$0xff]
      %v4638 = vld [vmem:[#allocation14 + $0xd8] sm:$0xff]
      %v4639 = vld [vmem:[#allocation14 + $0xe0] sm:$0xff]
      %v4640 = vld [vmem:[#allocation14 + $0xe8] sm:$0xff]
      %v4641 = vld [vmem:[#allocation14 + $0xf0] sm:$0xff]
      %v4642 = vld [vmem:[#allocation14 + $0xf8] sm:$0xff]
      %v4643 = vld [vmem:[#allocation16] sm:$0x1]
      %v4645 = vlaneseq
      %v4646 = vshrl.u32 %v4645, 7
      %v4647 = vsub.s32 0, %v4646
      %v4648 = vrot.slane %v4643, %v4647
      %4650 = vmatprep.subr.mxu0 0.0
      %4651 = vmatpush1.msra.mxu0 %v4611
      %4652 = vmatprep.subr.mxu0 0.0
      %4653 = vmatpush1.msra.mxu0 %v4612
      %4654 = vmatprep.subr.mxu0 0.0
      %4655 = vmatpush1.msra.mxu0 %v4613
      %4656 = vmatprep.subr.mxu0 0.0
      %4657 = vmatpush1.msra.mxu0 %v4614
      %4658 = vmatprep.subr.mxu0 0.0
      %4659 = vmatpush1.msra.mxu0 %v4615
      %4660 = vmatprep.subr.mxu0 0.0
      %4661 = vmatpush1.msra.mxu0 %v4616
      %4662 = vmatprep.subr.mxu0 0.0
      %4663 = vmatpush1.msra.mxu0 %v4617
      %4664 = vmatprep.subr.mxu0 0.0
      %4665 = vmatpush1.msra.mxu0 %v4618
      %4666 = vmatprep.subr.mxu0 0.0
      %4667 = vmatpush1.msra.mxu0 %v4619
      %4668 = vmatprep.subr.mxu0 0.0
      %4669 = vmatpush1.msra.mxu0 %v4620
      %4670 = vmatprep.subr.mxu0 0.0
      %4671 = vmatpush1.msra.mxu0 %v4621
      %4672 = vmatprep.subr.mxu0 0.0
      %4673 = vmatpush1.msra.mxu0 %v4622
      %4674 = vmatprep.subr.mxu0 0.0
      %4675 = vmatpush1.msra.mxu0 %v4623
      %4676 = vmatprep.subr.mxu0 0.0
      %4677 = vmatpush1.msra.mxu0 %v4624
      %4678 = vmatprep.subr.mxu0 0.0
      %4679 = vmatpush1.msra.mxu0 %v4625
      %4680 = vmatprep.subr.mxu0 0.0
      %4681 = vmatpush1.msra.mxu0 %v4626
      %4682 = vmatprep.subr.mxu0 0.0
      %4683 = vmatpush1.msra.mxu0 %v4627
      %4684 = vmatprep.subr.mxu0 0.0
      %4685 = vmatpush1.msra.mxu0 %v4628
      %4686 = vmatprep.subr.mxu0 0.0
      %4687 = vmatpush1.msra.mxu0 %v4629
      %4688 = vmatprep.subr.mxu0 0.0
      %4689 = vmatpush1.msra.mxu0 %v4630
      %4690 = vmatprep.subr.mxu0 0.0
      %4691 = vmatpush1.msra.mxu0 %v4631
      %4692 = vmatprep.subr.mxu0 0.0
      %4693 = vmatpush1.msra.mxu0 %v4632
      %4694 = vmatprep.subr.mxu0 0.0
      %4695 = vmatpush1.msra.mxu0 %v4633
      %4696 = vmatprep.subr.mxu0 0.0
      %4697 = vmatpush1.msra.mxu0 %v4634
      %4698 = vmatprep.subr.mxu0 0.0
      %4699 = vmatpush1.msra.mxu0 %v4635
      %4700 = vmatprep.subr.mxu0 0.0
      %4701 = vmatpush1.msra.mxu0 %v4636
      %4702 = vmatprep.subr.mxu0 0.0
      %4703 = vmatpush1.msra.mxu0 %v4637
      %4704 = vmatprep.subr.mxu0 0.0
      %4705 = vmatpush1.msra.mxu0 %v4638
      %4706 = vmatprep.subr.mxu0 0.0
      %4707 = vmatpush1.msra.mxu0 %v4639
      %4708 = vmatprep.subr.mxu0 0.0
      %4709 = vmatpush1.msra.mxu0 %v4640
      %4710 = vmatprep.subr.mxu0 0.0
      %4711 = vmatpush1.msra.mxu0 %v4641
      %4712 = vmatprep.subr.mxu0 0.0
      %4713 = vmatpush1.msra.mxu0 %v4642
      %4714 = vmatprep.mubr.f32.mxu0 %v4610
      %4715 = vmatmul.mubr.f32.gmra.mrb[0].mxu0 %v4609
      %v4716 = vpop.f32.mrb[0].mxu0
      %v4717 = vadd.f32 %v4648, %v4716
      %v4718 = vpop.f32.mrb[0].mxu0
      %4719 = vdwg.mxu0
      %v4720 = vmax.f32 %v4717, 0.0
      %v4721 = vld [vmem:[%s9] sm:$0xff]
      %v4722 = vld [vmem:[%s9 + $0x8] sm:$0xff]
      %v4723 = vld [vmem:[%s9 + $0x10] sm:$0xff]
      %v4724 = vld [vmem:[%s9 + $0x18] sm:$0xff]
      %v4725 = vld [vmem:[%s9 + $0x20] sm:$0xff]
      %v4726 = vld [vmem:[%s9 + $0x28] sm:$0xff]
      %v4727 = vld [vmem:[%s9 + $0x30] sm:$0xff]
      %v4728 = vld [vmem:[%s9 + $0x38] sm:$0xff]
      %v4729 = vld [vmem:[%s9 + $0x40] sm:$0xff]
      %v4730 = vld [vmem:[%s9 + $0x48] sm:$0xff]
      %v4731 = vld [vmem:[%s9 + $0x50] sm:$0xff]
      %v4732 = vld [vmem:[%s9 + $0x58] sm:$0xff]
      %v4733 = vld [vmem:[%s9 + $0x60] sm:$0xff]
      %v4734 = vld [vmem:[%s9 + $0x68] sm:$0xff]
      %v4735 = vld [vmem:[%s9 + $0x70] sm:$0xff]
      %v4736 = vld [vmem:[%s9 + $0x78] sm:$0xff]
      %v4737 = vld [vmem:[#allocation17] sm:$0x1]
      %v4739 = vlaneseq
      %v4740 = vshrl.u32 %v4739, 7
      %v4741 = vsub.s32 0, %v4740
      %v4742 = vrot.slane %v4737, %v4741
      %4744 = vmatprep.subr.mxu0 0.0
      %4745 = vmatpush1.msra.mxu0 %v4721
      %4746 = vmatprep.subr.mxu0 0.0
      %4747 = vmatpush1.msra.mxu0 %v4722
      %4748 = vmatprep.subr.mxu0 0.0
      %4749 = vmatpush1.msra.mxu0 %v4723
      %4750 = vmatprep.subr.mxu0 0.0
      %4751 = vmatpush1.msra.mxu0 %v4724
      %4752 = vmatprep.subr.mxu0 0.0
      %4753 = vmatpush1.msra.mxu0 %v4725
      %4754 = vmatprep.subr.mxu0 0.0
      %4755 = vmatpush1.msra.mxu0 %v4726
      %4756 = vmatprep.subr.mxu0 0.0
      %4757 = vmatpush1.msra.mxu0 %v4727
      %4758 = vmatprep.subr.mxu0 0.0
      %4759 = vmatpush1.msra.mxu0 %v4728
      %4760 = vmatprep.subr.mxu0 0.0
      %4761 = vmatpush1.msra.mxu0 %v4729
      %4762 = vmatprep.subr.mxu0 0.0
      %4763 = vmatpush1.msra.mxu0 %v4730
      %4764 = vmatprep.subr.mxu0 0.0
      %4765 = vmatpush1.msra.mxu0 %v4731
      %4766 = vmatprep.subr.mxu0 0.0
      %4767 = vmatpush1.msra.mxu0 %v4732
      %4768 = vmatprep.subr.mxu0 0.0
      %4769 = vmatpush1.msra.mxu0 %v4733
      %4770 = vmatprep.subr.mxu0 0.0
      %4771 = vmatpush1.msra.mxu0 %v4734
      %4772 = vmatprep.subr.mxu0 0.0
      %4773 = vmatpush1.msra.mxu0 %v4735
      %4774 = vmatprep.subr.mxu0 0.0
      %4775 = vmatpush1.msra.mxu0 %v4736
      %4776 = vmatprep.subr.mxu0 0.0
      %4777 = vmatpush1.msra.mxu0 0.0
      %4778 = vmatprep.subr.mxu0 0.0
      %4779 = vmatpush1.msra.mxu0 0.0
      %4780 = vmatprep.subr.mxu0 0.0
      %4781 = vmatpush1.msra.mxu0 0.0
      %4782 = vmatprep.subr.mxu0 0.0
      %4783 = vmatpush1.msra.mxu0 0.0
      %4784 = vmatprep.subr.mxu0 0.0
      %4785 = vmatpush1.msra.mxu0 0.0
      %4786 = vmatprep.subr.mxu0 0.0
      %4787 = vmatpush1.msra.mxu0 0.0
      %4788 = vmatprep.subr.mxu0 0.0
      %4789 = vmatpush1.msra.mxu0 0.0
      %4790 = vmatprep.subr.mxu0 0.0
      %4791 = vmatpush1.msra.mxu0 0.0
      %4792 = vmatprep.subr.mxu0 0.0
      %4793 = vmatpush1.msra.mxu0 0.0
      %4794 = vmatprep.subr.mxu0 0.0
      %4795 = vmatpush1.msra.mxu0 0.0
      %4796 = vmatprep.subr.mxu0 0.0
      %4797 = vmatpush1.msra.mxu0 0.0
      %4798 = vmatprep.subr.mxu0 0.0
      %4799 = vmatpush1.msra.mxu0 0.0
      %4800 = vmatprep.subr.mxu0 0.0
      %4801 = vmatpush1.msra.mxu0 0.0
      %4802 = vmatprep.subr.mxu0 0.0
      %4803 = vmatpush1.msra.mxu0 0.0
      %4804 = vmatprep.subr.mxu0 0.0
      %4805 = vmatpush1.msra.mxu0 0.0
      %4806 = vmatprep.subr.mxu0 0.0
      %4807 = vmatpush1.msra.mxu0 0.0
      %4808 = vmatprep.mubr.f32.mxu0 0.0
      %4809 = vmatmul.mubr.f32.gmra.mrb[0].mxu0 %v4720
      %v4810 = vpop.f32.mrb[0].mxu0
      %v4811 = vadd.f32 %v4742, %v4810
      %v4812 = vpop.f32.mrb[0].mxu0
      %4813 = vdwg.mxu0
      %v4814 = vmax.f32 %v4811, 0.0
      %v4815 = vld [vmem:[%s11] sm:$0xff]
      %v4816 = vld [vmem:[%s11 + $0x8] sm:$0xff]
      %v4817 = vld [vmem:[%s11 + $0x10] sm:$0xff]
      %v4818 = vld [vmem:[%s11 + $0x18] sm:$0xff]
      %v4819 = vld [vmem:[%s11 + $0x20] sm:$0xff]
      %v4820 = vld [vmem:[%s11 + $0x28] sm:$0xff]
      %v4821 = vld [vmem:[%s11 + $0x30] sm:$0xff]
      %v4822 = vld [vmem:[%s11 + $0x38] sm:$0xff]
      %v4823 = vld [vmem:[#allocation19] sm:$0x1]
      %v4825 = vlaneseq
      %v4826 = vshrl.u32 %v4825, 7
      %v4827 = vsub.s32 0, %v4826
      %v4828 = vrot.slane %v4823, %v4827
      %vm4830 = vcmask 523264
      %v4832 = vsel %vm4830, %v4814, 0
      %4834 = vmatprep.subr.mxu0 0.0
      %4835 = vmatpush1.msra.mxu0 %v4815
      %4836 = vmatprep.subr.mxu0 0.0
      %4837 = vmatpush1.msra.mxu0 %v4816
      %4838 = vmatprep.subr.mxu0 0.0
      %4839 = vmatpush1.msra.mxu0 %v4817
      %4840 = vmatprep.subr.mxu0 0.0
      %4841 = vmatpush1.msra.mxu0 %v4818
      %4842 = vmatprep.subr.mxu0 0.0
      %4843 = vmatpush1.msra.mxu0 %v4819
      %4844 = vmatprep.subr.mxu0 0.0
      %4845 = vmatpush1.msra.mxu0 %v4820
      %4846 = vmatprep.subr.mxu0 0.0
      %4847 = vmatpush1.msra.mxu0 %v4821
      %4848 = vmatprep.subr.mxu0 0.0
      %4849 = vmatpush1.msra.mxu0 %v4822
      %4850 = vmatprep.subr.mxu0 0.0
      %4851 = vmatpush1.msra.mxu0 0.0
      %4852 = vmatprep.subr.mxu0 0.0
      %4853 = vmatpush1.msra.mxu0 0.0
      %4854 = vmatprep.subr.mxu0 0.0
      %4855 = vmatpush1.msra.mxu0 0.0
      %4856 = vmatprep.subr.mxu0 0.0
      %4857 = vmatpush1.msra.mxu0 0.0
      %4858 = vmatprep.subr.mxu0 0.0
      %4859 = vmatpush1.msra.mxu0 0.0
      %4860 = vmatprep.subr.mxu0 0.0
      %4861 = vmatpush1.msra.mxu0 0.0
      %4862 = vmatprep.subr.mxu0 0.0
      %4863 = vmatpush1.msra.mxu0 0.0
      %4864 = vmatprep.subr.mxu0 0.0
      %4865 = vmatpush1.msra.mxu0 0.0
      %4866 = vmatprep.subr.mxu0 0.0
      %4867 = vmatpush1.msra.mxu0 0.0
      %4868 = vmatprep.subr.mxu0 0.0
      %4869 = vmatpush1.msra.mxu0 0.0
      %4870 = vmatprep.subr.mxu0 0.0
      %4871 = vmatpush1.msra.mxu0 0.0
      %4872 = vmatprep.subr.mxu0 0.0
      %4873 = vmatpush1.msra.mxu0 0.0
      %4874 = vmatprep.subr.mxu0 0.0
      %4875 = vmatpush1.msra.mxu0 0.0
      %4876 = vmatprep.subr.mxu0 0.0
      %4877 = vmatpush1.msra.mxu0 0.0
      %4878 = vmatprep.subr.mxu0 0.0
      %4879 = vmatpush1.msra.mxu0 0.0
      %4880 = vmatprep.subr.mxu0 0.0
      %4881 = vmatpush1.msra.mxu0 0.0
      %4882 = vmatprep.subr.mxu0 0.0
      %4883 = vmatpush1.msra.mxu0 0.0
      %4884 = vmatprep.subr.mxu0 0.0
      %4885 = vmatpush1.msra.mxu0 0.0
      %4886 = vmatprep.subr.mxu0 0.0
      %4887 = vmatpush1.msra.mxu0 0.0
      %4888 = vmatprep.subr.mxu0 0.0
      %4889 = vmatpush1.msra.mxu0 0.0
      %4890 = vmatprep.subr.mxu0 0.0
      %4891 = vmatpush1.msra.mxu0 0.0
      %4892 = vmatprep.subr.mxu0 0.0
      %4893 = vmatpush1.msra.mxu0 0.0
      %4894 = vmatprep.subr.mxu0 0.0
      %4895 = vmatpush1.msra.mxu0 0.0
      %4896 = vmatprep.subr.mxu0 0.0
      %4897 = vmatpush1.msra.mxu0 0.0
      %4898 = vmatprep.mubr.f32.mxu0 0.0
      %4899 = vmatmul.mubr.f32.gmra.mrb[0].mxu0 %v4832
      %v4900 = vpop.f32.mrb[0].mxu0
      %v4901 = vadd.f32 %v4828, %v4900
      %v4902 = vpop.f32.mrb[0].mxu0
      %4903 = vdwg.mxu0
      %vm4904 = vcmask 15360
      %4905 = vst.msk [vmem:[%s13] sm:$0xff] %vm4904, %v4901
    $region105: #{tpu_custom_call.1} parent=1 // pred_fallthru
      _
    // Predicated region
    $region106: #{tpu_custom_call.1} parent=1 // pred_check
      _
    $region107: #{tpu_custom_call.1} parent=1 // pred_check_branch
      %4907 = sbr.rel (0) target = $region109
    $region108: #{tpu_custom_call.1} parent=1 // pred_region
      _
    $region109: #{tpu_custom_call.1} parent=1 // pred_fallthru
      _
    // Predicated region
    $region110: #{tpu_custom_call.1} parent=1 // pred_check
      _
    $region111: #{tpu_custom_call.1} parent=1 // pred_check_branch
      %4909 = sbr.rel (0) target = $region113
    $region112: #{tpu_custom_call.1} parent=1 // pred_region
      _
    $region113: #{tpu_custom_call.1} parent=1 // pred_fallthru
      _
    %4910 = vsyncpa [#allocation4], 1
    %4911 = vsyncpa [#allocation6], 1
    %4912 = vsyncpa [#allocation9], 1
    %4913 = vsyncpa [#allocation12], 1
    %4914 = vsyncpa [#allocation15], 1
    %4915 = vsyncpa [#allocation18], 1

</llo_original>
